<compile_context>
chip_gen: v7x
topology: tpu7x:2x2x1
jax: 0.10.0
libtpu: 0.0.40
codegen_flags: <defaults>
</compile_context>

<pallas_src>
import functools

import jax
import jax.numpy as jnp
import numpy as np
from jax import lax
from jax.experimental import pallas as pl
from jax.experimental.pallas import tpu as pltpu

BN_EPS = 1e-5
PAD = 2  # spatial zero padding held in the row-padded layout (covers dil=2)

# Tap offsets (dh, dw), tap index t = kh*3 + kw.
OFF1 = tuple(((kh - 1), (kw - 1)) for kh in range(3) for kw in range(3))
OFF2 = tuple((2 * (kh - 1), 2 * (kw - 1)) for kh in range(3) for kw in range(3))


# ----------------------------- fused Pallas kernel --------------------------

def _lm_kernel(xp_ref, xc_ref, mask_ref, tbl_ref, wpt_ref, wt3_ref, wcat_ref,
               o_ref, cat_scr, sum_scr, stk_scr,
               *, C, Cq, B, H, W, Hp, Wp, G):
    f32 = jnp.float32
    HW = H * W
    Mb = Hp * Wp
    M = B * Mb

    # Zero only the tap halos of the persistent scratch buffers (their core
    # regions are fully overwritten, masked, before they are ever read).
    cat_scr[:, 0:G] = jnp.zeros((3 * C, G), f32)
    cat_scr[:, G + M:G + M + G] = jnp.zeros((3 * C, G), f32)
    sum_scr[:, 0:G] = jnp.zeros((C, G), f32)
    sum_scr[:, G + M:G + M + G] = jnp.zeros((C, G), f32)

    mask = mask_ref[...]                        # (1, M): 1 = real pixel, 0 = pad
    xpc = xp_ref[:, G:G + M]                    # (C, M)   row-padded layout
    xc = xc_ref[...]                            # (C, B*HW) compact layout

    def col(j):                                 # packed bias / BN column
        return tbl_ref[:, j:j + 1]              # (C, 1)

    def bn(z, js, jt, relu=True):
        z = z * col(js) + col(jt)
        return jnp.maximum(z, 0.0) if relu else z

    # ---------------- pointwise projections (two packed matmuls) -----------
    px = jnp.dot(wpt_ref[0:C + Cq, :], xpc, preferred_element_type=f32)
    cx = jnp.dot(wpt_ref[C + Cq:2 * (C + Cq), :], xc, preferred_element_type=f32)
    b1 = bn(px[0:C], 1, 2) * mask                       # local1 (1x1 + BN + ReLU)
    q = px[C:C + Cq] + tbl_ref[0:Cq, 11:12]             # queries (padded domain)
    v = cx[0:C] + col(0)                                # values  (compact)
    k = cx[C:C + Cq] + tbl_ref[0:Cq, 12:13]             # keys    (compact)

    # ---------------- tap-stacked 3x3 convolutions (one deep dot each) -----
    def build_stack(slab, cin, offsets):
        for t, (dh, dw) in enumerate(offsets):
            off = G + dh * Wp + dw                      # static slab offset
            stk_scr[t * cin:(t + 1) * cin, :] = slab(off)

    def conv(w, cin):
        return jnp.dot(w, stk_scr[0:9 * cin, :], preferred_element_type=f32)

    xp_slab = lambda off: xp_ref[:, off:off + M]
    cat_slab = lambda off: cat_scr[:, off:off + M]
    sum_slab = lambda off: sum_scr[:, off:off + M]

    cat_scr[0:C, G:G + M] = b1
    build_stack(xp_slab, C, OFF1)                       # local2 (3x3, dil=1)
    cat_scr[C:2 * C, G:G + M] = bn(conv(wt3_ref[0:C, :], C), 3, 4) * mask
    build_stack(xp_slab, C, OFF2)                       # local3 (3x3, dil=2)
    cat_scr[2 * C:3 * C, G:G + M] = bn(conv(wt3_ref[C:2 * C, :], C), 5, 6) * mask

    build_stack(cat_slab, 3 * C, OFF1)                  # conv_cat (27*C deep)
    out2 = bn(conv(wcat_ref[...], 3 * C), 7, 8)

    # ---------------- self-attention (per batch image) ---------------------
    for b in range(B):
        qb = q[:, b * Mb:(b + 1) * Mb]                  # (Cq, Mb)
        kb = k[:, b * HW:(b + 1) * HW]                  # (Cq, HW)
        vb = v[:, b * HW:(b + 1) * HW]                  # (C, HW)
        # et[j, i] = energy[i, j]; contract channel axes, no k.T materialised.
        et = lax.dot_general(kb, qb, (((0,), (0,)), ((), ())),
                             preferred_element_type=jnp.float32)
        et = et - jnp.max(et, axis=0, keepdims=True)
        ee = jnp.exp(et)
        inv = pl.reciprocal(jnp.sum(ee, axis=0, keepdims=True), approx=False)
        sum_scr[:, G + b * Mb:G + (b + 1) * Mb] = (
            jnp.dot(vb, ee, preferred_element_type=jnp.float32) * inv)

    # out1 + out2 (masked), accumulated in place in sum_scr's core.
    sum_scr[:, G:G + M] = (sum_scr[:, G:G + M] + out2) * mask

    build_stack(sum_slab, C, OFF1)                      # conv_res
    res = bn(conv(wt3_ref[2 * C:3 * C, :], C), 9, 10, relu=False)
    o_ref[...] = jnp.maximum(xpc + res, 0.0)            # residual add + ReLU


# ----------------------------- wrapper --------------------------------------

def lm_forward(p, x):
    f32 = jnp.float32
    B, C, H, W = x.shape
    Cq = p['wq'].shape[0]
    HW = H * W
    Hp = H + 2 * PAD
    Wp = ((W + 2 * PAD + 7) // 8) * 8            # round padded row up (lanes)
    Mb = Hp * Wp
    M = B * Mb
    G = ((2 * Wp + 2 + 63) // 64) * 64           # flat tap halo (>= 2*Wp + 2)
    NP = M + 2 * G

    xr = x.astype(f32)
    # Row-padded layout (C, B*Hp*Wp) with a flat zero halo of G on each side.
    xpad = jnp.pad(xr, ((0, 0), (0, 0), (PAD, PAD), (PAD, Wp - W - PAD)))
    xp = jnp.pad(xpad.transpose(1, 0, 2, 3).reshape(C, M), ((0, 0), (G, G)))
    # Compact layout (C, B*H*W) for attention keys / values.
    xc = xr.reshape(B, C, HW).transpose(1, 0, 2).reshape(C, B * HW)

    # Validity mask over the padded core (1 = real pixel).
    hh = np.repeat(np.arange(Hp), Wp)
    ww = np.tile(np.arange(Wp), Hp)
    mrow = ((hh >= PAD) & (hh < PAD + H) & (ww >= PAD) & (ww < PAD + W))
    mask = jnp.asarray(np.tile(mrow, B)[None, :].astype(np.float32))   # (1, M)

    def stackw(w):  # OIHW (Co,Ci,3,3) -> (Co, 9*Ci), tap-major (t = kh*3+kw)
        co, ci, kh, kw = w.shape
        return jnp.transpose(w, (0, 2, 3, 1)).reshape(co, kh * kw * ci).astype(f32)

    # Packed pointwise weights: [w_l1; wq; wv; wk].
    w_pt = jnp.concatenate([
        p['w_l1'].reshape(C, C), p['wq'].reshape(Cq, C),
        p['wv'].reshape(C, C), p['wk'].reshape(Cq, C)], axis=0).astype(f32)
    # Packed tap weights for local2 / local3 / conv_res, and conv_cat.
    w_t3 = jnp.concatenate([stackw(p['w_l2']), stackw(p['w_l3']),
                            stackw(p['w_res'])], axis=0)            # (3C, 9C)
    w_cat = stackw(p['w_cat'])                                      # (C, 27C)

    # Packed bias / BN table (C, 13):
    # 0:bv 1:s_l1 2:t_l1 3:s_l2 4:t_l2 5:s_l3 6:t_l3 7:s_cat 8:t_cat
    # 9:s_res 10:t_res 11:bq(first Cq rows) 12:bk(first Cq rows)
    cols = [p['bv'],
            p['bn_l1'][0], p['bn_l1'][1], p['bn_l2'][0], p['bn_l2'][1],
            p['bn_l3'][0], p['bn_l3'][1], p['bn_cat'][0], p['bn_cat'][1],
            p['bn_res'][0], p['bn_res'][1]]
    tbl = jnp.stack([c.astype(f32) for c in cols], axis=1)          # (C, 11)
    qk = jnp.zeros((C, 2), f32)
    qk = qk.at[:Cq, 0].set(p['bq'].astype(f32)).at[:Cq, 1].set(p['bk'].astype(f32))
    tbl = jnp.concatenate([tbl, qk], axis=1)                        # (C, 13)

    args = (xp, xc, mask, tbl, w_pt, w_t3, w_cat)
    in_specs = [pl.BlockSpec(a.shape, lambda i, n=a.ndim: (0,) * n) for a in args]

    out = pl.pallas_call(
        functools.partial(_lm_kernel, C=C, Cq=Cq, B=B, H=H, W=W,
                          Hp=Hp, Wp=Wp, G=G),
        out_shape=jax.ShapeDtypeStruct((C, M), f32),
        grid=(1,),
        in_specs=in_specs,
        out_specs=pl.BlockSpec((C, M), lambda i: (0, 0)),
        scratch_shapes=[
            pltpu.VMEM((3 * C, NP), f32),       # [b1; b2; b3], zero halo
            pltpu.VMEM((C, NP), f32),           # out1 + out2,  zero halo
            pltpu.VMEM((9 * 3 * C, M), f32),    # stacked-tap matmul operand
        ],
        compiler_params=pltpu.CompilerParams(
            dimension_semantics=("arbitrary",),
            vmem_limit_bytes=32 * 1024 * 1024),
    )(*args)

    out = out.reshape(C, B, Hp, Wp)[:, :, PAD:PAD + H, PAD:PAD + W]
    return out.transpose(1, 0, 2, 3)


# ----------------------------- params --------------------------------------

def init_params(key, channel):
    tc = channel // 4
    keys = iter(jax.random.split(key, 32))

    def nrm(shape, s=0.1):
        return (s * jax.random.normal(next(keys), shape)).astype(jnp.float32)

    def bn(c):
        gamma = 1.0 + 0.1 * jax.random.normal(next(keys), (c,))
        beta = 0.1 * jax.random.normal(next(keys), (c,))
        mean = 0.1 * jax.random.normal(next(keys), (c,))
        var = jnp.abs(jax.random.normal(next(keys), (c,))) * 0.1 + 0.5
        scale = gamma / jnp.sqrt(var + BN_EPS)
        shift = beta - mean * scale
        return scale.astype(jnp.float32), shift.astype(jnp.float32)

    p = {}
    p['wq'] = nrm((tc, channel, 1, 1)); p['bq'] = nrm((tc,))
    p['wk'] = nrm((tc, channel, 1, 1)); p['bk'] = nrm((tc,))
    p['wv'] = nrm((channel, channel, 1, 1)); p['bv'] = nrm((channel,))
    p['w_l1'] = nrm((channel, channel, 1, 1)); p['bn_l1'] = bn(channel)
    p['w_l2'] = nrm((channel, channel, 3, 3)); p['bn_l2'] = bn(channel)
    p['w_l3'] = nrm((channel, channel, 3, 3)); p['bn_l3'] = bn(channel)
    p['w_cat'] = nrm((channel, channel * 3, 3, 3)); p['bn_cat'] = bn(channel)
    p['w_res'] = nrm((channel, channel, 3, 3)); p['bn_res'] = bn(channel)
    return p


# ----------------------------- pure-JAX reference ---------------------------

def _conv(x, w, padding, dilation=1, bias=None):
    y = lax.conv_general_dilated(
        x, w, window_strides=(1, 1),
        padding=((padding, padding), (padding, padding)),
        rhs_dilation=(dilation, dilation),
        dimension_numbers=('NCHW', 'OIHW', 'NCHW'))
    if bias is not None:
        y = y + bias[None, :, None, None]
    return y


def lm_reference(p, x):
    B, C, H, W = x.shape
    q = _conv(x, p['wq'], 0, bias=p['bq']).reshape(B, -1, H * W).transpose(0, 2, 1)
    k = _conv(x, p['wk'], 0, bias=p['bk']).reshape(B, -1, H * W)
    energy = jnp.einsum('bnc,bcm->bnm', q, k)
    attn = jax.nn.softmax(energy, axis=-1)
    v = _conv(x, p['wv'], 0, bias=p['bv']).reshape(B, -1, H * W)
    out1 = jnp.einsum('bcn,bmn->bcm', v, attn).reshape(B, C, H, W)

    def bn_relu(z, sc_sh, relu=True):
        sc, sh = sc_sh
        z = z * sc[None, :, None, None] + sh[None, :, None, None]
        return jnp.maximum(z, 0.0) if relu else z

    b1 = bn_relu(_conv(x, p['w_l1'], 0), p['bn_l1'])
    b2 = bn_relu(_conv(x, p['w_l2'], 1), p['bn_l2'])
    b3 = bn_relu(_conv(x, p['w_l3'], 2, dilation=2), p['bn_l3'])
    out2 = bn_relu(_conv(jnp.concatenate([b1, b2, b3], 1), p['w_cat'], 1), p['bn_cat'])
    res = bn_relu(_conv(out1 + out2, p['w_res'], 1), p['bn_res'], relu=False)
    return jnp.maximum(x + res, 0.0)


# ----------------------------- main -----------------------------------------

if __name__ == "__main__":
    key = jax.random.PRNGKey(0)
    kx, kp = jax.random.split(key)
    B, C, H, W = 2, 16, 8, 8
    x = jax.random.normal(kx, (B, C, H, W), dtype=jnp.float32)
    params = init_params(kp, C)

    out = jax.block_until_ready(lm_forward(params, x))
    ref = jax.block_until_ready(lm_reference(params, x))
    np.testing.assert_allclose(np.asarray(out), np.asarray(ref),
                               rtol=1e-3, atol=1e-3)
    print("KERNEL_OK")
</pallas_src>

<mosaic_0001>
module attributes {stable_mosaic.version = 11 : i64} {
  func.func @_lm_kernel(%arg0: i32, %arg1: memref<16x512xf32, #tpu.memory_space<vmem>>, %arg2: memref<16x128xf32, #tpu.memory_space<vmem>>, %arg3: memref<1x384xf32, #tpu.memory_space<vmem>>, %arg4: memref<16x13xf32, #tpu.memory_space<vmem>>, %arg5: memref<40x16xf32, #tpu.memory_space<vmem>>, %arg6: memref<48x144xf32, #tpu.memory_space<vmem>>, %arg7: memref<16x432xf32, #tpu.memory_space<vmem>>, %arg8: memref<16x384xf32, #tpu.memory_space<vmem>>, %arg9: memref<48x512xf32, #tpu.memory_space<vmem>>, %arg10: memref<16x512xf32, #tpu.memory_space<vmem>>, %arg11: memref<432x384xf32, #tpu.memory_space<vmem>>) attributes {dimension_semantics = [#tpu.dimension_semantics<arbitrary>], iteration_bounds = array<i64: 1>, scalar_prefetch = 0 : i64, scratch_operands = 3 : i64, tpu.core_type = #tpu.core_type<tc>, window_params = [{pipeline_mode = #tpu.pipeline_mode<synchronous>, transform_indices = @transform_0, window_bounds = array<i64: 16, 512>}, {pipeline_mode = #tpu.pipeline_mode<synchronous>, transform_indices = @transform_1, window_bounds = array<i64: 16, 128>}, {pipeline_mode = #tpu.pipeline_mode<synchronous>, transform_indices = @transform_2, window_bounds = array<i64: 1, 384>}, {pipeline_mode = #tpu.pipeline_mode<synchronous>, transform_indices = @transform_3, window_bounds = array<i64: 16, 13>}, {pipeline_mode = #tpu.pipeline_mode<synchronous>, transform_indices = @transform_4, window_bounds = array<i64: 40, 16>}, {pipeline_mode = #tpu.pipeline_mode<synchronous>, transform_indices = @transform_5, window_bounds = array<i64: 48, 144>}, {pipeline_mode = #tpu.pipeline_mode<synchronous>, transform_indices = @transform_6, window_bounds = array<i64: 16, 432>}, {pipeline_mode = #tpu.pipeline_mode<synchronous>, transform_indices = @transform_7, window_bounds = array<i64: 16, 384>}]} {
    %cst = arith.constant 0.000000e+00 : f32
    %0 = vector.broadcast %cst : f32 to vector<48x64xf32>
    %c0 = arith.constant 0 : index
    %c0_0 = arith.constant 0 : index
    %1 = vector.load %arg9[%c0, %c0_0] : memref<48x512xf32, #tpu.memory_space<vmem>>, vector<48x64xf32>
    tpu.vector_store %arg9[%c0, %c0_0], %0 {strides = array<i32>} : memref<48x512xf32, #tpu.memory_space<vmem>>, vector<48x64xf32>,
    %cst_1 = arith.constant 0.000000e+00 : f32
    %2 = vector.broadcast %cst_1 : f32 to vector<48x64xf32>
    %c0_2 = arith.constant 0 : index
    %c448 = arith.constant 448 : index
    %3 = vector.load %arg9[%c0_2, %c448] : memref<48x512xf32, #tpu.memory_space<vmem>>, vector<48x64xf32>
    tpu.vector_store %arg9[%c0_2, %c448], %2 {strides = array<i32>} : memref<48x512xf32, #tpu.memory_space<vmem>>, vector<48x64xf32>,
    %cst_3 = arith.constant 0.000000e+00 : f32
    %4 = vector.broadcast %cst_3 : f32 to vector<16x64xf32>
    %c0_4 = arith.constant 0 : index
    %c0_5 = arith.constant 0 : index
    %5 = vector.load %arg10[%c0_4, %c0_5] : memref<16x512xf32, #tpu.memory_space<vmem>>, vector<16x64xf32>
    tpu.vector_store %arg10[%c0_4, %c0_5], %4 {strides = array<i32>} : memref<16x512xf32, #tpu.memory_space<vmem>>, vector<16x64xf32>,
    %cst_6 = arith.constant 0.000000e+00 : f32
    %6 = vector.broadcast %cst_6 : f32 to vector<16x64xf32>
    %c0_7 = arith.constant 0 : index
    %c448_8 = arith.constant 448 : index
    %7 = vector.load %arg10[%c0_7, %c448_8] : memref<16x512xf32, #tpu.memory_space<vmem>>, vector<16x64xf32>
    tpu.vector_store %arg10[%c0_7, %c448_8], %6 {strides = array<i32>} : memref<16x512xf32, #tpu.memory_space<vmem>>, vector<16x64xf32>,
    %c0_9 = arith.constant 0 : index
    %c0_10 = arith.constant 0 : index
    %8 = vector.load %arg3[%c0_9, %c0_10] : memref<1x384xf32, #tpu.memory_space<vmem>>, vector<1x384xf32>
    %c0_11 = arith.constant 0 : index
    %c64 = arith.constant 64 : index
    %9 = vector.load %arg1[%c0_11, %c64] : memref<16x512xf32, #tpu.memory_space<vmem>>, vector<16x384xf32>
    %c0_12 = arith.constant 0 : index
    %c0_13 = arith.constant 0 : index
    %10 = vector.load %arg2[%c0_12, %c0_13] : memref<16x128xf32, #tpu.memory_space<vmem>>, vector<16x128xf32>
    %c0_14 = arith.constant 0 : index
    %c0_15 = arith.constant 0 : index
    %11 = vector.load %arg5[%c0_14, %c0_15] : memref<40x16xf32, #tpu.memory_space<vmem>>, vector<20x16xf32>
    %cst_16 = arith.constant dense<0.000000e+00> : vector<20x384xf32>
    %12 = tpu.matmul %11, %9, %cst_16 {dimension_numbers = #tpu.dot_dimension_numbers<[1], [0], [0], [1], [0, 0, 1, 1], [], []>} : vector<20x16xf32>, vector<16x384xf32>, vector<20x384xf32> -> vector<20x384xf32>
    %c20 = arith.constant 20 : index
    %c0_17 = arith.constant 0 : index
    %13 = vector.load %arg5[%c20, %c0_17] : memref<40x16xf32, #tpu.memory_space<vmem>>, vector<20x16xf32>
    %cst_18 = arith.constant dense<0.000000e+00> : vector<20x128xf32>
    %14 = tpu.matmul %13, %10, %cst_18 {dimension_numbers = #tpu.dot_dimension_numbers<[1], [0], [0], [1], [0, 0, 1, 1], [], []>} : vector<20x16xf32>, vector<16x128xf32>, vector<20x128xf32> -> vector<20x128xf32>
    %15 = vector.extract_strided_slice %12 {offsets = [0, 0], sizes = [16, 384], strides = [1, 1]} : vector<20x384xf32> to vector<16x384xf32>
    %c0_19 = arith.constant 0 : index
    %c1 = arith.constant 1 : index
    %16 = vector.load %arg4[%c0_19, %c1] : memref<16x13xf32, #tpu.memory_space<vmem>>, vector<16x1xf32>
    %17 = vector.broadcast %16 : vector<16x1xf32> to vector<16x384xf32>
    %18 = arith.mulf %15, %17 : vector<16x384xf32>
    %c0_20 = arith.constant 0 : index
    %c2 = arith.constant 2 : index
    %19 = vector.load %arg4[%c0_20, %c2] : memref<16x13xf32, #tpu.memory_space<vmem>>, vector<16x1xf32>
    %20 = vector.broadcast %19 : vector<16x1xf32> to vector<16x384xf32>
    %21 = arith.addf %18, %20 : vector<16x384xf32>
    %cst_21 = arith.constant 0.000000e+00 : f32
    %22 = vector.broadcast %cst_21 : f32 to vector<16x384xf32>
    %23 = arith.maximumf %21, %22 : vector<16x384xf32>
    %24 = vector.broadcast %8 : vector<1x384xf32> to vector<16x384xf32>
    %25 = arith.mulf %23, %24 : vector<16x384xf32>
    %26 = vector.extract_strided_slice %12 {offsets = [16, 0], sizes = [4, 384], strides = [1, 1]} : vector<20x384xf32> to vector<4x384xf32>
    %c0_22 = arith.constant 0 : index
    %c11 = arith.constant 11 : index
    %27 = vector.load %arg4[%c0_22, %c11] : memref<16x13xf32, #tpu.memory_space<vmem>>, vector<4x1xf32>
    %28 = vector.broadcast %27 : vector<4x1xf32> to vector<4x384xf32>
    %29 = arith.addf %26, %28 : vector<4x384xf32>
    %30 = vector.extract_strided_slice %14 {offsets = [0, 0], sizes = [16, 128], strides = [1, 1]} : vector<20x128xf32> to vector<16x128xf32>
    %c0_23 = arith.constant 0 : index
    %c0_24 = arith.constant 0 : index
    %31 = vector.load %arg4[%c0_23, %c0_24] : memref<16x13xf32, #tpu.memory_space<vmem>>, vector<16x1xf32>
    %32 = vector.broadcast %31 : vector<16x1xf32> to vector<16x128xf32>
    %33 = arith.addf %30, %32 : vector<16x128xf32>
    %34 = vector.extract_strided_slice %14 {offsets = [16, 0], sizes = [4, 128], strides = [1, 1]} : vector<20x128xf32> to vector<4x128xf32>
    %c0_25 = arith.constant 0 : index
    %c12 = arith.constant 12 : index
    %35 = vector.load %arg4[%c0_25, %c12] : memref<16x13xf32, #tpu.memory_space<vmem>>, vector<4x1xf32>
    %36 = vector.broadcast %35 : vector<4x1xf32> to vector<4x128xf32>
    %37 = arith.addf %34, %36 : vector<4x128xf32>
    %c0_26 = arith.constant 0 : index
    %c64_27 = arith.constant 64 : index
    %38 = vector.load %arg9[%c0_26, %c64_27] : memref<48x512xf32, #tpu.memory_space<vmem>>, vector<16x384xf32>
    tpu.vector_store %arg9[%c0_26, %c64_27], %25 {strides = array<i32>} : memref<48x512xf32, #tpu.memory_space<vmem>>, vector<16x384xf32>,
    %c0_28 = arith.constant 0 : index
    %c47 = arith.constant 47 : index
    %39 = vector.load %arg1[%c0_28, %c47] : memref<16x512xf32, #tpu.memory_space<vmem>>, vector<16x384xf32>
    %c0_29 = arith.constant 0 : index
    %c0_30 = arith.constant 0 : index
    %40 = vector.load %arg11[%c0_29, %c0_30] : memref<432x384xf32, #tpu.memory_space<vmem>>, vector<16x384xf32>
    tpu.vector_store %arg11[%c0_29, %c0_30], %39 {strides = array<i32>} : memref<432x384xf32, #tpu.memory_space<vmem>>, vector<16x384xf32>,
    %c0_31 = arith.constant 0 : index
    %c48 = arith.constant 48 : index
    %41 = vector.load %arg1[%c0_31, %c48] : memref<16x512xf32, #tpu.memory_space<vmem>>, vector<16x384xf32>
    %c16 = arith.constant 16 : index
    %c0_32 = arith.constant 0 : index
    %42 = vector.load %arg11[%c16, %c0_32] : memref<432x384xf32, #tpu.memory_space<vmem>>, vector<16x384xf32>
    tpu.vector_store %arg11[%c16, %c0_32], %41 {strides = array<i32>} : memref<432x384xf32, #tpu.memory_space<vmem>>, vector<16x384xf32>,
    %c0_33 = arith.constant 0 : index
    %c49 = arith.constant 49 : index
    %43 = vector.load %arg1[%c0_33, %c49] : memref<16x512xf32, #tpu.memory_space<vmem>>, vector<16x384xf32>
    %c32 = arith.constant 32 : index
    %c0_34 = arith.constant 0 : index
    %44 = vector.load %arg11[%c32, %c0_34] : memref<432x384xf32, #tpu.memory_space<vmem>>, vector<16x384xf32>
    tpu.vector_store %arg11[%c32, %c0_34], %43 {strides = array<i32>} : memref<432x384xf32, #tpu.memory_space<vmem>>, vector<16x384xf32>,
    %c0_35 = arith.constant 0 : index
    %c63 = arith.constant 63 : index
    %45 = vector.load %arg1[%c0_35, %c63] : memref<16x512xf32, #tpu.memory_space<vmem>>, vector<16x384xf32>
    %c48_36 = arith.constant 48 : index
    %c0_37 = arith.constant 0 : index
    %46 = vector.load %arg11[%c48_36, %c0_37] : memref<432x384xf32, #tpu.memory_space<vmem>>, vector<16x384xf32>
    tpu.vector_store %arg11[%c48_36, %c0_37], %45 {strides = array<i32>} : memref<432x384xf32, #tpu.memory_space<vmem>>, vector<16x384xf32>,
    %c0_38 = arith.constant 0 : index
    %c64_39 = arith.constant 64 : index
    %47 = vector.load %arg1[%c0_38, %c64_39] : memref<16x512xf32, #tpu.memory_space<vmem>>, vector<16x384xf32>
    %c64_40 = arith.constant 64 : index
    %c0_41 = arith.constant 0 : index
    %48 = vector.load %arg11[%c64_40, %c0_41] : memref<432x384xf32, #tpu.memory_space<vmem>>, vector<16x384xf32>
    tpu.vector_store %arg11[%c64_40, %c0_41], %47 {strides = array<i32>} : memref<432x384xf32, #tpu.memory_space<vmem>>, vector<16x384xf32>,
    %c0_42 = arith.constant 0 : index
    %c65 = arith.constant 65 : index
    %49 = vector.load %arg1[%c0_42, %c65] : memref<16x512xf32, #tpu.memory_space<vmem>>, vector<16x384xf32>
    %c80 = arith.constant 80 : index
    %c0_43 = arith.constant 0 : index
    %50 = vector.load %arg11[%c80, %c0_43] : memref<432x384xf32, #tpu.memory_space<vmem>>, vector<16x384xf32>
    tpu.vector_store %arg11[%c80, %c0_43], %49 {strides = array<i32>} : memref<432x384xf32, #tpu.memory_space<vmem>>, vector<16x384xf32>,
    %c0_44 = arith.constant 0 : index
    %c79 = arith.constant 79 : index
    %51 = vector.load %arg1[%c0_44, %c79] : memref<16x512xf32, #tpu.memory_space<vmem>>, vector<16x384xf32>
    %c96 = arith.constant 96 : index
    %c0_45 = arith.constant 0 : index
    %52 = vector.load %arg11[%c96, %c0_45] : memref<432x384xf32, #tpu.memory_space<vmem>>, vector<16x384xf32>
    tpu.vector_store %arg11[%c96, %c0_45], %51 {strides = array<i32>} : memref<432x384xf32, #tpu.memory_space<vmem>>, vector<16x384xf32>,
    %c0_46 = arith.constant 0 : index
    %c80_47 = arith.constant 80 : index
    %53 = vector.load %arg1[%c0_46, %c80_47] : memref<16x512xf32, #tpu.memory_space<vmem>>, vector<16x384xf32>
    %c112 = arith.constant 112 : index
    %c0_48 = arith.constant 0 : index
    %54 = vector.load %arg11[%c112, %c0_48] : memref<432x384xf32, #tpu.memory_space<vmem>>, vector<16x384xf32>
    tpu.vector_store %arg11[%c112, %c0_48], %53 {strides = array<i32>} : memref<432x384xf32, #tpu.memory_space<vmem>>, vector<16x384xf32>,
    %c0_49 = arith.constant 0 : index
    %c81 = arith.constant 81 : index
    %55 = vector.load %arg1[%c0_49, %c81] : memref<16x512xf32, #tpu.memory_space<vmem>>, vector<16x384xf32>
    %c128 = arith.constant 128 : index
    %c0_50 = arith.constant 0 : index
    %56 = vector.load %arg11[%c128, %c0_50] : memref<432x384xf32, #tpu.memory_space<vmem>>, vector<16x384xf32>
    tpu.vector_store %arg11[%c128, %c0_50], %55 {strides = array<i32>} : memref<432x384xf32, #tpu.memory_space<vmem>>, vector<16x384xf32>,
    %c0_51 = arith.constant 0 : index
    %c0_52 = arith.constant 0 : index
    %57 = vector.load %arg6[%c0_51, %c0_52] : memref<48x144xf32, #tpu.memory_space<vmem>>, vector<16x144xf32>
    %c0_53 = arith.constant 0 : index
    %c0_54 = arith.constant 0 : index
    %58 = vector.load %arg11[%c0_53, %c0_54] : memref<432x384xf32, #tpu.memory_space<vmem>>, vector<144x384xf32>
    %cst_55 = arith.constant dense<0.000000e+00> : vector<16x384xf32>
    %59 = tpu.matmul %57, %58, %cst_55 {dimension_numbers = #tpu.dot_dimension_numbers<[1], [0], [0], [1], [0, 0, 1, 1], [], []>} : vector<16x144xf32>, vector<144x384xf32>, vector<16x384xf32> -> vector<16x384xf32>
    %c0_56 = arith.constant 0 : index
    %c3 = arith.constant 3 : index
    %60 = vector.load %arg4[%c0_56, %c3] : memref<16x13xf32, #tpu.memory_space<vmem>>, vector<16x1xf32>
    %61 = vector.broadcast %60 : vector<16x1xf32> to vector<16x384xf32>
    %62 = arith.mulf %59, %61 : vector<16x384xf32>
    %c0_57 = arith.constant 0 : index
    %c4 = arith.constant 4 : index
    %63 = vector.load %arg4[%c0_57, %c4] : memref<16x13xf32, #tpu.memory_space<vmem>>, vector<16x1xf32>
    %64 = vector.broadcast %63 : vector<16x1xf32> to vector<16x384xf32>
    %65 = arith.addf %62, %64 : vector<16x384xf32>
    %cst_58 = arith.constant 0.000000e+00 : f32
    %66 = vector.broadcast %cst_58 : f32 to vector<16x384xf32>
    %67 = arith.maximumf %65, %66 : vector<16x384xf32>
    %68 = vector.broadcast %8 : vector<1x384xf32> to vector<16x384xf32>
    %69 = arith.mulf %67, %68 : vector<16x384xf32>
    %c16_59 = arith.constant 16 : index
    %c64_60 = arith.constant 64 : index
    %70 = vector.load %arg9[%c16_59, %c64_60] : memref<48x512xf32, #tpu.memory_space<vmem>>, vector<16x384xf32>
    tpu.vector_store %arg9[%c16_59, %c64_60], %69 {strides = array<i32>} : memref<48x512xf32, #tpu.memory_space<vmem>>, vector<16x384xf32>,
    %c0_61 = arith.constant 0 : index
    %c30 = arith.constant 30 : index
    %71 = vector.load %arg1[%c0_61, %c30] : memref<16x512xf32, #tpu.memory_space<vmem>>, vector<16x384xf32>
    %c0_62 = arith.constant 0 : index
    %c0_63 = arith.constant 0 : index
    %72 = vector.load %arg11[%c0_62, %c0_63] : memref<432x384xf32, #tpu.memory_space<vmem>>, vector<16x384xf32>
    tpu.vector_store %arg11[%c0_62, %c0_63], %71 {strides = array<i32>} : memref<432x384xf32, #tpu.memory_space<vmem>>, vector<16x384xf32>,
    %c0_64 = arith.constant 0 : index
    %c32_65 = arith.constant 32 : index
    %73 = vector.load %arg1[%c0_64, %c32_65] : memref<16x512xf32, #tpu.memory_space<vmem>>, vector<16x384xf32>
    %c16_66 = arith.constant 16 : index
    %c0_67 = arith.constant 0 : index
    %74 = vector.load %arg11[%c16_66, %c0_67] : memref<432x384xf32, #tpu.memory_space<vmem>>, vector<16x384xf32>
    tpu.vector_store %arg11[%c16_66, %c0_67], %73 {strides = array<i32>} : memref<432x384xf32, #tpu.memory_space<vmem>>, vector<16x384xf32>,
    %c0_68 = arith.constant 0 : index
    %c34 = arith.constant 34 : index
    %75 = vector.load %arg1[%c0_68, %c34] : memref<16x512xf32, #tpu.memory_space<vmem>>, vector<16x384xf32>
    %c32_69 = arith.constant 32 : index
    %c0_70 = arith.constant 0 : index
    %76 = vector.load %arg11[%c32_69, %c0_70] : memref<432x384xf32, #tpu.memory_space<vmem>>, vector<16x384xf32>
    tpu.vector_store %arg11[%c32_69, %c0_70], %75 {strides = array<i32>} : memref<432x384xf32, #tpu.memory_space<vmem>>, vector<16x384xf32>,
    %c0_71 = arith.constant 0 : index
    %c62 = arith.constant 62 : index
    %77 = vector.load %arg1[%c0_71, %c62] : memref<16x512xf32, #tpu.memory_space<vmem>>, vector<16x384xf32>
    %c48_72 = arith.constant 48 : index
    %c0_73 = arith.constant 0 : index
    %78 = vector.load %arg11[%c48_72, %c0_73] : memref<432x384xf32, #tpu.memory_space<vmem>>, vector<16x384xf32>
    tpu.vector_store %arg11[%c48_72, %c0_73], %77 {strides = array<i32>} : memref<432x384xf32, #tpu.memory_space<vmem>>, vector<16x384xf32>,
    %c0_74 = arith.constant 0 : index
    %c64_75 = arith.constant 64 : index
    %79 = vector.load %arg1[%c0_74, %c64_75] : memref<16x512xf32, #tpu.memory_space<vmem>>, vector<16x384xf32>
    %c64_76 = arith.constant 64 : index
    %c0_77 = arith.constant 0 : index
    %80 = vector.load %arg11[%c64_76, %c0_77] : memref<432x384xf32, #tpu.memory_space<vmem>>, vector<16x384xf32>
    tpu.vector_store %arg11[%c64_76, %c0_77], %79 {strides = array<i32>} : memref<432x384xf32, #tpu.memory_space<vmem>>, vector<16x384xf32>,
    %c0_78 = arith.constant 0 : index
    %c66 = arith.constant 66 : index
    %81 = vector.load %arg1[%c0_78, %c66] : memref<16x512xf32, #tpu.memory_space<vmem>>, vector<16x384xf32>
    %c80_79 = arith.constant 80 : index
    %c0_80 = arith.constant 0 : index
    %82 = vector.load %arg11[%c80_79, %c0_80] : memref<432x384xf32, #tpu.memory_space<vmem>>, vector<16x384xf32>
    tpu.vector_store %arg11[%c80_79, %c0_80], %81 {strides = array<i32>} : memref<432x384xf32, #tpu.memory_space<vmem>>, vector<16x384xf32>,
    %c0_81 = arith.constant 0 : index
    %c94 = arith.constant 94 : index
    %83 = vector.load %arg1[%c0_81, %c94] : memref<16x512xf32, #tpu.memory_space<vmem>>, vector<16x384xf32>
    %c96_82 = arith.constant 96 : index
    %c0_83 = arith.constant 0 : index
    %84 = vector.load %arg11[%c96_82, %c0_83] : memref<432x384xf32, #tpu.memory_space<vmem>>, vector<16x384xf32>
    tpu.vector_store %arg11[%c96_82, %c0_83], %83 {strides = array<i32>} : memref<432x384xf32, #tpu.memory_space<vmem>>, vector<16x384xf32>,
    %c0_84 = arith.constant 0 : index
    %c96_85 = arith.constant 96 : index
    %85 = vector.load %arg1[%c0_84, %c96_85] : memref<16x512xf32, #tpu.memory_space<vmem>>, vector<16x384xf32>
    %c112_86 = arith.constant 112 : index
    %c0_87 = arith.constant 0 : index
    %86 = vector.load %arg11[%c112_86, %c0_87] : memref<432x384xf32, #tpu.memory_space<vmem>>, vector<16x384xf32>
    tpu.vector_store %arg11[%c112_86, %c0_87], %85 {strides = array<i32>} : memref<432x384xf32, #tpu.memory_space<vmem>>, vector<16x384xf32>,
    %c0_88 = arith.constant 0 : index
    %c98 = arith.constant 98 : index
    %87 = vector.load %arg1[%c0_88, %c98] : memref<16x512xf32, #tpu.memory_space<vmem>>, vector<16x384xf32>
    %c128_89 = arith.constant 128 : index
    %c0_90 = arith.constant 0 : index
    %88 = vector.load %arg11[%c128_89, %c0_90] : memref<432x384xf32, #tpu.memory_space<vmem>>, vector<16x384xf32>
    tpu.vector_store %arg11[%c128_89, %c0_90], %87 {strides = array<i32>} : memref<432x384xf32, #tpu.memory_space<vmem>>, vector<16x384xf32>,
    %c16_91 = arith.constant 16 : index
    %c0_92 = arith.constant 0 : index
    %89 = vector.load %arg6[%c16_91, %c0_92] : memref<48x144xf32, #tpu.memory_space<vmem>>, vector<16x144xf32>
    %c0_93 = arith.constant 0 : index
    %c0_94 = arith.constant 0 : index
    %90 = vector.load %arg11[%c0_93, %c0_94] : memref<432x384xf32, #tpu.memory_space<vmem>>, vector<144x384xf32>
    %cst_95 = arith.constant dense<0.000000e+00> : vector<16x384xf32>
    %91 = tpu.matmul %89, %90, %cst_95 {dimension_numbers = #tpu.dot_dimension_numbers<[1], [0], [0], [1], [0, 0, 1, 1], [], []>} : vector<16x144xf32>, vector<144x384xf32>, vector<16x384xf32> -> vector<16x384xf32>
    %c0_96 = arith.constant 0 : index
    %c5 = arith.constant 5 : index
    %92 = vector.load %arg4[%c0_96, %c5] : memref<16x13xf32, #tpu.memory_space<vmem>>, vector<16x1xf32>
    %93 = vector.broadcast %92 : vector<16x1xf32> to vector<16x384xf32>
    %94 = arith.mulf %91, %93 : vector<16x384xf32>
    %c0_97 = arith.constant 0 : index
    %c6 = arith.constant 6 : index
    %95 = vector.load %arg4[%c0_97, %c6] : memref<16x13xf32, #tpu.memory_space<vmem>>, vector<16x1xf32>
    %96 = vector.broadcast %95 : vector<16x1xf32> to vector<16x384xf32>
    %97 = arith.addf %94, %96 : vector<16x384xf32>
    %cst_98 = arith.constant 0.000000e+00 : f32
    %98 = vector.broadcast %cst_98 : f32 to vector<16x384xf32>
    %99 = arith.maximumf %97, %98 : vector<16x384xf32>
    %100 = vector.broadcast %8 : vector<1x384xf32> to vector<16x384xf32>
    %101 = arith.mulf %99, %100 : vector<16x384xf32>
    %c32_99 = arith.constant 32 : index
    %c64_100 = arith.constant 64 : index
    %102 = vector.load %arg9[%c32_99, %c64_100] : memref<48x512xf32, #tpu.memory_space<vmem>>, vector<16x384xf32>
    tpu.vector_store %arg9[%c32_99, %c64_100], %101 {strides = array<i32>} : memref<48x512xf32, #tpu.memory_space<vmem>>, vector<16x384xf32>,
    %c0_101 = arith.constant 0 : index
    %c47_102 = arith.constant 47 : index
    %103 = vector.load %arg9[%c0_101, %c47_102] : memref<48x512xf32, #tpu.memory_space<vmem>>, vector<48x384xf32>
    %c0_103 = arith.constant 0 : index
    %c0_104 = arith.constant 0 : index
    %104 = vector.load %arg11[%c0_103, %c0_104] : memref<432x384xf32, #tpu.memory_space<vmem>>, vector<48x384xf32>
    tpu.vector_store %arg11[%c0_103, %c0_104], %103 {strides = array<i32>} : memref<432x384xf32, #tpu.memory_space<vmem>>, vector<48x384xf32>,
    %c0_105 = arith.constant 0 : index
    %c48_106 = arith.constant 48 : index
    %105 = vector.load %arg9[%c0_105, %c48_106] : memref<48x512xf32, #tpu.memory_space<vmem>>, vector<48x384xf32>
    %c48_107 = arith.constant 48 : index
    %c0_108 = arith.constant 0 : index
    %106 = vector.load %arg11[%c48_107, %c0_108] : memref<432x384xf32, #tpu.memory_space<vmem>>, vector<48x384xf32>
    tpu.vector_store %arg11[%c48_107, %c0_108], %105 {strides = array<i32>} : memref<432x384xf32, #tpu.memory_space<vmem>>, vector<48x384xf32>,
    %c0_109 = arith.constant 0 : index
    %c49_110 = arith.constant 49 : index
    %107 = vector.load %arg9[%c0_109, %c49_110] : memref<48x512xf32, #tpu.memory_space<vmem>>, vector<48x384xf32>
    %c96_111 = arith.constant 96 : index
    %c0_112 = arith.constant 0 : index
    %108 = vector.load %arg11[%c96_111, %c0_112] : memref<432x384xf32, #tpu.memory_space<vmem>>, vector<48x384xf32>
    tpu.vector_store %arg11[%c96_111, %c0_112], %107 {strides = array<i32>} : memref<432x384xf32, #tpu.memory_space<vmem>>, vector<48x384xf32>,
    %c0_113 = arith.constant 0 : index
    %c63_114 = arith.constant 63 : index
    %109 = vector.load %arg9[%c0_113, %c63_114] : memref<48x512xf32, #tpu.memory_space<vmem>>, vector<48x384xf32>
    %c144 = arith.constant 144 : index
    %c0_115 = arith.constant 0 : index
    %110 = vector.load %arg11[%c144, %c0_115] : memref<432x384xf32, #tpu.memory_space<vmem>>, vector<48x384xf32>
    tpu.vector_store %arg11[%c144, %c0_115], %109 {strides = array<i32>} : memref<432x384xf32, #tpu.memory_space<vmem>>, vector<48x384xf32>,
    %c0_116 = arith.constant 0 : index
    %c64_117 = arith.constant 64 : index
    %111 = vector.load %arg9[%c0_116, %c64_117] : memref<48x512xf32, #tpu.memory_space<vmem>>, vector<48x384xf32>
    %c192 = arith.constant 192 : index
    %c0_118 = arith.constant 0 : index
    %112 = vector.load %arg11[%c192, %c0_118] : memref<432x384xf32, #tpu.memory_space<vmem>>, vector<48x384xf32>
    tpu.vector_store %arg11[%c192, %c0_118], %111 {strides = array<i32>} : memref<432x384xf32, #tpu.memory_space<vmem>>, vector<48x384xf32>,
    %c0_119 = arith.constant 0 : index
    %c65_120 = arith.constant 65 : index
    %113 = vector.load %arg9[%c0_119, %c65_120] : memref<48x512xf32, #tpu.memory_space<vmem>>, vector<48x384xf32>
    %c240 = arith.constant 240 : index
    %c0_121 = arith.constant 0 : index
    %114 = vector.load %arg11[%c240, %c0_121] : memref<432x384xf32, #tpu.memory_space<vmem>>, vector<48x384xf32>
    tpu.vector_store %arg11[%c240, %c0_121], %113 {strides = array<i32>} : memref<432x384xf32, #tpu.memory_space<vmem>>, vector<48x384xf32>,
    %c0_122 = arith.constant 0 : index
    %c79_123 = arith.constant 79 : index
    %115 = vector.load %arg9[%c0_122, %c79_123] : memref<48x512xf32, #tpu.memory_space<vmem>>, vector<48x384xf32>
    %c288 = arith.constant 288 : index
    %c0_124 = arith.constant 0 : index
    %116 = vector.load %arg11[%c288, %c0_124] : memref<432x384xf32, #tpu.memory_space<vmem>>, vector<48x384xf32>
    tpu.vector_store %arg11[%c288, %c0_124], %115 {strides = array<i32>} : memref<432x384xf32, #tpu.memory_space<vmem>>, vector<48x384xf32>,
    %c0_125 = arith.constant 0 : index
    %c80_126 = arith.constant 80 : index
    %117 = vector.load %arg9[%c0_125, %c80_126] : memref<48x512xf32, #tpu.memory_space<vmem>>, vector<48x384xf32>
    %c336 = arith.constant 336 : index
    %c0_127 = arith.constant 0 : index
    %118 = vector.load %arg11[%c336, %c0_127] : memref<432x384xf32, #tpu.memory_space<vmem>>, vector<48x384xf32>
    tpu.vector_store %arg11[%c336, %c0_127], %117 {strides = array<i32>} : memref<432x384xf32, #tpu.memory_space<vmem>>, vector<48x384xf32>,
    %c0_128 = arith.constant 0 : index
    %c81_129 = arith.constant 81 : index
    %119 = vector.load %arg9[%c0_128, %c81_129] : memref<48x512xf32, #tpu.memory_space<vmem>>, vector<48x384xf32>
    %c384 = arith.constant 384 : index
    %c0_130 = arith.constant 0 : index
    %120 = vector.load %arg11[%c384, %c0_130] : memref<432x384xf32, #tpu.memory_space<vmem>>, vector<48x384xf32>
    tpu.vector_store %arg11[%c384, %c0_130], %119 {strides = array<i32>} : memref<432x384xf32, #tpu.memory_space<vmem>>, vector<48x384xf32>,
    %c0_131 = arith.constant 0 : index
    %c0_132 = arith.constant 0 : index
    %121 = vector.load %arg7[%c0_131, %c0_132] : memref<16x432xf32, #tpu.memory_space<vmem>>, vector<16x432xf32>
    %c0_133 = arith.constant 0 : index
    %c0_134 = arith.constant 0 : index
    %122 = vector.load %arg11[%c0_133, %c0_134] : memref<432x384xf32, #tpu.memory_space<vmem>>, vector<432x384xf32>
    %cst_135 = arith.constant dense<0.000000e+00> : vector<16x384xf32>
    %123 = tpu.matmul %121, %122, %cst_135 {dimension_numbers = #tpu.dot_dimension_numbers<[1], [0], [0], [1], [0, 0, 1, 1], [], []>} : vector<16x432xf32>, vector<432x384xf32>, vector<16x384xf32> -> vector<16x384xf32>
    %c0_136 = arith.constant 0 : index
    %c7 = arith.constant 7 : index
    %124 = vector.load %arg4[%c0_136, %c7] : memref<16x13xf32, #tpu.memory_space<vmem>>, vector<16x1xf32>
    %125 = vector.broadcast %124 : vector<16x1xf32> to vector<16x384xf32>
    %126 = arith.mulf %123, %125 : vector<16x384xf32>
    %c0_137 = arith.constant 0 : index
    %c8 = arith.constant 8 : index
    %127 = vector.load %arg4[%c0_137, %c8] : memref<16x13xf32, #tpu.memory_space<vmem>>, vector<16x1xf32>
    %128 = vector.broadcast %127 : vector<16x1xf32> to vector<16x384xf32>
    %129 = arith.addf %126, %128 : vector<16x384xf32>
    %cst_138 = arith.constant 0.000000e+00 : f32
    %130 = vector.broadcast %cst_138 : f32 to vector<16x384xf32>
    %131 = arith.maximumf %129, %130 : vector<16x384xf32>
    %132 = vector.extract_strided_slice %29 {offsets = [0, 0], sizes = [4, 192], strides = [1, 1]} : vector<4x384xf32> to vector<4x192xf32>
    %133 = vector.extract_strided_slice %37 {offsets = [0, 0], sizes = [4, 64], strides = [1, 1]} : vector<4x128xf32> to vector<4x64xf32>
    %134 = vector.extract_strided_slice %33 {offsets = [0, 0], sizes = [16, 64], strides = [1, 1]} : vector<16x128xf32> to vector<16x64xf32>
    %cst_139 = arith.constant dense<0.000000e+00> : vector<64x192xf32>
    %135 = tpu.matmul %133, %132, %cst_139 {dimension_numbers = #tpu.dot_dimension_numbers<[0], [0], [1], [1], [0, 1, 1, 1], [], []>} : vector<4x64xf32>, vector<4x192xf32>, vector<64x192xf32> -> vector<64x192xf32>
    %cst_140 = arith.constant dense<0xFF800000> : vector<192xf32>
    %136 = vector.multi_reduction <maximumf>, %135, %cst_140 [0] : vector<64x192xf32> to vector<192xf32>
    %137 = vector.shape_cast %136 : vector<192xf32> to vector<1x192xf32>
    %138 = vector.broadcast %137 : vector<1x192xf32> to vector<64x192xf32>
    %139 = arith.subf %135, %138 : vector<64x192xf32>
    %140 = math.exp %139 : vector<64x192xf32>
    %cst_141 = arith.constant dense<0.000000e+00> : vector<192xf32>
    %141 = vector.multi_reduction <add>, %140, %cst_141 [0] : vector<64x192xf32> to vector<192xf32>
    %142 = vector.shape_cast %141 : vector<192xf32> to vector<1x192xf32>
    %143 = tpu.reciprocal %142 : vector<1x192xf32> -> vector<1x192xf32>
    %cst_142 = arith.constant dense<0.000000e+00> : vector<16x192xf32>
    %144 = tpu.matmul %134, %140, %cst_142 {dimension_numbers = #tpu.dot_dimension_numbers<[1], [0], [0], [1], [0, 0, 1, 1], [], []>} : vector<16x64xf32>, vector<64x192xf32>, vector<16x192xf32> -> vector<16x192xf32>
    %145 = vector.broadcast %143 : vector<1x192xf32> to vector<16x192xf32>
    %146 = arith.mulf %144, %145 : vector<16x192xf32>
    %c0_143 = arith.constant 0 : index
    %c64_144 = arith.constant 64 : index
    %147 = vector.load %arg10[%c0_143, %c64_144] : memref<16x512xf32, #tpu.memory_space<vmem>>, vector<16x192xf32>
    tpu.vector_store %arg10[%c0_143, %c64_144], %146 {strides = array<i32>} : memref<16x512xf32, #tpu.memory_space<vmem>>, vector<16x192xf32>,
    %148 = vector.extract_strided_slice %29 {offsets = [0, 192], sizes = [4, 192], strides = [1, 1]} : vector<4x384xf32> to vector<4x192xf32>
    %149 = vector.extract_strided_slice %37 {offsets = [0, 64], sizes = [4, 64], strides = [1, 1]} : vector<4x128xf32> to vector<4x64xf32>
    %150 = vector.extract_strided_slice %33 {offsets = [0, 64], sizes = [16, 64], strides = [1, 1]} : vector<16x128xf32> to vector<16x64xf32>
    %cst_145 = arith.constant dense<0.000000e+00> : vector<64x192xf32>
    %151 = tpu.matmul %149, %148, %cst_145 {dimension_numbers = #tpu.dot_dimension_numbers<[0], [0], [1], [1], [0, 1, 1, 1], [], []>} : vector<4x64xf32>, vector<4x192xf32>, vector<64x192xf32> -> vector<64x192xf32>
    %cst_146 = arith.constant dense<0xFF800000> : vector<192xf32>
    %152 = vector.multi_reduction <maximumf>, %151, %cst_146 [0] : vector<64x192xf32> to vector<192xf32>
    %153 = vector.shape_cast %152 : vector<192xf32> to vector<1x192xf32>
    %154 = vector.broadcast %153 : vector<1x192xf32> to vector<64x192xf32>
    %155 = arith.subf %151, %154 : vector<64x192xf32>
    %156 = math.exp %155 : vector<64x192xf32>
    %cst_147 = arith.constant dense<0.000000e+00> : vector<192xf32>
    %157 = vector.multi_reduction <add>, %156, %cst_147 [0] : vector<64x192xf32> to vector<192xf32>
    %158 = vector.shape_cast %157 : vector<192xf32> to vector<1x192xf32>
    %159 = tpu.reciprocal %158 : vector<1x192xf32> -> vector<1x192xf32>
    %cst_148 = arith.constant dense<0.000000e+00> : vector<16x192xf32>
    %160 = tpu.matmul %150, %156, %cst_148 {dimension_numbers = #tpu.dot_dimension_numbers<[1], [0], [0], [1], [0, 0, 1, 1], [], []>} : vector<16x64xf32>, vector<64x192xf32>, vector<16x192xf32> -> vector<16x192xf32>
    %161 = vector.broadcast %159 : vector<1x192xf32> to vector<16x192xf32>
    %162 = arith.mulf %160, %161 : vector<16x192xf32>
    %c0_149 = arith.constant 0 : index
    %c256 = arith.constant 256 : index
    %163 = vector.load %arg10[%c0_149, %c256] : memref<16x512xf32, #tpu.memory_space<vmem>>, vector<16x192xf32>
    tpu.vector_store %arg10[%c0_149, %c256], %162 {strides = array<i32>} : memref<16x512xf32, #tpu.memory_space<vmem>>, vector<16x192xf32>,
    %c0_150 = arith.constant 0 : index
    %c64_151 = arith.constant 64 : index
    %164 = vector.load %arg10[%c0_150, %c64_151] : memref<16x512xf32, #tpu.memory_space<vmem>>, vector<16x384xf32>
    %165 = arith.addf %164, %131 : vector<16x384xf32>
    %166 = vector.broadcast %8 : vector<1x384xf32> to vector<16x384xf32>
    %167 = arith.mulf %165, %166 : vector<16x384xf32>
    %c0_152 = arith.constant 0 : index
    %c64_153 = arith.constant 64 : index
    %168 = vector.load %arg10[%c0_152, %c64_153] : memref<16x512xf32, #tpu.memory_space<vmem>>, vector<16x384xf32>
    tpu.vector_store %arg10[%c0_152, %c64_153], %167 {strides = array<i32>} : memref<16x512xf32, #tpu.memory_space<vmem>>, vector<16x384xf32>,
    %c0_154 = arith.constant 0 : index
    %c47_155 = arith.constant 47 : index
    %169 = vector.load %arg10[%c0_154, %c47_155] : memref<16x512xf32, #tpu.memory_space<vmem>>, vector<16x384xf32>
    %c0_156 = arith.constant 0 : index
    %c0_157 = arith.constant 0 : index
    %170 = vector.load %arg11[%c0_156, %c0_157] : memref<432x384xf32, #tpu.memory_space<vmem>>, vector<16x384xf32>
    tpu.vector_store %arg11[%c0_156, %c0_157], %169 {strides = array<i32>} : memref<432x384xf32, #tpu.memory_space<vmem>>, vector<16x384xf32>,
    %c0_158 = arith.constant 0 : index
    %c48_159 = arith.constant 48 : index
    %171 = vector.load %arg10[%c0_158, %c48_159] : memref<16x512xf32, #tpu.memory_space<vmem>>, vector<16x384xf32>
    %c16_160 = arith.constant 16 : index
    %c0_161 = arith.constant 0 : index
    %172 = vector.load %arg11[%c16_160, %c0_161] : memref<432x384xf32, #tpu.memory_space<vmem>>, vector<16x384xf32>
    tpu.vector_store %arg11[%c16_160, %c0_161], %171 {strides = array<i32>} : memref<432x384xf32, #tpu.memory_space<vmem>>, vector<16x384xf32>,
    %c0_162 = arith.constant 0 : index
    %c49_163 = arith.constant 49 : index
    %173 = vector.load %arg10[%c0_162, %c49_163] : memref<16x512xf32, #tpu.memory_space<vmem>>, vector<16x384xf32>
    %c32_164 = arith.constant 32 : index
    %c0_165 = arith.constant 0 : index
    %174 = vector.load %arg11[%c32_164, %c0_165] : memref<432x384xf32, #tpu.memory_space<vmem>>, vector<16x384xf32>
    tpu.vector_store %arg11[%c32_164, %c0_165], %173 {strides = array<i32>} : memref<432x384xf32, #tpu.memory_space<vmem>>, vector<16x384xf32>,
    %c0_166 = arith.constant 0 : index
    %c63_167 = arith.constant 63 : index
    %175 = vector.load %arg10[%c0_166, %c63_167] : memref<16x512xf32, #tpu.memory_space<vmem>>, vector<16x384xf32>
    %c48_168 = arith.constant 48 : index
    %c0_169 = arith.constant 0 : index
    %176 = vector.load %arg11[%c48_168, %c0_169] : memref<432x384xf32, #tpu.memory_space<vmem>>, vector<16x384xf32>
    tpu.vector_store %arg11[%c48_168, %c0_169], %175 {strides = array<i32>} : memref<432x384xf32, #tpu.memory_space<vmem>>, vector<16x384xf32>,
    %c0_170 = arith.constant 0 : index
    %c64_171 = arith.constant 64 : index
    %177 = vector.load %arg10[%c0_170, %c64_171] : memref<16x512xf32, #tpu.memory_space<vmem>>, vector<16x384xf32>
    %c64_172 = arith.constant 64 : index
    %c0_173 = arith.constant 0 : index
    %178 = vector.load %arg11[%c64_172, %c0_173] : memref<432x384xf32, #tpu.memory_space<vmem>>, vector<16x384xf32>
    tpu.vector_store %arg11[%c64_172, %c0_173], %177 {strides = array<i32>} : memref<432x384xf32, #tpu.memory_space<vmem>>, vector<16x384xf32>,
    %c0_174 = arith.constant 0 : index
    %c65_175 = arith.constant 65 : index
    %179 = vector.load %arg10[%c0_174, %c65_175] : memref<16x512xf32, #tpu.memory_space<vmem>>, vector<16x384xf32>
    %c80_176 = arith.constant 80 : index
    %c0_177 = arith.constant 0 : index
    %180 = vector.load %arg11[%c80_176, %c0_177] : memref<432x384xf32, #tpu.memory_space<vmem>>, vector<16x384xf32>
    tpu.vector_store %arg11[%c80_176, %c0_177], %179 {strides = array<i32>} : memref<432x384xf32, #tpu.memory_space<vmem>>, vector<16x384xf32>,
    %c0_178 = arith.constant 0 : index
    %c79_179 = arith.constant 79 : index
    %181 = vector.load %arg10[%c0_178, %c79_179] : memref<16x512xf32, #tpu.memory_space<vmem>>, vector<16x384xf32>
    %c96_180 = arith.constant 96 : index
    %c0_181 = arith.constant 0 : index
    %182 = vector.load %arg11[%c96_180, %c0_181] : memref<432x384xf32, #tpu.memory_space<vmem>>, vector<16x384xf32>
    tpu.vector_store %arg11[%c96_180, %c0_181], %181 {strides = array<i32>} : memref<432x384xf32, #tpu.memory_space<vmem>>, vector<16x384xf32>,
    %c0_182 = arith.constant 0 : index
    %c80_183 = arith.constant 80 : index
    %183 = vector.load %arg10[%c0_182, %c80_183] : memref<16x512xf32, #tpu.memory_space<vmem>>, vector<16x384xf32>
    %c112_184 = arith.constant 112 : index
    %c0_185 = arith.constant 0 : index
    %184 = vector.load %arg11[%c112_184, %c0_185] : memref<432x384xf32, #tpu.memory_space<vmem>>, vector<16x384xf32>
    tpu.vector_store %arg11[%c112_184, %c0_185], %183 {strides = array<i32>} : memref<432x384xf32, #tpu.memory_space<vmem>>, vector<16x384xf32>,
    %c0_186 = arith.constant 0 : index
    %c81_187 = arith.constant 81 : index
    %185 = vector.load %arg10[%c0_186, %c81_187] : memref<16x512xf32, #tpu.memory_space<vmem>>, vector<16x384xf32>
    %c128_188 = arith.constant 128 : index
    %c0_189 = arith.constant 0 : index
    %186 = vector.load %arg11[%c128_188, %c0_189] : memref<432x384xf32, #tpu.memory_space<vmem>>, vector<16x384xf32>
    tpu.vector_store %arg11[%c128_188, %c0_189], %185 {strides = array<i32>} : memref<432x384xf32, #tpu.memory_space<vmem>>, vector<16x384xf32>,
    %c32_190 = arith.constant 32 : index
    %c0_191 = arith.constant 0 : index
    %187 = vector.load %arg6[%c32_190, %c0_191] : memref<48x144xf32, #tpu.memory_space<vmem>>, vector<16x144xf32>
    %c0_192 = arith.constant 0 : index
    %c0_193 = arith.constant 0 : index
    %188 = vector.load %arg11[%c0_192, %c0_193] : memref<432x384xf32, #tpu.memory_space<vmem>>, vector<144x384xf32>
    %cst_194 = arith.constant dense<0.000000e+00> : vector<16x384xf32>
    %189 = tpu.matmul %187, %188, %cst_194 {dimension_numbers = #tpu.dot_dimension_numbers<[1], [0], [0], [1], [0, 0, 1, 1], [], []>} : vector<16x144xf32>, vector<144x384xf32>, vector<16x384xf32> -> vector<16x384xf32>
    %c0_195 = arith.constant 0 : index
    %c9 = arith.constant 9 : index
    %190 = vector.load %arg4[%c0_195, %c9] : memref<16x13xf32, #tpu.memory_space<vmem>>, vector<16x1xf32>
    %191 = vector.broadcast %190 : vector<16x1xf32> to vector<16x384xf32>
    %192 = arith.mulf %189, %191 : vector<16x384xf32>
    %c0_196 = arith.constant 0 : index
    %c10 = arith.constant 10 : index
    %193 = vector.load %arg4[%c0_196, %c10] : memref<16x13xf32, #tpu.memory_space<vmem>>, vector<16x1xf32>
    %194 = vector.broadcast %193 : vector<16x1xf32> to vector<16x384xf32>
    %195 = arith.addf %192, %194 : vector<16x384xf32>
    %196 = arith.addf %9, %195 : vector<16x384xf32>
    %cst_197 = arith.constant 0.000000e+00 : f32
    %197 = vector.broadcast %cst_197 : f32 to vector<16x384xf32>
    %198 = arith.maximumf %196, %197 : vector<16x384xf32>
    %c0_198 = arith.constant 0 : index
    %c0_199 = arith.constant 0 : index
    %199 = vector.load %arg8[%c0_198, %c0_199] : memref<16x384xf32, #tpu.memory_space<vmem>>, vector<16x384xf32>
    tpu.vector_store %arg8[%c0_198, %c0_199], %198 {strides = array<i32>} : memref<16x384xf32, #tpu.memory_space<vmem>>, vector<16x384xf32>,
    return
  }
  func.func @transform_0(%arg0: i32) -> (i32, i32) {
    %c0_i32 = arith.constant 0 : i32
    %c0_i32_0 = arith.constant 0 : i32
    %c0_i32_1 = arith.constant 0 : i32
    return %c0_i32, %c0_i32_0 : i32, i32
  }
  func.func @transform_1(%arg0: i32) -> (i32, i32) {
    %c0_i32 = arith.constant 0 : i32
    %c0_i32_0 = arith.constant 0 : i32
    %c0_i32_1 = arith.constant 0 : i32
    return %c0_i32, %c0_i32_0 : i32, i32
  }
  func.func @transform_2(%arg0: i32) -> (i32, i32) {
    %c0_i32 = arith.constant 0 : i32
    %c0_i32_0 = arith.constant 0 : i32
    %c0_i32_1 = arith.constant 0 : i32
    return %c0_i32, %c0_i32_0 : i32, i32
  }
  func.func @transform_3(%arg0: i32) -> (i32, i32) {
    %c0_i32 = arith.constant 0 : i32
    %c0_i32_0 = arith.constant 0 : i32
    %c0_i32_1 = arith.constant 0 : i32
    return %c0_i32, %c0_i32_0 : i32, i32
  }
  func.func @transform_4(%arg0: i32) -> (i32, i32) {
    %c0_i32 = arith.constant 0 : i32
    %c0_i32_0 = arith.constant 0 : i32
    %c0_i32_1 = arith.constant 0 : i32
    return %c0_i32, %c0_i32_0 : i32, i32
  }
  func.func @transform_5(%arg0: i32) -> (i32, i32) {
    %c0_i32 = arith.constant 0 : i32
    %c0_i32_0 = arith.constant 0 : i32
    %c0_i32_1 = arith.constant 0 : i32
    return %c0_i32, %c0_i32_0 : i32, i32
  }
  func.func @transform_6(%arg0: i32) -> (i32, i32) {
    %c0_i32 = arith.constant 0 : i32
    %c0_i32_0 = arith.constant 0 : i32
    %c0_i32_1 = arith.constant 0 : i32
    return %c0_i32, %c0_i32_0 : i32, i32
  }
  func.func @transform_7(%arg0: i32) -> (i32, i32) {
    %c0_i32 = arith.constant 0 : i32
    %c0_i32_0 = arith.constant 0 : i32
    %c0_i32_1 = arith.constant 0 : i32
    return %c0_i32, %c0_i32_0 : i32, i32
  }
}

</mosaic_0001>

<llo_original>
// kernel: tpu_custom_call.1
$region0: #{tpu_custom_call.1}
  #allocation0 [shape = 'u32[]', space=smem, size = 0x4, offset = 0x4, fixed_abs, tag = 'smem constant byte address 0x4 - core index']
  #allocation1 [shape = 'u32[144,128]{1,0:T(1,128)}', space=vmem, size = 0x12000, scoped, tag = 'internal scratch']
  #allocation2 [shape = 'f32[48,512]{1,0:T(8,128)}', space=vmem, size = 0x18000, scoped, tag = 'scratch operand']
  #allocation3 [shape = 'f32[16,512]{1,0:T(8,128)}', space=vmem, size = 0x8000, scoped, tag = 'scratch operand']
  #allocation4 [shape = 'f32[432,384]{1,0:T(8,128)}', space=vmem, size = 0xa2000, scoped, tag = 'scratch operand']
  %s0 = inlined_call_operand.hbm [shape: f32[16,512], index: 0, kind: input, shape index: {}]
  %s1 = inlined_call_operand.hbm [shape: f32[16,128], index: 1, kind: input, shape index: {}]
  %s2 = inlined_call_operand.vmem [shape: f32[1,384], index: 2, kind: input, shape index: {}]
  %s3 = inlined_call_operand.hbm [shape: f32[16,13], index: 3, kind: input, shape index: {}]
  %s4 = inlined_call_operand.vmem [shape: f32[40,16], index: 4, kind: input, shape index: {}]
  %s5 = inlined_call_operand.hbm [shape: f32[48,144], index: 5, kind: input, shape index: {}]
  %s6 = inlined_call_operand.vmem [shape: f32[16,432], index: 6, kind: input, shape index: {}]
  %s7 = inlined_call_operand.hbm [shape: f32[16,384], index: 7, kind: output, shape index: {}]
  %s8 = sld [smem:[#allocation0]]
  $region54: #{tpu_custom_call.1} parent=0
    _
  %s10 = ssub.s32 1, %s8
  %s11 = scalar_select 0, %s10, %s8
  $region1: #{tpu_custom_call.1} parent=0
    #allocation5 [shape = 'u8[32768]{0}', space=vmem, size = 0x8000, scoped, tag = 'input window, operand 0, single buffered']
    #allocation6 [shape = 's32[1]{0}', space=sflag, size = 0x4, scoped, tag = 'scoped memory for tpu_custom_call.1']
    #allocation7 [shape = 's32[1]{0}', space=sflag, size = 0x4, scoped, tag = 'scoped memory for tpu_custom_call.1']
    #allocation8 [shape = 'u8[8192]{0}', space=vmem, size = 0x2000, scoped, tag = 'input window, operand 1, single buffered']
    #allocation9 [shape = 's32[1]{0}', space=sflag, size = 0x4, scoped, tag = 'scoped memory for tpu_custom_call.1']
    #allocation10 [shape = 'u8[8192]{0}', space=vmem, size = 0x2000, scoped, tag = 'input window, operand 3, single buffered']
    #allocation11 [shape = 'u8[49152]{0}', space=vmem, size = 0xc000, scoped, tag = 'input window, operand 5, single buffered']
    #allocation12 [shape = 's32[1]{0}', space=sflag, size = 0x4, scoped, tag = 'scoped memory for tpu_custom_call.1']
    #allocation13 [shape = 'u8[24576]{0}', space=vmem, size = 0x6000, scoped, tag = 'output window, operand 0, single buffered']
    %12 = vsyncpa [#allocation6], 0
    %13 = vsyncpa [#allocation9], 0
    %14 = vsyncpa [#allocation12], 0
    %15 = vsyncpa [#allocation7], 0
    // Predicated region
    $region2: #{tpu_custom_call.1} parent=1 // pred_check
      _
    $region3: #{tpu_custom_call.1} parent=1 // pred_check_branch
      %17 = sbr.rel (0) target = $region5
    $region4: #{tpu_custom_call.1} parent=1 // pred_region
      %s19 = ssub.s32 1024, 1024
      %20 = vsyncadd [#allocation6], %s19
      %s21 = sshll.u32 [#allocation5], 4
      %s22 = int_to_ptr.vmem [resolvable:$true] %s21
      %27 = dma.hbm_to_vmem [thread:$0]  %s0, 1024, %s22, [#allocation6], 512, 512, 32
    $region5: #{tpu_custom_call.1} parent=1 // pred_fallthru
      _
    // Predicated region
    $region6: #{tpu_custom_call.1} parent=1 // pred_check
      _
    $region7: #{tpu_custom_call.1} parent=1 // pred_check_branch
      %29 = sbr.rel (0) target = $region9
    $region8: #{tpu_custom_call.1} parent=1 // pred_region
      %s31 = ssub.s32 256, 256
      %32 = vsyncadd [#allocation9], %s31
      %s33 = sshll.u32 [#allocation8], 4
      %s34 = int_to_ptr.vmem [resolvable:$true] %s33
      %39 = dma.hbm_to_vmem [thread:$0]  %s1, 256, %s34, [#allocation9], 128, 128, 8
    $region9: #{tpu_custom_call.1} parent=1 // pred_fallthru
      _
    // Predicated region
    $region10: #{tpu_custom_call.1} parent=1 // pred_check
      _
    $region11: #{tpu_custom_call.1} parent=1 // pred_check_branch
      %41 = sbr.rel (0) target = $region13
    $region12: #{tpu_custom_call.1} parent=1 // pred_region
      _
    $region13: #{tpu_custom_call.1} parent=1 // pred_fallthru
      _
    // Predicated region
    $region14: #{tpu_custom_call.1} parent=1 // pred_check
      _
    $region15: #{tpu_custom_call.1} parent=1 // pred_check_branch
      %43 = sbr.rel (0) target = $region17
    $region16: #{tpu_custom_call.1} parent=1 // pred_region
      %s45 = ssub.s32 256, 256
      %46 = vsyncadd [#allocation9], %s45
      %s47 = sshll.u32 [#allocation10], 4
      %s48 = int_to_ptr.vmem [resolvable:$true] %s47
      %53 = dma.hbm_to_vmem [thread:$0]  %s3, 256, %s48, [#allocation9], 128, 128, 8
    $region17: #{tpu_custom_call.1} parent=1 // pred_fallthru
      _
    // Predicated region
    $region18: #{tpu_custom_call.1} parent=1 // pred_check
      _
    $region19: #{tpu_custom_call.1} parent=1 // pred_check_branch
      %55 = sbr.rel (0) target = $region21
    $region20: #{tpu_custom_call.1} parent=1 // pred_region
      _
    $region21: #{tpu_custom_call.1} parent=1 // pred_fallthru
      _
    // Predicated region
    $region22: #{tpu_custom_call.1} parent=1 // pred_check
      _
    $region23: #{tpu_custom_call.1} parent=1 // pred_check_branch
      %57 = sbr.rel (0) target = $region25
    $region24: #{tpu_custom_call.1} parent=1 // pred_region
      %s59 = ssub.s32 1536, 1536
      %60 = vsyncadd [#allocation12], %s59
      %s61 = sshll.u32 [#allocation11], 4
      %s62 = int_to_ptr.vmem [resolvable:$true] %s61
      %67 = dma.hbm_to_vmem [thread:$0]  %s5, 1536, %s62, [#allocation12], 256, 256, 16
    $region25: #{tpu_custom_call.1} parent=1 // pred_fallthru
      _
    // Predicated region
    $region26: #{tpu_custom_call.1} parent=1 // pred_check
      _
    $region27: #{tpu_custom_call.1} parent=1 // pred_check_branch
      %69 = sbr.rel (0) target = $region29
    $region28: #{tpu_custom_call.1} parent=1 // pred_region
      _
    $region29: #{tpu_custom_call.1} parent=1 // pred_fallthru
      _
    // Predicated region
    $region30: #{tpu_custom_call.1} parent=1 // pred_check
      _
    $region31: #{tpu_custom_call.1} parent=1 // pred_check_branch
      %71 = sbr.rel (0) target = $region33
    $region32: #{tpu_custom_call.1} parent=1 // pred_region
      %72 = dma.done [#allocation6], 1024
    $region33: #{tpu_custom_call.1} parent=1 // pred_fallthru
      _
    // Predicated region
    $region34: #{tpu_custom_call.1} parent=1 // pred_check
      _
    $region35: #{tpu_custom_call.1} parent=1 // pred_check_branch
      %74 = sbr.rel (0) target = $region37
    $region36: #{tpu_custom_call.1} parent=1 // pred_region
      %75 = dma.done [#allocation9], 256
    $region37: #{tpu_custom_call.1} parent=1 // pred_fallthru
      _
    // Predicated region
    $region38: #{tpu_custom_call.1} parent=1 // pred_check
      _
    $region39: #{tpu_custom_call.1} parent=1 // pred_check_branch
      %77 = sbr.rel (0) target = $region41
    $region40: #{tpu_custom_call.1} parent=1 // pred_region
      %78 = dma.done [#allocation9], 256
    $region41: #{tpu_custom_call.1} parent=1 // pred_fallthru
      _
    // Predicated region
    $region42: #{tpu_custom_call.1} parent=1 // pred_check
      _
    $region43: #{tpu_custom_call.1} parent=1 // pred_check_branch
      %80 = sbr.rel (0) target = $region45
    $region44: #{tpu_custom_call.1} parent=1 // pred_region
      %81 = dma.done [#allocation12], 1536
    $region45: #{tpu_custom_call.1} parent=1 // pred_fallthru
      _
    %vm82 = vcmask 523264
    %83 = vst.msk [vmem:[#allocation2] sm:$0xff] %vm82, 0.0
    %84 = vst.msk [vmem:[#allocation2 + $0x20] sm:$0xff] %vm82, 0.0
    %85 = vst.msk [vmem:[#allocation2 + $0x40] sm:$0xff] %vm82, 0.0
    %86 = vst.msk [vmem:[#allocation2 + $0x60] sm:$0xff] %vm82, 0.0
    %87 = vst.msk [vmem:[#allocation2 + $0x80] sm:$0xff] %vm82, 0.0
    %88 = vst.msk [vmem:[#allocation2 + $0xa0] sm:$0xff] %vm82, 0.0
    %vm89 = vcmask 1048064
    %90 = vst.msk [vmem:[#allocation2 + $0x18] sm:$0xff] %vm89, 0.0
    %91 = vst.msk [vmem:[#allocation2 + $0x38] sm:$0xff] %vm89, 0.0
    %92 = vst.msk [vmem:[#allocation2 + $0x58] sm:$0xff] %vm89, 0.0
    %93 = vst.msk [vmem:[#allocation2 + $0x78] sm:$0xff] %vm89, 0.0
    %94 = vst.msk [vmem:[#allocation2 + $0x98] sm:$0xff] %vm89, 0.0
    %95 = vst.msk [vmem:[#allocation2 + $0xb8] sm:$0xff] %vm89, 0.0
    %96 = vst.msk [vmem:[#allocation3] sm:$0xff] %vm82, 0.0
    %97 = vst.msk [vmem:[#allocation3 + $0x20] sm:$0xff] %vm82, 0.0
    %98 = vst.msk [vmem:[#allocation3 + $0x18] sm:$0xff] %vm89, 0.0
    %99 = vst.msk [vmem:[#allocation3 + $0x38] sm:$0xff] %vm89, 0.0
    %v100 = vld [vmem:[%s2] sm:$0x7]
    %v101 = vld [vmem:[#allocation5] sm:$0xff]
    %v102 = vld [vmem:[#allocation5 + $0x8] sm:$0xff]
    %v103 = vld [vmem:[#allocation5 + $0x10] sm:$0xff]
    %v104 = vld [vmem:[#allocation5 + $0x18] sm:$0xff]
    %v105 = vld [vmem:[#allocation5 + $0x20] sm:$0xff]
    %v106 = vld [vmem:[#allocation5 + $0x28] sm:$0xff]
    %v107 = vld [vmem:[#allocation5 + $0x30] sm:$0xff]
    %v108 = vld [vmem:[#allocation5 + $0x38] sm:$0xff]
    %v109 = vld [vmem:[#allocation8] sm:$0xff]
    %v110 = vld [vmem:[#allocation8 + $0x8] sm:$0xff]
    %v111 = vld [vmem:[%s4] sm:$0xff]
    %v112 = vld [vmem:[%s4 + $0x8] sm:$0xff]
    %v113 = vld [vmem:[%s4 + $0x10] sm:$0xf]
    %122 = vrot.lane.b32.xlu0 %v101, 64
    %v123 = vpop.permute.xlu0 %122
    %124 = vrot.lane.b32.xlu0 %v102, 64
    %v125 = vpop.permute.xlu0 %124
    %126 = vrot.lane.b32.xlu0 %v103, 64
    %v127 = vpop.permute.xlu0 %126
    %128 = vrot.lane.b32.xlu0 %v104, 64
    %v129 = vpop.permute.xlu0 %128
    %130 = vrot.lane.b32.xlu0 %v105, 64
    %v131 = vpop.permute.xlu0 %130
    %132 = vrot.lane.b32.xlu0 %v106, 64
    %v133 = vpop.permute.xlu0 %132
    %134 = vrot.lane.b32.xlu0 %v107, 64
    %v135 = vpop.permute.xlu0 %134
    %136 = vrot.lane.b32.xlu0 %v108, 64
    %v137 = vpop.permute.xlu0 %136
    %v138 = vsel %vm82, %v123, %v125
    %v139 = vsel %vm82, %v125, %v127
    %v140 = vsel %vm82, %v127, %v129
    %v141 = vsel %vm82, %v131, %v133
    %v142 = vsel %vm82, %v133, %v135
    %v143 = vsel %vm82, %v135, %v137
    %vm150 = vcmask 130048
    %v152 = vsel %vm150, %v111, 0
    %v155 = vsel %vm150, %v112, 0
    %v158 = vsel %vm150, %v113, 0
    %160 = vmatprep.subr.mxu0 %v139
    %161 = vmatpush1.msra.mxu0 %v138
    %162 = vmatprep.subr.mxu0 %v142
    %163 = vmatpush1.msra.mxu0 %v141
    %164 = vmatprep.subr.mxu0 0.0
    %165 = vmatpush1.msra.mxu0 0.0
    %166 = vmatprep.subr.mxu0 0.0
    %167 = vmatpush1.msra.mxu0 0.0
    %168 = vmatprep.subr.mxu0 0.0
    %169 = vmatpush1.msra.mxu0 0.0
    %170 = vmatprep.subr.mxu0 0.0
    %171 = vmatpush1.msra.mxu0 0.0
    %172 = vmatprep.subr.mxu0 0.0
    %173 = vmatpush1.msra.mxu0 0.0
    %174 = vmatprep.subr.mxu0 0.0
    %175 = vmatpush1.msra.mxu0 0.0
    %176 = vmatprep.subr.mxu0 0.0
    %177 = vmatpush1.msra.mxu0 0.0
    %178 = vmatprep.subr.mxu0 0.0
    %179 = vmatpush1.msra.mxu0 0.0
    %180 = vmatprep.subr.mxu0 0.0
    %181 = vmatpush1.msra.mxu0 0.0
    %182 = vmatprep.subr.mxu0 0.0
    %183 = vmatpush1.msra.mxu0 0.0
    %184 = vmatprep.subr.mxu0 0.0
    %185 = vmatpush1.msra.mxu0 0.0
    %186 = vmatprep.subr.mxu0 0.0
    %187 = vmatpush1.msra.mxu0 0.0
    %188 = vmatprep.subr.mxu0 0.0
    %189 = vmatpush1.msra.mxu0 0.0
    %190 = vmatprep.subr.mxu0 0.0
    %191 = vmatpush1.msra.mxu0 0.0
    %192 = vmatprep.subr.mxu0 0.0
    %193 = vmatpush1.msra.mxu0 0.0
    %194 = vmatprep.subr.mxu0 0.0
    %195 = vmatpush1.msra.mxu0 0.0
    %196 = vmatprep.subr.mxu0 0.0
    %197 = vmatpush1.msra.mxu0 0.0
    %198 = vmatprep.subr.mxu0 0.0
    %199 = vmatpush1.msra.mxu0 0.0
    %200 = vmatprep.subr.mxu0 0.0
    %201 = vmatpush1.msra.mxu0 0.0
    %202 = vmatprep.subr.mxu0 0.0
    %203 = vmatpush1.msra.mxu0 0.0
    %204 = vmatprep.subr.mxu0 0.0
    %205 = vmatpush1.msra.mxu0 0.0
    %206 = vmatprep.subr.mxu0 0.0
    %207 = vmatpush1.msra.mxu0 0.0
    %208 = vmatprep.subr.mxu0 0.0
    %209 = vmatpush1.msra.mxu0 0.0
    %210 = vmatprep.subr.mxu0 0.0
    %211 = vmatpush1.msra.mxu0 0.0
    %212 = vmatprep.subr.mxu0 0.0
    %213 = vmatpush1.msra.mxu0 0.0
    %214 = vmatprep.subr.mxu0 0.0
    %215 = vmatpush1.msra.mxu0 0.0
    %216 = vmatprep.subr.mxu0 0.0
    %217 = vmatpush1.msra.mxu0 0.0
    %218 = vmatprep.subr.mxu0 0.0
    %219 = vmatpush1.msra.mxu0 0.0
    %220 = vmatprep.subr.mxu0 0.0
    %221 = vmatpush1.msra.mxu0 0.0
    %222 = vmatprep.subr.mxu0 0.0
    %223 = vmatpush1.msra.mxu0 0.0
    %224 = vmatprep.mubr.f32.mxu0 0.0
    %225 = vmatmul.mubr.f32.gmra.mrb[0].mxu0 %v152
    %v226 = vpop.f32.mrb[0].mxu0
    %v227 = vadd.f32 0.0, %v226
    %v228 = vpop.f32.mrb[0].mxu0
    %v229 = vadd.f32 0.0, %v228
    %230 = vmatprep.mubr.f32.mxu0 0.0
    %231 = vmatmul.mubr.f32.gmra.mrb[0].mxu0 %v155
    %v232 = vpop.f32.mrb[0].mxu0
    %v233 = vadd.f32 0.0, %v232
    %v234 = vpop.f32.mrb[0].mxu0
    %v235 = vadd.f32 0.0, %v234
    %236 = vmatprep.mubr.f32.mxu0 0.0
    %237 = vmatmul.mubr.f32.gmra.mrb[0].mxu0 %v158
    %v238 = vpop.f32.mrb[0].mxu0
    %v239 = vadd.f32 0.0, %v238
    %v240 = vpop.f32.mrb[0].mxu0
    %v241 = vadd.f32 0.0, %v240
    %242 = vdwg.mxu0
    %243 = vmatprep.subr.mxu0 0.0
    %244 = vmatpush1.msra.mxu0 %v140
    %245 = vmatprep.subr.mxu0 0.0
    %246 = vmatpush1.msra.mxu0 %v143
    %247 = vmatprep.subr.mxu0 0.0
    %248 = vmatpush1.msra.mxu0 0.0
    %249 = vmatprep.subr.mxu0 0.0
    %250 = vmatpush1.msra.mxu0 0.0
    %251 = vmatprep.subr.mxu0 0.0
    %252 = vmatpush1.msra.mxu0 0.0
    %253 = vmatprep.subr.mxu0 0.0
    %254 = vmatpush1.msra.mxu0 0.0
    %255 = vmatprep.subr.mxu0 0.0
    %256 = vmatpush1.msra.mxu0 0.0
    %257 = vmatprep.subr.mxu0 0.0
    %258 = vmatpush1.msra.mxu0 0.0
    %259 = vmatprep.subr.mxu0 0.0
    %260 = vmatpush1.msra.mxu0 0.0
    %261 = vmatprep.subr.mxu0 0.0
    %262 = vmatpush1.msra.mxu0 0.0
    %263 = vmatprep.subr.mxu0 0.0
    %264 = vmatpush1.msra.mxu0 0.0
    %265 = vmatprep.subr.mxu0 0.0
    %266 = vmatpush1.msra.mxu0 0.0
    %267 = vmatprep.subr.mxu0 0.0
    %268 = vmatpush1.msra.mxu0 0.0
    %269 = vmatprep.subr.mxu0 0.0
    %270 = vmatpush1.msra.mxu0 0.0
    %271 = vmatprep.subr.mxu0 0.0
    %272 = vmatpush1.msra.mxu0 0.0
    %273 = vmatprep.subr.mxu0 0.0
    %274 = vmatpush1.msra.mxu0 0.0
    %275 = vmatprep.subr.mxu0 0.0
    %276 = vmatpush1.msra.mxu0 0.0
    %277 = vmatprep.subr.mxu0 0.0
    %278 = vmatpush1.msra.mxu0 0.0
    %279 = vmatprep.subr.mxu0 0.0
    %280 = vmatpush1.msra.mxu0 0.0
    %281 = vmatprep.subr.mxu0 0.0
    %282 = vmatpush1.msra.mxu0 0.0
    %283 = vmatprep.subr.mxu0 0.0
    %284 = vmatpush1.msra.mxu0 0.0
    %285 = vmatprep.subr.mxu0 0.0
    %286 = vmatpush1.msra.mxu0 0.0
    %287 = vmatprep.subr.mxu0 0.0
    %288 = vmatpush1.msra.mxu0 0.0
    %289 = vmatprep.subr.mxu0 0.0
    %290 = vmatpush1.msra.mxu0 0.0
    %291 = vmatprep.subr.mxu0 0.0
    %292 = vmatpush1.msra.mxu0 0.0
    %293 = vmatprep.subr.mxu0 0.0
    %294 = vmatpush1.msra.mxu0 0.0
    %295 = vmatprep.subr.mxu0 0.0
    %296 = vmatpush1.msra.mxu0 0.0
    %297 = vmatprep.subr.mxu0 0.0
    %298 = vmatpush1.msra.mxu0 0.0
    %299 = vmatprep.subr.mxu0 0.0
    %300 = vmatpush1.msra.mxu0 0.0
    %301 = vmatprep.subr.mxu0 0.0
    %302 = vmatpush1.msra.mxu0 0.0
    %303 = vmatprep.subr.mxu0 0.0
    %304 = vmatpush1.msra.mxu0 0.0
    %305 = vmatprep.subr.mxu0 0.0
    %306 = vmatpush1.msra.mxu0 0.0
    %307 = vmatprep.mubr.f32.mxu0 0.0
    %308 = vmatmul.mubr.f32.gmra.mrb[0].mxu0 %v152
    %v309 = vpop.f32.mrb[0].mxu0
    %v310 = vadd.f32 0.0, %v309
    %v311 = vpop.f32.mrb[0].mxu0
    %312 = vmatprep.mubr.f32.mxu0 0.0
    %313 = vmatmul.mubr.f32.gmra.mrb[0].mxu0 %v155
    %v314 = vpop.f32.mrb[0].mxu0
    %v315 = vadd.f32 0.0, %v314
    %v316 = vpop.f32.mrb[0].mxu0
    %317 = vmatprep.mubr.f32.mxu0 0.0
    %318 = vmatmul.mubr.f32.gmra.mrb[0].mxu0 %v158
    %v319 = vpop.f32.mrb[0].mxu0
    %v320 = vadd.f32 0.0, %v319
    %v321 = vpop.f32.mrb[0].mxu0
    %322 = vdwg.mxu0
    %v323 = vld [vmem:[%s4 + $0x14] sm:$0xff]
    %v324 = vld [vmem:[%s4 + $0x1c] sm:$0xff]
    %v325 = vld [vmem:[%s4 + $0x24] sm:$0xf]
    %v327 = vsel %vm150, %v323, 0
    %v330 = vsel %vm150, %v324, 0
    %v333 = vsel %vm150, %v325, 0
    %335 = vmatprep.subr.mxu0 0.0
    %336 = vmatpush1.msra.mxu0 %v109
    %337 = vmatprep.subr.mxu0 0.0
    %338 = vmatpush1.msra.mxu0 %v110
    %339 = vmatprep.subr.mxu0 0.0
    %340 = vmatpush1.msra.mxu0 0.0
    %341 = vmatprep.subr.mxu0 0.0
    %342 = vmatpush1.msra.mxu0 0.0
    %343 = vmatprep.subr.mxu0 0.0
    %344 = vmatpush1.msra.mxu0 0.0
    %345 = vmatprep.subr.mxu0 0.0
    %346 = vmatpush1.msra.mxu0 0.0
    %347 = vmatprep.subr.mxu0 0.0
    %348 = vmatpush1.msra.mxu0 0.0
    %349 = vmatprep.subr.mxu0 0.0
    %350 = vmatpush1.msra.mxu0 0.0
    %351 = vmatprep.subr.mxu0 0.0
    %352 = vmatpush1.msra.mxu0 0.0
    %353 = vmatprep.subr.mxu0 0.0
    %354 = vmatpush1.msra.mxu0 0.0
    %355 = vmatprep.subr.mxu0 0.0
    %356 = vmatpush1.msra.mxu0 0.0
    %357 = vmatprep.subr.mxu0 0.0
    %358 = vmatpush1.msra.mxu0 0.0
    %359 = vmatprep.subr.mxu0 0.0
    %360 = vmatpush1.msra.mxu0 0.0
    %361 = vmatprep.subr.mxu0 0.0
    %362 = vmatpush1.msra.mxu0 0.0
    %363 = vmatprep.subr.mxu0 0.0
    %364 = vmatpush1.msra.mxu0 0.0
    %365 = vmatprep.subr.mxu0 0.0
    %366 = vmatpush1.msra.mxu0 0.0
    %367 = vmatprep.subr.mxu0 0.0
    %368 = vmatpush1.msra.mxu0 0.0
    %369 = vmatprep.subr.mxu0 0.0
    %370 = vmatpush1.msra.mxu0 0.0
    %371 = vmatprep.subr.mxu0 0.0
    %372 = vmatpush1.msra.mxu0 0.0
    %373 = vmatprep.subr.mxu0 0.0
    %374 = vmatpush1.msra.mxu0 0.0
    %375 = vmatprep.subr.mxu0 0.0
    %376 = vmatpush1.msra.mxu0 0.0
    %377 = vmatprep.subr.mxu0 0.0
    %378 = vmatpush1.msra.mxu0 0.0
    %379 = vmatprep.subr.mxu0 0.0
    %380 = vmatpush1.msra.mxu0 0.0
    %381 = vmatprep.subr.mxu0 0.0
    %382 = vmatpush1.msra.mxu0 0.0
    %383 = vmatprep.subr.mxu0 0.0
    %384 = vmatpush1.msra.mxu0 0.0
    %385 = vmatprep.subr.mxu0 0.0
    %386 = vmatpush1.msra.mxu0 0.0
    %387 = vmatprep.subr.mxu0 0.0
    %388 = vmatpush1.msra.mxu0 0.0
    %389 = vmatprep.subr.mxu0 0.0
    %390 = vmatpush1.msra.mxu0 0.0
    %391 = vmatprep.subr.mxu0 0.0
    %392 = vmatpush1.msra.mxu0 0.0
    %393 = vmatprep.subr.mxu0 0.0
    %394 = vmatpush1.msra.mxu0 0.0
    %395 = vmatprep.subr.mxu0 0.0
    %396 = vmatpush1.msra.mxu0 0.0
    %397 = vmatprep.subr.mxu0 0.0
    %398 = vmatpush1.msra.mxu0 0.0
    %399 = vmatprep.mubr.f32.mxu0 0.0
    %400 = vmatmul.mubr.f32.gmra.mrb[0].mxu0 %v327
    %v401 = vpop.f32.mrb[0].mxu0
    %v402 = vadd.f32 0.0, %v401
    %v403 = vpop.f32.mrb[0].mxu0
    %404 = vmatprep.mubr.f32.mxu0 0.0
    %405 = vmatmul.mubr.f32.gmra.mrb[0].mxu0 %v330
    %v406 = vpop.f32.mrb[0].mxu0
    %v407 = vadd.f32 0.0, %v406
    %v408 = vpop.f32.mrb[0].mxu0
    %409 = vmatprep.mubr.f32.mxu0 0.0
    %410 = vmatmul.mubr.f32.gmra.mrb[0].mxu0 %v333
    %v411 = vpop.f32.mrb[0].mxu0
    %v412 = vadd.f32 0.0, %v411
    %v413 = vpop.f32.mrb[0].mxu0
    %414 = vdwg.mxu0
    %v415 = vld [vmem:[#allocation10] sm:$0xff]
    %v416 = vld [vmem:[#allocation10 + $0x8] sm:$0xff]
    %418 = vset.pattern.permute.xlu0 1
    %419 = vperm.xlu0 %418, %v415
    %v420 = vpop.permute.xlu0 %419
    %423 = vset.pattern.permute.xlu0 1
    %424 = vperm.xlu0 %423, %v416
    %v425 = vpop.permute.xlu0 %424
    %v427 = vmul.f32 %v227, %v420
    %v428 = vmul.f32 %v229, %v420
    %v429 = vmul.f32 %v310, %v420
    %v430 = vmul.f32 %v233, %v425
    %v431 = vmul.f32 %v235, %v425
    %v432 = vmul.f32 %v315, %v425
    %433 = vset.pattern.permute.xlu0 2
    %434 = vperm.xlu0 %433, %v415
    %v435 = vpop.permute.xlu0 %434
    %437 = vset.pattern.permute.xlu0 2
    %438 = vperm.xlu0 %437, %v416
    %v439 = vpop.permute.xlu0 %438
    %v441 = vadd.f32 %v427, %v435
    %v442 = vadd.f32 %v428, %v435
    %v443 = vadd.f32 %v429, %v435
    %v444 = vadd.f32 %v430, %v439
    %v445 = vadd.f32 %v431, %v439
    %v446 = vadd.f32 %v432, %v439
    %v447 = vmax.f32 %v441, 0.0
    %v448 = vmax.f32 %v442, 0.0
    %v449 = vmax.f32 %v443, 0.0
    %v450 = vmax.f32 %v444, 0.0
    %v451 = vmax.f32 %v445, 0.0
    %v452 = vmax.f32 %v446, 0.0
    %v454 = vlaneseq
    %v455 = vshrl.u32 %v454, 7
    %v456 = vsub.s32 0, %v455
    %v457 = vrot.slane %v100, %v456
    %v458 = vlaneseq
    %v459 = vshrl.u32 %v458, 7
    %v460 = vsub.s32 1, %v459
    %v461 = vrot.slane %v100, %v460
    %v462 = vlaneseq
    %v463 = vshrl.u32 %v462, 7
    %v464 = vsub.s32 2, %v463
    %v465 = vrot.slane %v100, %v464
    %v469 = vmul.f32 %v447, %v457
    %v470 = vmul.f32 %v448, %v461
    %v471 = vmul.f32 %v449, %v465
    %v472 = vmul.f32 %v450, %v457
    %v473 = vmul.f32 %v451, %v461
    %v474 = vmul.f32 %v452, %v465
    %v475 = vld [vmem:[#allocation10] sm:$0xf]
    %477 = vset.pattern.permute.xlu0 11
    %478 = vperm.xlu0 %477, %v475
    %v479 = vpop.permute.xlu0 %478
    %v481 = vadd.f32 %v239, %v479
    %v482 = vadd.f32 %v241, %v479
    %v483 = vadd.f32 %v320, %v479
    %484 = vset.pattern.permute.xlu0 0
    %485 = vperm.xlu0 %484, %v415
    %v486 = vpop.permute.xlu0 %485
    %488 = vset.pattern.permute.xlu0 0
    %489 = vperm.xlu0 %488, %v416
    %v490 = vpop.permute.xlu0 %489
    %v492 = vadd.f32 %v402, %v486
    %v493 = vadd.f32 %v407, %v490
    %494 = vset.pattern.permute.xlu0 12
    %495 = vperm.xlu0 %494, %v475
    %v496 = vpop.permute.xlu0 %495
    %v498 = vadd.f32 %v412, %v496
    %505 = vrot.lane.b32.xlu0 %v469, 64
    %v506 = vpop.permute.xlu0 %505
    %507 = vrot.lane.b32.xlu0 %v470, 64
    %v508 = vpop.permute.xlu0 %507
    %509 = vrot.lane.b32.xlu0 %v471, 64
    %v510 = vpop.permute.xlu0 %509
    %511 = vrot.lane.b32.xlu0 %v472, 64
    %v512 = vpop.permute.xlu0 %511
    %513 = vrot.lane.b32.xlu0 %v473, 64
    %v514 = vpop.permute.xlu0 %513
    %515 = vrot.lane.b32.xlu0 %v474, 64
    %v516 = vpop.permute.xlu0 %515
    %v517 = vsel %vm82, %v506, %v508
    %v518 = vsel %vm82, %v508, %v510
    %v519 = vsel %vm82, %v512, %v514
    %v520 = vsel %vm82, %v514, %v516
    %529 = vst.msk [vmem:[#allocation2] sm:$0xff] %vm89, %v506
    %530 = vst [vmem:[#allocation2 + $0x8] sm:$0xff] %v517
    %531 = vst [vmem:[#allocation2 + $0x10] sm:$0xff] %v518
    %532 = vst.msk [vmem:[#allocation2 + $0x18] sm:$0xff] %vm82, %v510
    %533 = vst.msk [vmem:[#allocation2 + $0x20] sm:$0xff] %vm89, %v512
    %534 = vst [vmem:[#allocation2 + $0x28] sm:$0xff] %v519
    %535 = vst [vmem:[#allocation2 + $0x30] sm:$0xff] %v520
    %536 = vst.msk [vmem:[#allocation2 + $0x38] sm:$0xff] %vm82, %v516
    %v537 = vld [vmem:[#allocation5] sm:$0xff]
    %v538 = vld [vmem:[#allocation5 + $0x8] sm:$0xff]
    %v539 = vld [vmem:[#allocation5 + $0x10] sm:$0xff]
    %v540 = vld [vmem:[#allocation5 + $0x18] sm:$0xff]
    %v541 = vld [vmem:[#allocation5 + $0x20] sm:$0xff]
    %v542 = vld [vmem:[#allocation5 + $0x28] sm:$0xff]
    %v543 = vld [vmem:[#allocation5 + $0x30] sm:$0xff]
    %v544 = vld [vmem:[#allocation5 + $0x38] sm:$0xff]
    %553 = vrot.lane.b32.xlu0 %v537, 81
    %v554 = vpop.permute.xlu0 %553
    %555 = vrot.lane.b32.xlu0 %v538, 81
    %v556 = vpop.permute.xlu0 %555
    %557 = vrot.lane.b32.xlu0 %v539, 81
    %v558 = vpop.permute.xlu0 %557
    %559 = vrot.lane.b32.xlu0 %v540, 81
    %v560 = vpop.permute.xlu0 %559
    %561 = vrot.lane.b32.xlu0 %v541, 81
    %v562 = vpop.permute.xlu0 %561
    %563 = vrot.lane.b32.xlu0 %v542, 81
    %v564 = vpop.permute.xlu0 %563
    %565 = vrot.lane.b32.xlu0 %v543, 81
    %v566 = vpop.permute.xlu0 %565
    %567 = vrot.lane.b32.xlu0 %v544, 81
    %v568 = vpop.permute.xlu0 %567
    %vm569 = vcmask 662528
    %v570 = vsel %vm569, %v554, %v556
    %v571 = vsel %vm569, %v556, %v558
    %v572 = vsel %vm569, %v558, %v560
    %v573 = vsel %vm569, %v562, %v564
    %v574 = vsel %vm569, %v564, %v566
    %v575 = vsel %vm569, %v566, %v568
    %582 = vst [vmem:[#allocation4] sm:$0xff] %v570
    %583 = vst [vmem:[#allocation4 + $0x8] sm:$0xff] %v571
    %584 = vst [vmem:[#allocation4 + $0x10] sm:$0xff] %v572
    %585 = vst [vmem:[#allocation4 + $0x18] sm:$0xff] %v573
    %586 = vst [vmem:[#allocation4 + $0x20] sm:$0xff] %v574
    %587 = vst [vmem:[#allocation4 + $0x28] sm:$0xff] %v575
    %v588 = vld [vmem:[#allocation5] sm:$0xff]
    %v589 = vld [vmem:[#allocation5 + $0x8] sm:$0xff]
    %v590 = vld [vmem:[#allocation5 + $0x10] sm:$0xff]
    %v591 = vld [vmem:[#allocation5 + $0x18] sm:$0xff]
    %v592 = vld [vmem:[#allocation5 + $0x20] sm:$0xff]
    %v593 = vld [vmem:[#allocation5 + $0x28] sm:$0xff]
    %v594 = vld [vmem:[#allocation5 + $0x30] sm:$0xff]
    %v595 = vld [vmem:[#allocation5 + $0x38] sm:$0xff]
    %604 = vrot.lane.b32.xlu0 %v588, 80
    %v605 = vpop.permute.xlu0 %604
    %606 = vrot.lane.b32.xlu0 %v589, 80
    %v607 = vpop.permute.xlu0 %606
    %608 = vrot.lane.b32.xlu0 %v590, 80
    %v609 = vpop.permute.xlu0 %608
    %610 = vrot.lane.b32.xlu0 %v591, 80
    %v611 = vpop.permute.xlu0 %610
    %612 = vrot.lane.b32.xlu0 %v592, 80
    %v613 = vpop.permute.xlu0 %612
    %614 = vrot.lane.b32.xlu0 %v593, 80
    %v615 = vpop.permute.xlu0 %614
    %616 = vrot.lane.b32.xlu0 %v594, 80
    %v617 = vpop.permute.xlu0 %616
    %618 = vrot.lane.b32.xlu0 %v595, 80
    %v619 = vpop.permute.xlu0 %618
    %vm620 = vcmask 654336
    %v621 = vsel %vm620, %v605, %v607
    %v622 = vsel %vm620, %v607, %v609
    %v623 = vsel %vm620, %v609, %v611
    %v624 = vsel %vm620, %v613, %v615
    %v625 = vsel %vm620, %v615, %v617
    %v626 = vsel %vm620, %v617, %v619
    %633 = vst [vmem:[#allocation4 + $0x30] sm:$0xff] %v621
    %634 = vst [vmem:[#allocation4 + $0x38] sm:$0xff] %v622
    %635 = vst [vmem:[#allocation4 + $0x40] sm:$0xff] %v623
    %636 = vst [vmem:[#allocation4 + $0x48] sm:$0xff] %v624
    %637 = vst [vmem:[#allocation4 + $0x50] sm:$0xff] %v625
    %638 = vst [vmem:[#allocation4 + $0x58] sm:$0xff] %v626
    %v639 = vld [vmem:[#allocation5] sm:$0xff]
    %v640 = vld [vmem:[#allocation5 + $0x8] sm:$0xff]
    %v641 = vld [vmem:[#allocation5 + $0x10] sm:$0xff]
    %v642 = vld [vmem:[#allocation5 + $0x18] sm:$0xff]
    %v643 = vld [vmem:[#allocation5 + $0x20] sm:$0xff]
    %v644 = vld [vmem:[#allocation5 + $0x28] sm:$0xff]
    %v645 = vld [vmem:[#allocation5 + $0x30] sm:$0xff]
    %v646 = vld [vmem:[#allocation5 + $0x38] sm:$0xff]
    %655 = vrot.lane.b32.xlu0 %v639, 79
    %v656 = vpop.permute.xlu0 %655
    %657 = vrot.lane.b32.xlu0 %v640, 79
    %v658 = vpop.permute.xlu0 %657
    %659 = vrot.lane.b32.xlu0 %v641, 79
    %v660 = vpop.permute.xlu0 %659
    %661 = vrot.lane.b32.xlu0 %v642, 79
    %v662 = vpop.permute.xlu0 %661
    %663 = vrot.lane.b32.xlu0 %v643, 79
    %v664 = vpop.permute.xlu0 %663
    %665 = vrot.lane.b32.xlu0 %v644, 79
    %v666 = vpop.permute.xlu0 %665
    %667 = vrot.lane.b32.xlu0 %v645, 79
    %v668 = vpop.permute.xlu0 %667
    %669 = vrot.lane.b32.xlu0 %v646, 79
    %v670 = vpop.permute.xlu0 %669
    %vm671 = vcmask 646144
    %v672 = vsel %vm671, %v656, %v658
    %v673 = vsel %vm671, %v658, %v660
    %v674 = vsel %vm671, %v660, %v662
    %v675 = vsel %vm671, %v664, %v666
    %v676 = vsel %vm671, %v666, %v668
    %v677 = vsel %vm671, %v668, %v670
    %684 = vst [vmem:[#allocation4 + $0x60] sm:$0xff] %v672
    %685 = vst [vmem:[#allocation4 + $0x68] sm:$0xff] %v673
    %686 = vst [vmem:[#allocation4 + $0x70] sm:$0xff] %v674
    %687 = vst [vmem:[#allocation4 + $0x78] sm:$0xff] %v675
    %688 = vst [vmem:[#allocation4 + $0x80] sm:$0xff] %v676
    %689 = vst [vmem:[#allocation4 + $0x88] sm:$0xff] %v677
    %v690 = vld [vmem:[#allocation5] sm:$0xff]
    %v691 = vld [vmem:[#allocation5 + $0x8] sm:$0xff]
    %v692 = vld [vmem:[#allocation5 + $0x10] sm:$0xff]
    %v693 = vld [vmem:[#allocation5 + $0x18] sm:$0xff]
    %v694 = vld [vmem:[#allocation5 + $0x20] sm:$0xff]
    %v695 = vld [vmem:[#allocation5 + $0x28] sm:$0xff]
    %v696 = vld [vmem:[#allocation5 + $0x30] sm:$0xff]
    %v697 = vld [vmem:[#allocation5 + $0x38] sm:$0xff]
    %706 = vrot.lane.b32.xlu0 %v690, 65
    %v707 = vpop.permute.xlu0 %706
    %708 = vrot.lane.b32.xlu0 %v691, 65
    %v709 = vpop.permute.xlu0 %708
    %710 = vrot.lane.b32.xlu0 %v692, 65
    %v711 = vpop.permute.xlu0 %710
    %712 = vrot.lane.b32.xlu0 %v693, 65
    %v713 = vpop.permute.xlu0 %712
    %714 = vrot.lane.b32.xlu0 %v694, 65
    %v715 = vpop.permute.xlu0 %714
    %716 = vrot.lane.b32.xlu0 %v695, 65
    %v717 = vpop.permute.xlu0 %716
    %718 = vrot.lane.b32.xlu0 %v696, 65
    %v719 = vpop.permute.xlu0 %718
    %720 = vrot.lane.b32.xlu0 %v697, 65
    %v721 = vpop.permute.xlu0 %720
    %vm722 = vcmask 531456
    %v723 = vsel %vm722, %v707, %v709
    %v724 = vsel %vm722, %v709, %v711
    %v725 = vsel %vm722, %v711, %v713
    %v726 = vsel %vm722, %v715, %v717
    %v727 = vsel %vm722, %v717, %v719
    %v728 = vsel %vm722, %v719, %v721
    %735 = vst [vmem:[#allocation4 + $0x90] sm:$0xff] %v723
    %736 = vst [vmem:[#allocation4 + $0x98] sm:$0xff] %v724
    %737 = vst [vmem:[#allocation4 + $0xa0] sm:$0xff] %v725
    %738 = vst [vmem:[#allocation4 + $0xa8] sm:$0xff] %v726
    %739 = vst [vmem:[#allocation4 + $0xb0] sm:$0xff] %v727
    %740 = vst [vmem:[#allocation4 + $0xb8] sm:$0xff] %v728
    %v741 = vld [vmem:[#allocation5] sm:$0xff]
    %v742 = vld [vmem:[#allocation5 + $0x8] sm:$0xff]
    %v743 = vld [vmem:[#allocation5 + $0x10] sm:$0xff]
    %v744 = vld [vmem:[#allocation5 + $0x18] sm:$0xff]
    %v745 = vld [vmem:[#allocation5 + $0x20] sm:$0xff]
    %v746 = vld [vmem:[#allocation5 + $0x28] sm:$0xff]
    %v747 = vld [vmem:[#allocation5 + $0x30] sm:$0xff]
    %v748 = vld [vmem:[#allocation5 + $0x38] sm:$0xff]
    %757 = vrot.lane.b32.xlu0 %v741, 64
    %v758 = vpop.permute.xlu0 %757
    %759 = vrot.lane.b32.xlu0 %v742, 64
    %v760 = vpop.permute.xlu0 %759
    %761 = vrot.lane.b32.xlu0 %v743, 64
    %v762 = vpop.permute.xlu0 %761
    %763 = vrot.lane.b32.xlu0 %v744, 64
    %v764 = vpop.permute.xlu0 %763
    %765 = vrot.lane.b32.xlu0 %v745, 64
    %v766 = vpop.permute.xlu0 %765
    %767 = vrot.lane.b32.xlu0 %v746, 64
    %v768 = vpop.permute.xlu0 %767
    %769 = vrot.lane.b32.xlu0 %v747, 64
    %v770 = vpop.permute.xlu0 %769
    %771 = vrot.lane.b32.xlu0 %v748, 64
    %v772 = vpop.permute.xlu0 %771
    %v773 = vsel %vm82, %v758, %v760
    %v774 = vsel %vm82, %v760, %v762
    %v775 = vsel %vm82, %v762, %v764
    %v776 = vsel %vm82, %v766, %v768
    %v777 = vsel %vm82, %v768, %v770
    %v778 = vsel %vm82, %v770, %v772
    %785 = vst [vmem:[#allocation4 + $0xc0] sm:$0xff] %v773
    %786 = vst [vmem:[#allocation4 + $0xc8] sm:$0xff] %v774
    %787 = vst [vmem:[#allocation4 + $0xd0] sm:$0xff] %v775
    %788 = vst [vmem:[#allocation4 + $0xd8] sm:$0xff] %v776
    %789 = vst [vmem:[#allocation4 + $0xe0] sm:$0xff] %v777
    %790 = vst [vmem:[#allocation4 + $0xe8] sm:$0xff] %v778
    %v791 = vld [vmem:[#allocation5] sm:$0xff]
    %v792 = vld [vmem:[#allocation5 + $0x8] sm:$0xff]
    %v793 = vld [vmem:[#allocation5 + $0x10] sm:$0xff]
    %v794 = vld [vmem:[#allocation5 + $0x18] sm:$0xff]
    %v795 = vld [vmem:[#allocation5 + $0x20] sm:$0xff]
    %v796 = vld [vmem:[#allocation5 + $0x28] sm:$0xff]
    %v797 = vld [vmem:[#allocation5 + $0x30] sm:$0xff]
    %v798 = vld [vmem:[#allocation5 + $0x38] sm:$0xff]
    %807 = vrot.lane.b32.xlu0 %v791, 63
    %v808 = vpop.permute.xlu0 %807
    %809 = vrot.lane.b32.xlu0 %v792, 63
    %v810 = vpop.permute.xlu0 %809
    %811 = vrot.lane.b32.xlu0 %v793, 63
    %v812 = vpop.permute.xlu0 %811
    %813 = vrot.lane.b32.xlu0 %v794, 63
    %v814 = vpop.permute.xlu0 %813
    %815 = vrot.lane.b32.xlu0 %v795, 63
    %v816 = vpop.permute.xlu0 %815
    %817 = vrot.lane.b32.xlu0 %v796, 63
    %v818 = vpop.permute.xlu0 %817
    %819 = vrot.lane.b32.xlu0 %v797, 63
    %v820 = vpop.permute.xlu0 %819
    %821 = vrot.lane.b32.xlu0 %v798, 63
    %v822 = vpop.permute.xlu0 %821
    %vm823 = vcmask 515072
    %v824 = vsel %vm823, %v808, %v810
    %v825 = vsel %vm823, %v810, %v812
    %v826 = vsel %vm823, %v812, %v814
    %v827 = vsel %vm823, %v816, %v818
    %v828 = vsel %vm823, %v818, %v820
    %v829 = vsel %vm823, %v820, %v822
    %836 = vst [vmem:[#allocation4 + $0xf0] sm:$0xff] %v824
    %837 = vst [vmem:[#allocation4 + $0xf8] sm:$0xff] %v825
    %838 = vst [vmem:[#allocation4 + $0x100] sm:$0xff] %v826
    %839 = vst [vmem:[#allocation4 + $0x108] sm:$0xff] %v827
    %840 = vst [vmem:[#allocation4 + $0x110] sm:$0xff] %v828
    %841 = vst [vmem:[#allocation4 + $0x118] sm:$0xff] %v829
    %v842 = vld [vmem:[#allocation5] sm:$0xff]
    %v843 = vld [vmem:[#allocation5 + $0x8] sm:$0xff]
    %v844 = vld [vmem:[#allocation5 + $0x10] sm:$0xff]
    %v845 = vld [vmem:[#allocation5 + $0x18] sm:$0xff]
    %v846 = vld [vmem:[#allocation5 + $0x20] sm:$0xff]
    %v847 = vld [vmem:[#allocation5 + $0x28] sm:$0xff]
    %v848 = vld [vmem:[#allocation5 + $0x30] sm:$0xff]
    %v849 = vld [vmem:[#allocation5 + $0x38] sm:$0xff]
    %858 = vrot.lane.b32.xlu0 %v842, 49
    %v859 = vpop.permute.xlu0 %858
    %860 = vrot.lane.b32.xlu0 %v843, 49
    %v861 = vpop.permute.xlu0 %860
    %862 = vrot.lane.b32.xlu0 %v844, 49
    %v863 = vpop.permute.xlu0 %862
    %864 = vrot.lane.b32.xlu0 %v845, 49
    %v865 = vpop.permute.xlu0 %864
    %866 = vrot.lane.b32.xlu0 %v846, 49
    %v867 = vpop.permute.xlu0 %866
    %868 = vrot.lane.b32.xlu0 %v847, 49
    %v869 = vpop.permute.xlu0 %868
    %870 = vrot.lane.b32.xlu0 %v848, 49
    %v871 = vpop.permute.xlu0 %870
    %872 = vrot.lane.b32.xlu0 %v849, 49
    %v873 = vpop.permute.xlu0 %872
    %vm874 = vcmask 400384
    %v875 = vsel %vm874, %v859, %v861
    %v876 = vsel %vm874, %v861, %v863
    %v877 = vsel %vm874, %v863, %v865
    %v878 = vsel %vm874, %v867, %v869
    %v879 = vsel %vm874, %v869, %v871
    %v880 = vsel %vm874, %v871, %v873
    %887 = vst [vmem:[#allocation4 + $0x120] sm:$0xff] %v875
    %888 = vst [vmem:[#allocation4 + $0x128] sm:$0xff] %v876
    %889 = vst [vmem:[#allocation4 + $0x130] sm:$0xff] %v877
    %890 = vst [vmem:[#allocation4 + $0x138] sm:$0xff] %v878
    %891 = vst [vmem:[#allocation4 + $0x140] sm:$0xff] %v879
    %892 = vst [vmem:[#allocation4 + $0x148] sm:$0xff] %v880
    %v893 = vld [vmem:[#allocation5] sm:$0xff]
    %v894 = vld [vmem:[#allocation5 + $0x8] sm:$0xff]
    %v895 = vld [vmem:[#allocation5 + $0x10] sm:$0xff]
    %v896 = vld [vmem:[#allocation5 + $0x18] sm:$0xff]
    %v897 = vld [vmem:[#allocation5 + $0x20] sm:$0xff]
    %v898 = vld [vmem:[#allocation5 + $0x28] sm:$0xff]
    %v899 = vld [vmem:[#allocation5 + $0x30] sm:$0xff]
    %v900 = vld [vmem:[#allocation5 + $0x38] sm:$0xff]
    %909 = vrot.lane.b32.xlu0 %v893, 48
    %v910 = vpop.permute.xlu0 %909
    %911 = vrot.lane.b32.xlu0 %v894, 48
    %v912 = vpop.permute.xlu0 %911
    %913 = vrot.lane.b32.xlu0 %v895, 48
    %v914 = vpop.permute.xlu0 %913
    %915 = vrot.lane.b32.xlu0 %v896, 48
    %v916 = vpop.permute.xlu0 %915
    %917 = vrot.lane.b32.xlu0 %v897, 48
    %v918 = vpop.permute.xlu0 %917
    %919 = vrot.lane.b32.xlu0 %v898, 48
    %v920 = vpop.permute.xlu0 %919
    %921 = vrot.lane.b32.xlu0 %v899, 48
    %v922 = vpop.permute.xlu0 %921
    %923 = vrot.lane.b32.xlu0 %v900, 48
    %v924 = vpop.permute.xlu0 %923
    %vm925 = vcmask 392192
    %v926 = vsel %vm925, %v910, %v912
    %v927 = vsel %vm925, %v912, %v914
    %v928 = vsel %vm925, %v914, %v916
    %v929 = vsel %vm925, %v918, %v920
    %v930 = vsel %vm925, %v920, %v922
    %v931 = vsel %vm925, %v922, %v924
    %938 = vst [vmem:[#allocation4 + $0x150] sm:$0xff] %v926
    %939 = vst [vmem:[#allocation4 + $0x158] sm:$0xff] %v927
    %940 = vst [vmem:[#allocation4 + $0x160] sm:$0xff] %v928
    %941 = vst [vmem:[#allocation4 + $0x168] sm:$0xff] %v929
    %942 = vst [vmem:[#allocation4 + $0x170] sm:$0xff] %v930
    %943 = vst [vmem:[#allocation4 + $0x178] sm:$0xff] %v931
    %v944 = vld [vmem:[#allocation5] sm:$0xff]
    %v945 = vld [vmem:[#allocation5 + $0x8] sm:$0xff]
    %v946 = vld [vmem:[#allocation5 + $0x10] sm:$0xff]
    %v947 = vld [vmem:[#allocation5 + $0x18] sm:$0xff]
    %v948 = vld [vmem:[#allocation5 + $0x20] sm:$0xff]
    %v949 = vld [vmem:[#allocation5 + $0x28] sm:$0xff]
    %v950 = vld [vmem:[#allocation5 + $0x30] sm:$0xff]
    %v951 = vld [vmem:[#allocation5 + $0x38] sm:$0xff]
    %960 = vrot.lane.b32.xlu0 %v944, 47
    %v961 = vpop.permute.xlu0 %960
    %962 = vrot.lane.b32.xlu0 %v945, 47
    %v963 = vpop.permute.xlu0 %962
    %964 = vrot.lane.b32.xlu0 %v946, 47
    %v965 = vpop.permute.xlu0 %964
    %966 = vrot.lane.b32.xlu0 %v947, 47
    %v967 = vpop.permute.xlu0 %966
    %968 = vrot.lane.b32.xlu0 %v948, 47
    %v969 = vpop.permute.xlu0 %968
    %970 = vrot.lane.b32.xlu0 %v949, 47
    %v971 = vpop.permute.xlu0 %970
    %972 = vrot.lane.b32.xlu0 %v950, 47
    %v973 = vpop.permute.xlu0 %972
    %974 = vrot.lane.b32.xlu0 %v951, 47
    %v975 = vpop.permute.xlu0 %974
    %vm976 = vcmask 384000
    %v977 = vsel %vm976, %v961, %v963
    %v978 = vsel %vm976, %v963, %v965
    %v979 = vsel %vm976, %v965, %v967
    %v980 = vsel %vm976, %v969, %v971
    %v981 = vsel %vm976, %v971, %v973
    %v982 = vsel %vm976, %v973, %v975
    %989 = vst [vmem:[#allocation4 + $0x180] sm:$0xff] %v977
    %990 = vst [vmem:[#allocation4 + $0x188] sm:$0xff] %v978
    %991 = vst [vmem:[#allocation4 + $0x190] sm:$0xff] %v979
    %992 = vst [vmem:[#allocation4 + $0x198] sm:$0xff] %v980
    %993 = vst [vmem:[#allocation4 + $0x1a0] sm:$0xff] %v981
    %994 = vst [vmem:[#allocation4 + $0x1a8] sm:$0xff] %v982
    %v995 = vld [vmem:[#allocation11] sm:$0xff]
    %v996 = vld [vmem:[#allocation11 + $0x8] sm:$0xff]
    %v997 = vld [vmem:[#allocation11 + $0x10] sm:$0xff]
    %v998 = vld [vmem:[#allocation11 + $0x18] sm:$0xff]
    %v999 = vld [vmem:[#allocation4] sm:$0xff]
    %v1000 = vld [vmem:[#allocation4 + $0x8] sm:$0xff]
    %v1001 = vld [vmem:[#allocation4 + $0x10] sm:$0xff]
    %v1002 = vld [vmem:[#allocation4 + $0x18] sm:$0xff]
    %v1003 = vld [vmem:[#allocation4 + $0x20] sm:$0xff]
    %v1004 = vld [vmem:[#allocation4 + $0x28] sm:$0xff]
    %v1005 = vld [vmem:[#allocation4 + $0x30] sm:$0xff]
    %v1006 = vld [vmem:[#allocation4 + $0x38] sm:$0xff]
    %v1007 = vld [vmem:[#allocation4 + $0x40] sm:$0xff]
    %v1008 = vld [vmem:[#allocation4 + $0x48] sm:$0xff]
    %v1009 = vld [vmem:[#allocation4 + $0x50] sm:$0xff]
    %v1010 = vld [vmem:[#allocation4 + $0x58] sm:$0xff]
    %v1011 = vld [vmem:[#allocation4 + $0x60] sm:$0xff]
    %v1012 = vld [vmem:[#allocation4 + $0x68] sm:$0xff]
    %v1013 = vld [vmem:[#allocation4 + $0x70] sm:$0xff]
    %v1014 = vld [vmem:[#allocation4 + $0x78] sm:$0xff]
    %v1015 = vld [vmem:[#allocation4 + $0x80] sm:$0xff]
    %v1016 = vld [vmem:[#allocation4 + $0x88] sm:$0xff]
    %v1017 = vld [vmem:[#allocation4 + $0x90] sm:$0xff]
    %v1018 = vld [vmem:[#allocation4 + $0x98] sm:$0xff]
    %v1019 = vld [vmem:[#allocation4 + $0xa0] sm:$0xff]
    %v1020 = vld [vmem:[#allocation4 + $0xa8] sm:$0xff]
    %v1021 = vld [vmem:[#allocation4 + $0xb0] sm:$0xff]
    %v1022 = vld [vmem:[#allocation4 + $0xb8] sm:$0xff]
    %v1023 = vld [vmem:[#allocation4 + $0xc0] sm:$0xff]
    %v1024 = vld [vmem:[#allocation4 + $0xc8] sm:$0xff]
    %v1025 = vld [vmem:[#allocation4 + $0xd0] sm:$0xff]
    %v1026 = vld [vmem:[#allocation4 + $0xd8] sm:$0xff]
    %v1027 = vld [vmem:[#allocation4 + $0xe0] sm:$0xff]
    %v1028 = vld [vmem:[#allocation4 + $0xe8] sm:$0xff]
    %v1029 = vld [vmem:[#allocation4 + $0xf0] sm:$0xff]
    %v1030 = vld [vmem:[#allocation4 + $0xf8] sm:$0xff]
    %v1031 = vld [vmem:[#allocation4 + $0x100] sm:$0xff]
    %v1032 = vld [vmem:[#allocation4 + $0x108] sm:$0xff]
    %v1033 = vld [vmem:[#allocation4 + $0x110] sm:$0xff]
    %v1034 = vld [vmem:[#allocation4 + $0x118] sm:$0xff]
    %v1035 = vld [vmem:[#allocation4 + $0x120] sm:$0xff]
    %v1036 = vld [vmem:[#allocation4 + $0x128] sm:$0xff]
    %v1037 = vld [vmem:[#allocation4 + $0x130] sm:$0xff]
    %v1038 = vld [vmem:[#allocation4 + $0x138] sm:$0xff]
    %v1039 = vld [vmem:[#allocation4 + $0x140] sm:$0xff]
    %v1040 = vld [vmem:[#allocation4 + $0x148] sm:$0xff]
    %v1041 = vld [vmem:[#allocation4 + $0x150] sm:$0xff]
    %v1042 = vld [vmem:[#allocation4 + $0x158] sm:$0xff]
    %v1043 = vld [vmem:[#allocation4 + $0x160] sm:$0xff]
    %v1044 = vld [vmem:[#allocation4 + $0x168] sm:$0xff]
    %v1045 = vld [vmem:[#allocation4 + $0x170] sm:$0xff]
    %v1046 = vld [vmem:[#allocation4 + $0x178] sm:$0xff]
    %v1047 = vld [vmem:[#allocation4 + $0x180] sm:$0xff]
    %v1048 = vld [vmem:[#allocation4 + $0x188] sm:$0xff]
    %v1049 = vld [vmem:[#allocation4 + $0x190] sm:$0xff]
    %v1050 = vld [vmem:[#allocation4 + $0x198] sm:$0xff]
    %v1051 = vld [vmem:[#allocation4 + $0x1a0] sm:$0xff]
    %v1052 = vld [vmem:[#allocation4 + $0x1a8] sm:$0xff]
    %v1054 = vsel %vm150, %v996, 0
    %v1057 = vsel %vm150, %v998, 0
    %1059 = vmatprep.subr.mxu0 %v1000
    %1060 = vmatpush1.msra.mxu0 %v999
    %1061 = vmatprep.subr.mxu0 %v1003
    %1062 = vmatpush1.msra.mxu0 %v1002
    %1063 = vmatprep.subr.mxu0 %v1006
    %1064 = vmatpush1.msra.mxu0 %v1005
    %1065 = vmatprep.subr.mxu0 %v1009
    %1066 = vmatpush1.msra.mxu0 %v1008
    %1067 = vmatprep.subr.mxu0 %v1012
    %1068 = vmatpush1.msra.mxu0 %v1011
    %1069 = vmatprep.subr.mxu0 %v1015
    %1070 = vmatpush1.msra.mxu0 %v1014
    %1071 = vmatprep.subr.mxu0 %v1018
    %1072 = vmatpush1.msra.mxu0 %v1017
    %1073 = vmatprep.subr.mxu0 %v1021
    %1074 = vmatpush1.msra.mxu0 %v1020
    %1075 = vmatprep.subr.mxu0 %v1024
    %1076 = vmatpush1.msra.mxu0 %v1023
    %1077 = vmatprep.subr.mxu0 %v1027
    %1078 = vmatpush1.msra.mxu0 %v1026
    %1079 = vmatprep.subr.mxu0 %v1030
    %1080 = vmatpush1.msra.mxu0 %v1029
    %1081 = vmatprep.subr.mxu0 %v1033
    %1082 = vmatpush1.msra.mxu0 %v1032
    %1083 = vmatprep.subr.mxu0 %v1036
    %1084 = vmatpush1.msra.mxu0 %v1035
    %1085 = vmatprep.subr.mxu0 %v1039
    %1086 = vmatpush1.msra.mxu0 %v1038
    %1087 = vmatprep.subr.mxu0 %v1042
    %1088 = vmatpush1.msra.mxu0 %v1041
    %1089 = vmatprep.subr.mxu0 %v1045
    %1090 = vmatpush1.msra.mxu0 %v1044
    %1091 = vmatprep.subr.mxu0 %v1048
    %1092 = vmatpush1.msra.mxu0 %v1047
    %1093 = vmatprep.subr.mxu0 %v1051
    %1094 = vmatpush1.msra.mxu0 %v1050
    %1095 = vmatprep.subr.mxu0 0.0
    %1096 = vmatpush1.msra.mxu0 0.0
    %1097 = vmatprep.subr.mxu0 0.0
    %1098 = vmatpush1.msra.mxu0 0.0
    %1099 = vmatprep.subr.mxu0 0.0
    %1100 = vmatpush1.msra.mxu0 0.0
    %1101 = vmatprep.subr.mxu0 0.0
    %1102 = vmatpush1.msra.mxu0 0.0
    %1103 = vmatprep.subr.mxu0 0.0
    %1104 = vmatpush1.msra.mxu0 0.0
    %1105 = vmatprep.subr.mxu0 0.0
    %1106 = vmatpush1.msra.mxu0 0.0
    %1107 = vmatprep.subr.mxu0 0.0
    %1108 = vmatpush1.msra.mxu0 0.0
    %1109 = vmatprep.subr.mxu0 0.0
    %1110 = vmatpush1.msra.mxu0 0.0
    %1111 = vmatprep.subr.mxu0 0.0
    %1112 = vmatpush1.msra.mxu0 0.0
    %1113 = vmatprep.subr.mxu0 0.0
    %1114 = vmatpush1.msra.mxu0 0.0
    %1115 = vmatprep.subr.mxu0 0.0
    %1116 = vmatpush1.msra.mxu0 0.0
    %1117 = vmatprep.subr.mxu0 0.0
    %1118 = vmatpush1.msra.mxu0 0.0
    %1119 = vmatprep.subr.mxu0 0.0
    %1120 = vmatpush1.msra.mxu0 0.0
    %1121 = vmatprep.subr.mxu0 0.0
    %1122 = vmatpush1.msra.mxu0 0.0
    %1123 = vmatprep.mubr.f32.mxu0 %v1054
    %1124 = vmatmul.mubr.f32.gmra.mrb[0].mxu0 %v995
    %v1125 = vpop.f32.mrb[0].mxu0
    %v1126 = vadd.f32 0.0, %v1125
    %v1127 = vpop.f32.mrb[0].mxu0
    %v1128 = vadd.f32 0.0, %v1127
    %1129 = vmatprep.mubr.f32.mxu0 %v1057
    %1130 = vmatmul.mubr.f32.gmra.mrb[0].mxu0 %v997
    %v1131 = vpop.f32.mrb[0].mxu0
    %v1132 = vadd.f32 0.0, %v1131
    %v1133 = vpop.f32.mrb[0].mxu0
    %v1134 = vadd.f32 0.0, %v1133
    %1135 = vdwg.mxu0
    %1136 = vmatprep.subr.mxu0 0.0
    %1137 = vmatpush1.msra.mxu0 %v1001
    %1138 = vmatprep.subr.mxu0 0.0
    %1139 = vmatpush1.msra.mxu0 %v1004
    %1140 = vmatprep.subr.mxu0 0.0
    %1141 = vmatpush1.msra.mxu0 %v1007
    %1142 = vmatprep.subr.mxu0 0.0
    %1143 = vmatpush1.msra.mxu0 %v1010
    %1144 = vmatprep.subr.mxu0 0.0
    %1145 = vmatpush1.msra.mxu0 %v1013
    %1146 = vmatprep.subr.mxu0 0.0
    %1147 = vmatpush1.msra.mxu0 %v1016
    %1148 = vmatprep.subr.mxu0 0.0
    %1149 = vmatpush1.msra.mxu0 %v1019
    %1150 = vmatprep.subr.mxu0 0.0
    %1151 = vmatpush1.msra.mxu0 %v1022
    %1152 = vmatprep.subr.mxu0 0.0
    %1153 = vmatpush1.msra.mxu0 %v1025
    %1154 = vmatprep.subr.mxu0 0.0
    %1155 = vmatpush1.msra.mxu0 %v1028
    %1156 = vmatprep.subr.mxu0 0.0
    %1157 = vmatpush1.msra.mxu0 %v1031
    %1158 = vmatprep.subr.mxu0 0.0
    %1159 = vmatpush1.msra.mxu0 %v1034
    %1160 = vmatprep.subr.mxu0 0.0
    %1161 = vmatpush1.msra.mxu0 %v1037
    %1162 = vmatprep.subr.mxu0 0.0
    %1163 = vmatpush1.msra.mxu0 %v1040
    %1164 = vmatprep.subr.mxu0 0.0
    %1165 = vmatpush1.msra.mxu0 %v1043
    %1166 = vmatprep.subr.mxu0 0.0
    %1167 = vmatpush1.msra.mxu0 %v1046
    %1168 = vmatprep.subr.mxu0 0.0
    %1169 = vmatpush1.msra.mxu0 %v1049
    %1170 = vmatprep.subr.mxu0 0.0
    %1171 = vmatpush1.msra.mxu0 %v1052
    %1172 = vmatprep.subr.mxu0 0.0
    %1173 = vmatpush1.msra.mxu0 0.0
    %1174 = vmatprep.subr.mxu0 0.0
    %1175 = vmatpush1.msra.mxu0 0.0
    %1176 = vmatprep.subr.mxu0 0.0
    %1177 = vmatpush1.msra.mxu0 0.0
    %1178 = vmatprep.subr.mxu0 0.0
    %1179 = vmatpush1.msra.mxu0 0.0
    %1180 = vmatprep.subr.mxu0 0.0
    %1181 = vmatpush1.msra.mxu0 0.0
    %1182 = vmatprep.subr.mxu0 0.0
    %1183 = vmatpush1.msra.mxu0 0.0
    %1184 = vmatprep.subr.mxu0 0.0
    %1185 = vmatpush1.msra.mxu0 0.0
    %1186 = vmatprep.subr.mxu0 0.0
    %1187 = vmatpush1.msra.mxu0 0.0
    %1188 = vmatprep.subr.mxu0 0.0
    %1189 = vmatpush1.msra.mxu0 0.0
    %1190 = vmatprep.subr.mxu0 0.0
    %1191 = vmatpush1.msra.mxu0 0.0
    %1192 = vmatprep.subr.mxu0 0.0
    %1193 = vmatpush1.msra.mxu0 0.0
    %1194 = vmatprep.subr.mxu0 0.0
    %1195 = vmatpush1.msra.mxu0 0.0
    %1196 = vmatprep.subr.mxu0 0.0
    %1197 = vmatpush1.msra.mxu0 0.0
    %1198 = vmatprep.subr.mxu0 0.0
    %1199 = vmatpush1.msra.mxu0 0.0
    %1200 = vmatprep.mubr.f32.mxu0 %v1054
    %1201 = vmatmul.mubr.f32.gmra.mrb[0].mxu0 %v995
    %v1202 = vpop.f32.mrb[0].mxu0
    %v1203 = vadd.f32 0.0, %v1202
    %v1204 = vpop.f32.mrb[0].mxu0
    %1205 = vmatprep.mubr.f32.mxu0 %v1057
    %1206 = vmatmul.mubr.f32.gmra.mrb[0].mxu0 %v997
    %v1207 = vpop.f32.mrb[0].mxu0
    %v1208 = vadd.f32 0.0, %v1207
    %v1209 = vpop.f32.mrb[0].mxu0
    %1210 = vdwg.mxu0
    %v1211 = vld [vmem:[#allocation10] sm:$0xff]
    %v1212 = vld [vmem:[#allocation10 + $0x8] sm:$0xff]
    %1214 = vset.pattern.permute.xlu0 3
    %1215 = vperm.xlu0 %1214, %v1211
    %v1216 = vpop.permute.xlu0 %1215
    %1219 = vset.pattern.permute.xlu0 3
    %1220 = vperm.xlu0 %1219, %v1212
    %v1221 = vpop.permute.xlu0 %1220
    %v1223 = vmul.f32 %v1126, %v1216
    %v1224 = vmul.f32 %v1128, %v1216
    %v1225 = vmul.f32 %v1203, %v1216
    %v1226 = vmul.f32 %v1132, %v1221
    %v1227 = vmul.f32 %v1134, %v1221
    %v1228 = vmul.f32 %v1208, %v1221
    %1229 = vset.pattern.permute.xlu0 4
    %1230 = vperm.xlu0 %1229, %v1211
    %v1231 = vpop.permute.xlu0 %1230
    %1233 = vset.pattern.permute.xlu0 4
    %1234 = vperm.xlu0 %1233, %v1212
    %v1235 = vpop.permute.xlu0 %1234
    %v1237 = vadd.f32 %v1223, %v1231
    %v1238 = vadd.f32 %v1224, %v1231
    %v1239 = vadd.f32 %v1225, %v1231
    %v1240 = vadd.f32 %v1226, %v1235
    %v1241 = vadd.f32 %v1227, %v1235
    %v1242 = vadd.f32 %v1228, %v1235
    %v1243 = vmax.f32 %v1237, 0.0
    %v1244 = vmax.f32 %v1238, 0.0
    %v1245 = vmax.f32 %v1239, 0.0
    %v1246 = vmax.f32 %v1240, 0.0
    %v1247 = vmax.f32 %v1241, 0.0
    %v1248 = vmax.f32 %v1242, 0.0
    %v1249 = vmul.f32 %v1243, %v457
    %v1250 = vmul.f32 %v1244, %v461
    %v1251 = vmul.f32 %v1245, %v465
    %v1252 = vmul.f32 %v1246, %v457
    %v1253 = vmul.f32 %v1247, %v461
    %v1254 = vmul.f32 %v1248, %v465
    %1261 = vrot.lane.b32.xlu0 %v1249, 64
    %v1262 = vpop.permute.xlu0 %1261
    %1263 = vrot.lane.b32.xlu0 %v1250, 64
    %v1264 = vpop.permute.xlu0 %1263
    %1265 = vrot.lane.b32.xlu0 %v1251, 64
    %v1266 = vpop.permute.xlu0 %1265
    %1267 = vrot.lane.b32.xlu0 %v1252, 64
    %v1268 = vpop.permute.xlu0 %1267
    %1269 = vrot.lane.b32.xlu0 %v1253, 64
    %v1270 = vpop.permute.xlu0 %1269
    %1271 = vrot.lane.b32.xlu0 %v1254, 64
    %v1272 = vpop.permute.xlu0 %1271
    %v1273 = vsel %vm82, %v1262, %v1264
    %v1274 = vsel %vm82, %v1264, %v1266
    %v1275 = vsel %vm82, %v1268, %v1270
    %v1276 = vsel %vm82, %v1270, %v1272
    %1285 = vst.msk [vmem:[#allocation2 + $0x40] sm:$0xff] %vm89, %v1262
    %1286 = vst [vmem:[#allocation2 + $0x48] sm:$0xff] %v1273
    %1287 = vst [vmem:[#allocation2 + $0x50] sm:$0xff] %v1274
    %1288 = vst.msk [vmem:[#allocation2 + $0x58] sm:$0xff] %vm82, %v1266
    %1289 = vst.msk [vmem:[#allocation2 + $0x60] sm:$0xff] %vm89, %v1268
    %1290 = vst [vmem:[#allocation2 + $0x68] sm:$0xff] %v1275
    %1291 = vst [vmem:[#allocation2 + $0x70] sm:$0xff] %v1276
    %1292 = vst.msk [vmem:[#allocation2 + $0x78] sm:$0xff] %vm82, %v1272
    %v1293 = vld [vmem:[#allocation5] sm:$0xff]
    %v1294 = vld [vmem:[#allocation5 + $0x8] sm:$0xff]
    %v1295 = vld [vmem:[#allocation5 + $0x10] sm:$0xff]
    %v1296 = vld [vmem:[#allocation5 + $0x18] sm:$0xff]
    %v1297 = vld [vmem:[#allocation5 + $0x20] sm:$0xff]
    %v1298 = vld [vmem:[#allocation5 + $0x28] sm:$0xff]
    %v1299 = vld [vmem:[#allocation5 + $0x30] sm:$0xff]
    %v1300 = vld [vmem:[#allocation5 + $0x38] sm:$0xff]
    %1309 = vrot.lane.b32.xlu0 %v1293, 98
    %v1310 = vpop.permute.xlu0 %1309
    %1311 = vrot.lane.b32.xlu0 %v1294, 98
    %v1312 = vpop.permute.xlu0 %1311
    %1313 = vrot.lane.b32.xlu0 %v1295, 98
    %v1314 = vpop.permute.xlu0 %1313
    %1315 = vrot.lane.b32.xlu0 %v1296, 98
    %v1316 = vpop.permute.xlu0 %1315
    %1317 = vrot.lane.b32.xlu0 %v1297, 98
    %v1318 = vpop.permute.xlu0 %1317
    %1319 = vrot.lane.b32.xlu0 %v1298, 98
    %v1320 = vpop.permute.xlu0 %1319
    %1321 = vrot.lane.b32.xlu0 %v1299, 98
    %v1322 = vpop.permute.xlu0 %1321
    %1323 = vrot.lane.b32.xlu0 %v1300, 98
    %v1324 = vpop.permute.xlu0 %1323
    %vm1325 = vcmask 801792
    %v1326 = vsel %vm1325, %v1310, %v1312
    %v1327 = vsel %vm1325, %v1312, %v1314
    %v1328 = vsel %vm1325, %v1314, %v1316
    %v1329 = vsel %vm1325, %v1318, %v1320
    %v1330 = vsel %vm1325, %v1320, %v1322
    %v1331 = vsel %vm1325, %v1322, %v1324
    %1338 = vst [vmem:[#allocation4] sm:$0xff] %v1326
    %1339 = vst [vmem:[#allocation4 + $0x8] sm:$0xff] %v1327
    %1340 = vst [vmem:[#allocation4 + $0x10] sm:$0xff] %v1328
    %1341 = vst [vmem:[#allocation4 + $0x18] sm:$0xff] %v1329
    %1342 = vst [vmem:[#allocation4 + $0x20] sm:$0xff] %v1330
    %1343 = vst [vmem:[#allocation4 + $0x28] sm:$0xff] %v1331
    %v1344 = vld [vmem:[#allocation5] sm:$0xff]
    %v1345 = vld [vmem:[#allocation5 + $0x8] sm:$0xff]
    %v1346 = vld [vmem:[#allocation5 + $0x10] sm:$0xff]
    %v1347 = vld [vmem:[#allocation5 + $0x18] sm:$0xff]
    %v1348 = vld [vmem:[#allocation5 + $0x20] sm:$0xff]
    %v1349 = vld [vmem:[#allocation5 + $0x28] sm:$0xff]
    %v1350 = vld [vmem:[#allocation5 + $0x30] sm:$0xff]
    %v1351 = vld [vmem:[#allocation5 + $0x38] sm:$0xff]
    %1360 = vrot.lane.b32.xlu0 %v1344, 96
    %v1361 = vpop.permute.xlu0 %1360
    %1362 = vrot.lane.b32.xlu0 %v1345, 96
    %v1363 = vpop.permute.xlu0 %1362
    %1364 = vrot.lane.b32.xlu0 %v1346, 96
    %v1365 = vpop.permute.xlu0 %1364
    %1366 = vrot.lane.b32.xlu0 %v1347, 96
    %v1367 = vpop.permute.xlu0 %1366
    %1368 = vrot.lane.b32.xlu0 %v1348, 96
    %v1369 = vpop.permute.xlu0 %1368
    %1370 = vrot.lane.b32.xlu0 %v1349, 96
    %v1371 = vpop.permute.xlu0 %1370
    %1372 = vrot.lane.b32.xlu0 %v1350, 96
    %v1373 = vpop.permute.xlu0 %1372
    %1374 = vrot.lane.b32.xlu0 %v1351, 96
    %v1375 = vpop.permute.xlu0 %1374
    %vm1376 = vcmask 785408
    %v1377 = vsel %vm1376, %v1361, %v1363
    %v1378 = vsel %vm1376, %v1363, %v1365
    %v1379 = vsel %vm1376, %v1365, %v1367
    %v1380 = vsel %vm1376, %v1369, %v1371
    %v1381 = vsel %vm1376, %v1371, %v1373
    %v1382 = vsel %vm1376, %v1373, %v1375
    %1389 = vst [vmem:[#allocation4 + $0x30] sm:$0xff] %v1377
    %1390 = vst [vmem:[#allocation4 + $0x38] sm:$0xff] %v1378
    %1391 = vst [vmem:[#allocation4 + $0x40] sm:$0xff] %v1379
    %1392 = vst [vmem:[#allocation4 + $0x48] sm:$0xff] %v1380
    %1393 = vst [vmem:[#allocation4 + $0x50] sm:$0xff] %v1381
    %1394 = vst [vmem:[#allocation4 + $0x58] sm:$0xff] %v1382
    %v1395 = vld [vmem:[#allocation5] sm:$0xff]
    %v1396 = vld [vmem:[#allocation5 + $0x8] sm:$0xff]
    %v1397 = vld [vmem:[#allocation5 + $0x10] sm:$0xff]
    %v1398 = vld [vmem:[#allocation5 + $0x18] sm:$0xff]
    %v1399 = vld [vmem:[#allocation5 + $0x20] sm:$0xff]
    %v1400 = vld [vmem:[#allocation5 + $0x28] sm:$0xff]
    %v1401 = vld [vmem:[#allocation5 + $0x30] sm:$0xff]
    %v1402 = vld [vmem:[#allocation5 + $0x38] sm:$0xff]
    %1411 = vrot.lane.b32.xlu0 %v1395, 94
    %v1412 = vpop.permute.xlu0 %1411
    %1413 = vrot.lane.b32.xlu0 %v1396, 94
    %v1414 = vpop.permute.xlu0 %1413
    %1415 = vrot.lane.b32.xlu0 %v1397, 94
    %v1416 = vpop.permute.xlu0 %1415
    %1417 = vrot.lane.b32.xlu0 %v1398, 94
    %v1418 = vpop.permute.xlu0 %1417
    %1419 = vrot.lane.b32.xlu0 %v1399, 94
    %v1420 = vpop.permute.xlu0 %1419
    %1421 = vrot.lane.b32.xlu0 %v1400, 94
    %v1422 = vpop.permute.xlu0 %1421
    %1423 = vrot.lane.b32.xlu0 %v1401, 94
    %v1424 = vpop.permute.xlu0 %1423
    %1425 = vrot.lane.b32.xlu0 %v1402, 94
    %v1426 = vpop.permute.xlu0 %1425
    %vm1427 = vcmask 769024
    %v1428 = vsel %vm1427, %v1412, %v1414
    %v1429 = vsel %vm1427, %v1414, %v1416
    %v1430 = vsel %vm1427, %v1416, %v1418
    %v1431 = vsel %vm1427, %v1420, %v1422
    %v1432 = vsel %vm1427, %v1422, %v1424
    %v1433 = vsel %vm1427, %v1424, %v1426
    %1440 = vst [vmem:[#allocation4 + $0x60] sm:$0xff] %v1428
    %1441 = vst [vmem:[#allocation4 + $0x68] sm:$0xff] %v1429
    %1442 = vst [vmem:[#allocation4 + $0x70] sm:$0xff] %v1430
    %1443 = vst [vmem:[#allocation4 + $0x78] sm:$0xff] %v1431
    %1444 = vst [vmem:[#allocation4 + $0x80] sm:$0xff] %v1432
    %1445 = vst [vmem:[#allocation4 + $0x88] sm:$0xff] %v1433
    %v1446 = vld [vmem:[#allocation5] sm:$0xff]
    %v1447 = vld [vmem:[#allocation5 + $0x8] sm:$0xff]
    %v1448 = vld [vmem:[#allocation5 + $0x10] sm:$0xff]
    %v1449 = vld [vmem:[#allocation5 + $0x18] sm:$0xff]
    %v1450 = vld [vmem:[#allocation5 + $0x20] sm:$0xff]
    %v1451 = vld [vmem:[#allocation5 + $0x28] sm:$0xff]
    %v1452 = vld [vmem:[#allocation5 + $0x30] sm:$0xff]
    %v1453 = vld [vmem:[#allocation5 + $0x38] sm:$0xff]
    %1462 = vrot.lane.b32.xlu0 %v1446, 66
    %v1463 = vpop.permute.xlu0 %1462
    %1464 = vrot.lane.b32.xlu0 %v1447, 66
    %v1465 = vpop.permute.xlu0 %1464
    %1466 = vrot.lane.b32.xlu0 %v1448, 66
    %v1467 = vpop.permute.xlu0 %1466
    %1468 = vrot.lane.b32.xlu0 %v1449, 66
    %v1469 = vpop.permute.xlu0 %1468
    %1470 = vrot.lane.b32.xlu0 %v1450, 66
    %v1471 = vpop.permute.xlu0 %1470
    %1472 = vrot.lane.b32.xlu0 %v1451, 66
    %v1473 = vpop.permute.xlu0 %1472
    %1474 = vrot.lane.b32.xlu0 %v1452, 66
    %v1475 = vpop.permute.xlu0 %1474
    %1476 = vrot.lane.b32.xlu0 %v1453, 66
    %v1477 = vpop.permute.xlu0 %1476
    %vm1478 = vcmask 539648
    %v1479 = vsel %vm1478, %v1463, %v1465
    %v1480 = vsel %vm1478, %v1465, %v1467
    %v1481 = vsel %vm1478, %v1467, %v1469
    %v1482 = vsel %vm1478, %v1471, %v1473
    %v1483 = vsel %vm1478, %v1473, %v1475
    %v1484 = vsel %vm1478, %v1475, %v1477
    %1491 = vst [vmem:[#allocation4 + $0x90] sm:$0xff] %v1479
    %1492 = vst [vmem:[#allocation4 + $0x98] sm:$0xff] %v1480
    %1493 = vst [vmem:[#allocation4 + $0xa0] sm:$0xff] %v1481
    %1494 = vst [vmem:[#allocation4 + $0xa8] sm:$0xff] %v1482
    %1495 = vst [vmem:[#allocation4 + $0xb0] sm:$0xff] %v1483
    %1496 = vst [vmem:[#allocation4 + $0xb8] sm:$0xff] %v1484
    %v1497 = vld [vmem:[#allocation5] sm:$0xff]
    %v1498 = vld [vmem:[#allocation5 + $0x8] sm:$0xff]
    %v1499 = vld [vmem:[#allocation5 + $0x10] sm:$0xff]
    %v1500 = vld [vmem:[#allocation5 + $0x18] sm:$0xff]
    %v1501 = vld [vmem:[#allocation5 + $0x20] sm:$0xff]
    %v1502 = vld [vmem:[#allocation5 + $0x28] sm:$0xff]
    %v1503 = vld [vmem:[#allocation5 + $0x30] sm:$0xff]
    %v1504 = vld [vmem:[#allocation5 + $0x38] sm:$0xff]
    %1513 = vrot.lane.b32.xlu0 %v1497, 64
    %v1514 = vpop.permute.xlu0 %1513
    %1515 = vrot.lane.b32.xlu0 %v1498, 64
    %v1516 = vpop.permute.xlu0 %1515
    %1517 = vrot.lane.b32.xlu0 %v1499, 64
    %v1518 = vpop.permute.xlu0 %1517
    %1519 = vrot.lane.b32.xlu0 %v1500, 64
    %v1520 = vpop.permute.xlu0 %1519
    %1521 = vrot.lane.b32.xlu0 %v1501, 64
    %v1522 = vpop.permute.xlu0 %1521
    %1523 = vrot.lane.b32.xlu0 %v1502, 64
    %v1524 = vpop.permute.xlu0 %1523
    %1525 = vrot.lane.b32.xlu0 %v1503, 64
    %v1526 = vpop.permute.xlu0 %1525
    %1527 = vrot.lane.b32.xlu0 %v1504, 64
    %v1528 = vpop.permute.xlu0 %1527
    %v1529 = vsel %vm82, %v1514, %v1516
    %v1530 = vsel %vm82, %v1516, %v1518
    %v1531 = vsel %vm82, %v1518, %v1520
    %v1532 = vsel %vm82, %v1522, %v1524
    %v1533 = vsel %vm82, %v1524, %v1526
    %v1534 = vsel %vm82, %v1526, %v1528
    %1541 = vst [vmem:[#allocation4 + $0xc0] sm:$0xff] %v1529
    %1542 = vst [vmem:[#allocation4 + $0xc8] sm:$0xff] %v1530
    %1543 = vst [vmem:[#allocation4 + $0xd0] sm:$0xff] %v1531
    %1544 = vst [vmem:[#allocation4 + $0xd8] sm:$0xff] %v1532
    %1545 = vst [vmem:[#allocation4 + $0xe0] sm:$0xff] %v1533
    %1546 = vst [vmem:[#allocation4 + $0xe8] sm:$0xff] %v1534
    %v1547 = vld [vmem:[#allocation5] sm:$0xff]
    %v1548 = vld [vmem:[#allocation5 + $0x8] sm:$0xff]
    %v1549 = vld [vmem:[#allocation5 + $0x10] sm:$0xff]
    %v1550 = vld [vmem:[#allocation5 + $0x18] sm:$0xff]
    %v1551 = vld [vmem:[#allocation5 + $0x20] sm:$0xff]
    %v1552 = vld [vmem:[#allocation5 + $0x28] sm:$0xff]
    %v1553 = vld [vmem:[#allocation5 + $0x30] sm:$0xff]
    %v1554 = vld [vmem:[#allocation5 + $0x38] sm:$0xff]
    %1563 = vrot.lane.b32.xlu0 %v1547, 62
    %v1564 = vpop.permute.xlu0 %1563
    %1565 = vrot.lane.b32.xlu0 %v1548, 62
    %v1566 = vpop.permute.xlu0 %1565
    %1567 = vrot.lane.b32.xlu0 %v1549, 62
    %v1568 = vpop.permute.xlu0 %1567
    %1569 = vrot.lane.b32.xlu0 %v1550, 62
    %v1570 = vpop.permute.xlu0 %1569
    %1571 = vrot.lane.b32.xlu0 %v1551, 62
    %v1572 = vpop.permute.xlu0 %1571
    %1573 = vrot.lane.b32.xlu0 %v1552, 62
    %v1574 = vpop.permute.xlu0 %1573
    %1575 = vrot.lane.b32.xlu0 %v1553, 62
    %v1576 = vpop.permute.xlu0 %1575
    %1577 = vrot.lane.b32.xlu0 %v1554, 62
    %v1578 = vpop.permute.xlu0 %1577
    %vm1579 = vcmask 506880
    %v1580 = vsel %vm1579, %v1564, %v1566
    %v1581 = vsel %vm1579, %v1566, %v1568
    %v1582 = vsel %vm1579, %v1568, %v1570
    %v1583 = vsel %vm1579, %v1572, %v1574
    %v1584 = vsel %vm1579, %v1574, %v1576
    %v1585 = vsel %vm1579, %v1576, %v1578
    %1592 = vst [vmem:[#allocation4 + $0xf0] sm:$0xff] %v1580
    %1593 = vst [vmem:[#allocation4 + $0xf8] sm:$0xff] %v1581
    %1594 = vst [vmem:[#allocation4 + $0x100] sm:$0xff] %v1582
    %1595 = vst [vmem:[#allocation4 + $0x108] sm:$0xff] %v1583
    %1596 = vst [vmem:[#allocation4 + $0x110] sm:$0xff] %v1584
    %1597 = vst [vmem:[#allocation4 + $0x118] sm:$0xff] %v1585
    %v1598 = vld [vmem:[#allocation5] sm:$0xff]
    %v1599 = vld [vmem:[#allocation5 + $0x8] sm:$0xff]
    %v1600 = vld [vmem:[#allocation5 + $0x10] sm:$0xff]
    %v1601 = vld [vmem:[#allocation5 + $0x18] sm:$0xff]
    %v1602 = vld [vmem:[#allocation5 + $0x20] sm:$0xff]
    %v1603 = vld [vmem:[#allocation5 + $0x28] sm:$0xff]
    %v1604 = vld [vmem:[#allocation5 + $0x30] sm:$0xff]
    %v1605 = vld [vmem:[#allocation5 + $0x38] sm:$0xff]
    %1614 = vrot.lane.b32.xlu0 %v1598, 34
    %v1615 = vpop.permute.xlu0 %1614
    %1616 = vrot.lane.b32.xlu0 %v1599, 34
    %v1617 = vpop.permute.xlu0 %1616
    %1618 = vrot.lane.b32.xlu0 %v1600, 34
    %v1619 = vpop.permute.xlu0 %1618
    %1620 = vrot.lane.b32.xlu0 %v1601, 34
    %v1621 = vpop.permute.xlu0 %1620
    %1622 = vrot.lane.b32.xlu0 %v1602, 34
    %v1623 = vpop.permute.xlu0 %1622
    %1624 = vrot.lane.b32.xlu0 %v1603, 34
    %v1625 = vpop.permute.xlu0 %1624
    %1626 = vrot.lane.b32.xlu0 %v1604, 34
    %v1627 = vpop.permute.xlu0 %1626
    %1628 = vrot.lane.b32.xlu0 %v1605, 34
    %v1629 = vpop.permute.xlu0 %1628
    %vm1630 = vcmask 277504
    %v1631 = vsel %vm1630, %v1615, %v1617
    %v1632 = vsel %vm1630, %v1617, %v1619
    %v1633 = vsel %vm1630, %v1619, %v1621
    %v1634 = vsel %vm1630, %v1623, %v1625
    %v1635 = vsel %vm1630, %v1625, %v1627
    %v1636 = vsel %vm1630, %v1627, %v1629
    %1643 = vst [vmem:[#allocation4 + $0x120] sm:$0xff] %v1631
    %1644 = vst [vmem:[#allocation4 + $0x128] sm:$0xff] %v1632
    %1645 = vst [vmem:[#allocation4 + $0x130] sm:$0xff] %v1633
    %1646 = vst [vmem:[#allocation4 + $0x138] sm:$0xff] %v1634
    %1647 = vst [vmem:[#allocation4 + $0x140] sm:$0xff] %v1635
    %1648 = vst [vmem:[#allocation4 + $0x148] sm:$0xff] %v1636
    %v1649 = vld [vmem:[#allocation5] sm:$0xff]
    %v1650 = vld [vmem:[#allocation5 + $0x8] sm:$0xff]
    %v1651 = vld [vmem:[#allocation5 + $0x10] sm:$0xff]
    %v1652 = vld [vmem:[#allocation5 + $0x18] sm:$0xff]
    %v1653 = vld [vmem:[#allocation5 + $0x20] sm:$0xff]
    %v1654 = vld [vmem:[#allocation5 + $0x28] sm:$0xff]
    %v1655 = vld [vmem:[#allocation5 + $0x30] sm:$0xff]
    %v1656 = vld [vmem:[#allocation5 + $0x38] sm:$0xff]
    %1665 = vrot.lane.b32.xlu0 %v1649, 32
    %v1666 = vpop.permute.xlu0 %1665
    %1667 = vrot.lane.b32.xlu0 %v1650, 32
    %v1668 = vpop.permute.xlu0 %1667
    %1669 = vrot.lane.b32.xlu0 %v1651, 32
    %v1670 = vpop.permute.xlu0 %1669
    %1671 = vrot.lane.b32.xlu0 %v1652, 32
    %v1672 = vpop.permute.xlu0 %1671
    %1673 = vrot.lane.b32.xlu0 %v1653, 32
    %v1674 = vpop.permute.xlu0 %1673
    %1675 = vrot.lane.b32.xlu0 %v1654, 32
    %v1676 = vpop.permute.xlu0 %1675
    %1677 = vrot.lane.b32.xlu0 %v1655, 32
    %v1678 = vpop.permute.xlu0 %1677
    %1679 = vrot.lane.b32.xlu0 %v1656, 32
    %v1680 = vpop.permute.xlu0 %1679
    %vm1681 = vcmask 261120
    %v1682 = vsel %vm1681, %v1666, %v1668
    %v1683 = vsel %vm1681, %v1668, %v1670
    %v1684 = vsel %vm1681, %v1670, %v1672
    %v1685 = vsel %vm1681, %v1674, %v1676
    %v1686 = vsel %vm1681, %v1676, %v1678
    %v1687 = vsel %vm1681, %v1678, %v1680
    %1694 = vst [vmem:[#allocation4 + $0x150] sm:$0xff] %v1682
    %1695 = vst [vmem:[#allocation4 + $0x158] sm:$0xff] %v1683
    %1696 = vst [vmem:[#allocation4 + $0x160] sm:$0xff] %v1684
    %1697 = vst [vmem:[#allocation4 + $0x168] sm:$0xff] %v1685
    %1698 = vst [vmem:[#allocation4 + $0x170] sm:$0xff] %v1686
    %1699 = vst [vmem:[#allocation4 + $0x178] sm:$0xff] %v1687
    %v1700 = vld [vmem:[#allocation5] sm:$0xff]
    %v1701 = vld [vmem:[#allocation5 + $0x8] sm:$0xff]
    %v1702 = vld [vmem:[#allocation5 + $0x10] sm:$0xff]
    %v1703 = vld [vmem:[#allocation5 + $0x18] sm:$0xff]
    %v1704 = vld [vmem:[#allocation5 + $0x20] sm:$0xff]
    %v1705 = vld [vmem:[#allocation5 + $0x28] sm:$0xff]
    %v1706 = vld [vmem:[#allocation5 + $0x30] sm:$0xff]
    %v1707 = vld [vmem:[#allocation5 + $0x38] sm:$0xff]
    %1716 = vrot.lane.b32.xlu0 %v1700, 30
    %v1717 = vpop.permute.xlu0 %1716
    %1718 = vrot.lane.b32.xlu0 %v1701, 30
    %v1719 = vpop.permute.xlu0 %1718
    %1720 = vrot.lane.b32.xlu0 %v1702, 30
    %v1721 = vpop.permute.xlu0 %1720
    %1722 = vrot.lane.b32.xlu0 %v1703, 30
    %v1723 = vpop.permute.xlu0 %1722
    %1724 = vrot.lane.b32.xlu0 %v1704, 30
    %v1725 = vpop.permute.xlu0 %1724
    %1726 = vrot.lane.b32.xlu0 %v1705, 30
    %v1727 = vpop.permute.xlu0 %1726
    %1728 = vrot.lane.b32.xlu0 %v1706, 30
    %v1729 = vpop.permute.xlu0 %1728
    %1730 = vrot.lane.b32.xlu0 %v1707, 30
    %v1731 = vpop.permute.xlu0 %1730
    %vm1732 = vcmask 244736
    %v1733 = vsel %vm1732, %v1717, %v1719
    %v1734 = vsel %vm1732, %v1719, %v1721
    %v1735 = vsel %vm1732, %v1721, %v1723
    %v1736 = vsel %vm1732, %v1725, %v1727
    %v1737 = vsel %vm1732, %v1727, %v1729
    %v1738 = vsel %vm1732, %v1729, %v1731
    %1745 = vst [vmem:[#allocation4 + $0x180] sm:$0xff] %v1733
    %1746 = vst [vmem:[#allocation4 + $0x188] sm:$0xff] %v1734
    %1747 = vst [vmem:[#allocation4 + $0x190] sm:$0xff] %v1735
    %1748 = vst [vmem:[#allocation4 + $0x198] sm:$0xff] %v1736
    %1749 = vst [vmem:[#allocation4 + $0x1a0] sm:$0xff] %v1737
    %1750 = vst [vmem:[#allocation4 + $0x1a8] sm:$0xff] %v1738
    %v1751 = vld [vmem:[#allocation11 + $0x20] sm:$0xff]
    %v1752 = vld [vmem:[#allocation11 + $0x28] sm:$0xff]
    %v1753 = vld [vmem:[#allocation11 + $0x30] sm:$0xff]
    %v1754 = vld [vmem:[#allocation11 + $0x38] sm:$0xff]
    %v1755 = vld [vmem:[#allocation4] sm:$0xff]
    %v1756 = vld [vmem:[#allocation4 + $0x8] sm:$0xff]
    %v1757 = vld [vmem:[#allocation4 + $0x10] sm:$0xff]
    %v1758 = vld [vmem:[#allocation4 + $0x18] sm:$0xff]
    %v1759 = vld [vmem:[#allocation4 + $0x20] sm:$0xff]
    %v1760 = vld [vmem:[#allocation4 + $0x28] sm:$0xff]
    %v1761 = vld [vmem:[#allocation4 + $0x30] sm:$0xff]
    %v1762 = vld [vmem:[#allocation4 + $0x38] sm:$0xff]
    %v1763 = vld [vmem:[#allocation4 + $0x40] sm:$0xff]
    %v1764 = vld [vmem:[#allocation4 + $0x48] sm:$0xff]
    %v1765 = vld [vmem:[#allocation4 + $0x50] sm:$0xff]
    %v1766 = vld [vmem:[#allocation4 + $0x58] sm:$0xff]
    %v1767 = vld [vmem:[#allocation4 + $0x60] sm:$0xff]
    %v1768 = vld [vmem:[#allocation4 + $0x68] sm:$0xff]
    %v1769 = vld [vmem:[#allocation4 + $0x70] sm:$0xff]
    %v1770 = vld [vmem:[#allocation4 + $0x78] sm:$0xff]
    %v1771 = vld [vmem:[#allocation4 + $0x80] sm:$0xff]
    %v1772 = vld [vmem:[#allocation4 + $0x88] sm:$0xff]
    %v1773 = vld [vmem:[#allocation4 + $0x90] sm:$0xff]
    %v1774 = vld [vmem:[#allocation4 + $0x98] sm:$0xff]
    %v1775 = vld [vmem:[#allocation4 + $0xa0] sm:$0xff]
    %v1776 = vld [vmem:[#allocation4 + $0xa8] sm:$0xff]
    %v1777 = vld [vmem:[#allocation4 + $0xb0] sm:$0xff]
    %v1778 = vld [vmem:[#allocation4 + $0xb8] sm:$0xff]
    %v1779 = vld [vmem:[#allocation4 + $0xc0] sm:$0xff]
    %v1780 = vld [vmem:[#allocation4 + $0xc8] sm:$0xff]
    %v1781 = vld [vmem:[#allocation4 + $0xd0] sm:$0xff]
    %v1782 = vld [vmem:[#allocation4 + $0xd8] sm:$0xff]
    %v1783 = vld [vmem:[#allocation4 + $0xe0] sm:$0xff]
    %v1784 = vld [vmem:[#allocation4 + $0xe8] sm:$0xff]
    %v1785 = vld [vmem:[#allocation4 + $0xf0] sm:$0xff]
    %v1786 = vld [vmem:[#allocation4 + $0xf8] sm:$0xff]
    %v1787 = vld [vmem:[#allocation4 + $0x100] sm:$0xff]
    %v1788 = vld [vmem:[#allocation4 + $0x108] sm:$0xff]
    %v1789 = vld [vmem:[#allocation4 + $0x110] sm:$0xff]
    %v1790 = vld [vmem:[#allocation4 + $0x118] sm:$0xff]
    %v1791 = vld [vmem:[#allocation4 + $0x120] sm:$0xff]
    %v1792 = vld [vmem:[#allocation4 + $0x128] sm:$0xff]
    %v1793 = vld [vmem:[#allocation4 + $0x130] sm:$0xff]
    %v1794 = vld [vmem:[#allocation4 + $0x138] sm:$0xff]
    %v1795 = vld [vmem:[#allocation4 + $0x140] sm:$0xff]
    %v1796 = vld [vmem:[#allocation4 + $0x148] sm:$0xff]
    %v1797 = vld [vmem:[#allocation4 + $0x150] sm:$0xff]
    %v1798 = vld [vmem:[#allocation4 + $0x158] sm:$0xff]
    %v1799 = vld [vmem:[#allocation4 + $0x160] sm:$0xff]
    %v1800 = vld [vmem:[#allocation4 + $0x168] sm:$0xff]
    %v1801 = vld [vmem:[#allocation4 + $0x170] sm:$0xff]
    %v1802 = vld [vmem:[#allocation4 + $0x178] sm:$0xff]
    %v1803 = vld [vmem:[#allocation4 + $0x180] sm:$0xff]
    %v1804 = vld [vmem:[#allocation4 + $0x188] sm:$0xff]
    %v1805 = vld [vmem:[#allocation4 + $0x190] sm:$0xff]
    %v1806 = vld [vmem:[#allocation4 + $0x198] sm:$0xff]
    %v1807 = vld [vmem:[#allocation4 + $0x1a0] sm:$0xff]
    %v1808 = vld [vmem:[#allocation4 + $0x1a8] sm:$0xff]
    %v1810 = vsel %vm150, %v1752, 0
    %v1813 = vsel %vm150, %v1754, 0
    %1815 = vmatprep.subr.mxu0 %v1756
    %1816 = vmatpush1.msra.mxu0 %v1755
    %1817 = vmatprep.subr.mxu0 %v1759
    %1818 = vmatpush1.msra.mxu0 %v1758
    %1819 = vmatprep.subr.mxu0 %v1762
    %1820 = vmatpush1.msra.mxu0 %v1761
    %1821 = vmatprep.subr.mxu0 %v1765
    %1822 = vmatpush1.msra.mxu0 %v1764
    %1823 = vmatprep.subr.mxu0 %v1768
    %1824 = vmatpush1.msra.mxu0 %v1767
    %1825 = vmatprep.subr.mxu0 %v1771
    %1826 = vmatpush1.msra.mxu0 %v1770
    %1827 = vmatprep.subr.mxu0 %v1774
    %1828 = vmatpush1.msra.mxu0 %v1773
    %1829 = vmatprep.subr.mxu0 %v1777
    %1830 = vmatpush1.msra.mxu0 %v1776
    %1831 = vmatprep.subr.mxu0 %v1780
    %1832 = vmatpush1.msra.mxu0 %v1779
    %1833 = vmatprep.subr.mxu0 %v1783
    %1834 = vmatpush1.msra.mxu0 %v1782
    %1835 = vmatprep.subr.mxu0 %v1786
    %1836 = vmatpush1.msra.mxu0 %v1785
    %1837 = vmatprep.subr.mxu0 %v1789
    %1838 = vmatpush1.msra.mxu0 %v1788
    %1839 = vmatprep.subr.mxu0 %v1792
    %1840 = vmatpush1.msra.mxu0 %v1791
    %1841 = vmatprep.subr.mxu0 %v1795
    %1842 = vmatpush1.msra.mxu0 %v1794
    %1843 = vmatprep.subr.mxu0 %v1798
    %1844 = vmatpush1.msra.mxu0 %v1797
    %1845 = vmatprep.subr.mxu0 %v1801
    %1846 = vmatpush1.msra.mxu0 %v1800
    %1847 = vmatprep.subr.mxu0 %v1804
    %1848 = vmatpush1.msra.mxu0 %v1803
    %1849 = vmatprep.subr.mxu0 %v1807
    %1850 = vmatpush1.msra.mxu0 %v1806
    %1851 = vmatprep.subr.mxu0 0.0
    %1852 = vmatpush1.msra.mxu0 0.0
    %1853 = vmatprep.subr.mxu0 0.0
    %1854 = vmatpush1.msra.mxu0 0.0
    %1855 = vmatprep.subr.mxu0 0.0
    %1856 = vmatpush1.msra.mxu0 0.0
    %1857 = vmatprep.subr.mxu0 0.0
    %1858 = vmatpush1.msra.mxu0 0.0
    %1859 = vmatprep.subr.mxu0 0.0
    %1860 = vmatpush1.msra.mxu0 0.0
    %1861 = vmatprep.subr.mxu0 0.0
    %1862 = vmatpush1.msra.mxu0 0.0
    %1863 = vmatprep.subr.mxu0 0.0
    %1864 = vmatpush1.msra.mxu0 0.0
    %1865 = vmatprep.subr.mxu0 0.0
    %1866 = vmatpush1.msra.mxu0 0.0
    %1867 = vmatprep.subr.mxu0 0.0
    %1868 = vmatpush1.msra.mxu0 0.0
    %1869 = vmatprep.subr.mxu0 0.0
    %1870 = vmatpush1.msra.mxu0 0.0
    %1871 = vmatprep.subr.mxu0 0.0
    %1872 = vmatpush1.msra.mxu0 0.0
    %1873 = vmatprep.subr.mxu0 0.0
    %1874 = vmatpush1.msra.mxu0 0.0
    %1875 = vmatprep.subr.mxu0 0.0
    %1876 = vmatpush1.msra.mxu0 0.0
    %1877 = vmatprep.subr.mxu0 0.0
    %1878 = vmatpush1.msra.mxu0 0.0
    %1879 = vmatprep.mubr.f32.mxu0 %v1810
    %1880 = vmatmul.mubr.f32.gmra.mrb[0].mxu0 %v1751
    %v1881 = vpop.f32.mrb[0].mxu0
    %v1882 = vadd.f32 0.0, %v1881
    %v1883 = vpop.f32.mrb[0].mxu0
    %v1884 = vadd.f32 0.0, %v1883
    %1885 = vmatprep.mubr.f32.mxu0 %v1813
    %1886 = vmatmul.mubr.f32.gmra.mrb[0].mxu0 %v1753
    %v1887 = vpop.f32.mrb[0].mxu0
    %v1888 = vadd.f32 0.0, %v1887
    %v1889 = vpop.f32.mrb[0].mxu0
    %v1890 = vadd.f32 0.0, %v1889
    %1891 = vdwg.mxu0
    %1892 = vmatprep.subr.mxu0 0.0
    %1893 = vmatpush1.msra.mxu0 %v1757
    %1894 = vmatprep.subr.mxu0 0.0
    %1895 = vmatpush1.msra.mxu0 %v1760
    %1896 = vmatprep.subr.mxu0 0.0
    %1897 = vmatpush1.msra.mxu0 %v1763
    %1898 = vmatprep.subr.mxu0 0.0
    %1899 = vmatpush1.msra.mxu0 %v1766
    %1900 = vmatprep.subr.mxu0 0.0
    %1901 = vmatpush1.msra.mxu0 %v1769
    %1902 = vmatprep.subr.mxu0 0.0
    %1903 = vmatpush1.msra.mxu0 %v1772
    %1904 = vmatprep.subr.mxu0 0.0
    %1905 = vmatpush1.msra.mxu0 %v1775
    %1906 = vmatprep.subr.mxu0 0.0
    %1907 = vmatpush1.msra.mxu0 %v1778
    %1908 = vmatprep.subr.mxu0 0.0
    %1909 = vmatpush1.msra.mxu0 %v1781
    %1910 = vmatprep.subr.mxu0 0.0
    %1911 = vmatpush1.msra.mxu0 %v1784
    %1912 = vmatprep.subr.mxu0 0.0
    %1913 = vmatpush1.msra.mxu0 %v1787
    %1914 = vmatprep.subr.mxu0 0.0
    %1915 = vmatpush1.msra.mxu0 %v1790
    %1916 = vmatprep.subr.mxu0 0.0
    %1917 = vmatpush1.msra.mxu0 %v1793
    %1918 = vmatprep.subr.mxu0 0.0
    %1919 = vmatpush1.msra.mxu0 %v1796
    %1920 = vmatprep.subr.mxu0 0.0
    %1921 = vmatpush1.msra.mxu0 %v1799
    %1922 = vmatprep.subr.mxu0 0.0
    %1923 = vmatpush1.msra.mxu0 %v1802
    %1924 = vmatprep.subr.mxu0 0.0
    %1925 = vmatpush1.msra.mxu0 %v1805
    %1926 = vmatprep.subr.mxu0 0.0
    %1927 = vmatpush1.msra.mxu0 %v1808
    %1928 = vmatprep.subr.mxu0 0.0
    %1929 = vmatpush1.msra.mxu0 0.0
    %1930 = vmatprep.subr.mxu0 0.0
    %1931 = vmatpush1.msra.mxu0 0.0
    %1932 = vmatprep.subr.mxu0 0.0
    %1933 = vmatpush1.msra.mxu0 0.0
    %1934 = vmatprep.subr.mxu0 0.0
    %1935 = vmatpush1.msra.mxu0 0.0
    %1936 = vmatprep.subr.mxu0 0.0
    %1937 = vmatpush1.msra.mxu0 0.0
    %1938 = vmatprep.subr.mxu0 0.0
    %1939 = vmatpush1.msra.mxu0 0.0
    %1940 = vmatprep.subr.mxu0 0.0
    %1941 = vmatpush1.msra.mxu0 0.0
    %1942 = vmatprep.subr.mxu0 0.0
    %1943 = vmatpush1.msra.mxu0 0.0
    %1944 = vmatprep.subr.mxu0 0.0
    %1945 = vmatpush1.msra.mxu0 0.0
    %1946 = vmatprep.subr.mxu0 0.0
    %1947 = vmatpush1.msra.mxu0 0.0
    %1948 = vmatprep.subr.mxu0 0.0
    %1949 = vmatpush1.msra.mxu0 0.0
    %1950 = vmatprep.subr.mxu0 0.0
    %1951 = vmatpush1.msra.mxu0 0.0
    %1952 = vmatprep.subr.mxu0 0.0
    %1953 = vmatpush1.msra.mxu0 0.0
    %1954 = vmatprep.subr.mxu0 0.0
    %1955 = vmatpush1.msra.mxu0 0.0
    %1956 = vmatprep.mubr.f32.mxu0 %v1810
    %1957 = vmatmul.mubr.f32.gmra.mrb[0].mxu0 %v1751
    %v1958 = vpop.f32.mrb[0].mxu0
    %v1959 = vadd.f32 0.0, %v1958
    %v1960 = vpop.f32.mrb[0].mxu0
    %1961 = vmatprep.mubr.f32.mxu0 %v1813
    %1962 = vmatmul.mubr.f32.gmra.mrb[0].mxu0 %v1753
    %v1963 = vpop.f32.mrb[0].mxu0
    %v1964 = vadd.f32 0.0, %v1963
    %v1965 = vpop.f32.mrb[0].mxu0
    %1966 = vdwg.mxu0
    %v1967 = vld [vmem:[#allocation10] sm:$0xff]
    %v1968 = vld [vmem:[#allocation10 + $0x8] sm:$0xff]
    %1970 = vset.pattern.permute.xlu0 5
    %1971 = vperm.xlu0 %1970, %v1967
    %v1972 = vpop.permute.xlu0 %1971
    %1975 = vset.pattern.permute.xlu0 5
    %1976 = vperm.xlu0 %1975, %v1968
    %v1977 = vpop.permute.xlu0 %1976
    %v1979 = vmul.f32 %v1882, %v1972
    %v1980 = vmul.f32 %v1884, %v1972
    %v1981 = vmul.f32 %v1959, %v1972
    %v1982 = vmul.f32 %v1888, %v1977
    %v1983 = vmul.f32 %v1890, %v1977
    %v1984 = vmul.f32 %v1964, %v1977
    %1985 = vset.pattern.permute.xlu0 6
    %1986 = vperm.xlu0 %1985, %v1967
    %v1987 = vpop.permute.xlu0 %1986
    %1989 = vset.pattern.permute.xlu0 6
    %1990 = vperm.xlu0 %1989, %v1968
    %v1991 = vpop.permute.xlu0 %1990
    %v1993 = vadd.f32 %v1979, %v1987
    %v1994 = vadd.f32 %v1980, %v1987
    %v1995 = vadd.f32 %v1981, %v1987
    %v1996 = vadd.f32 %v1982, %v1991
    %v1997 = vadd.f32 %v1983, %v1991
    %v1998 = vadd.f32 %v1984, %v1991
    %v1999 = vmax.f32 %v1993, 0.0
    %v2000 = vmax.f32 %v1994, 0.0
    %v2001 = vmax.f32 %v1995, 0.0
    %v2002 = vmax.f32 %v1996, 0.0
    %v2003 = vmax.f32 %v1997, 0.0
    %v2004 = vmax.f32 %v1998, 0.0
    %v2005 = vmul.f32 %v1999, %v457
    %v2006 = vmul.f32 %v2000, %v461
    %v2007 = vmul.f32 %v2001, %v465
    %v2008 = vmul.f32 %v2002, %v457
    %v2009 = vmul.f32 %v2003, %v461
    %v2010 = vmul.f32 %v2004, %v465
    %2017 = vrot.lane.b32.xlu0 %v2005, 64
    %v2018 = vpop.permute.xlu0 %2017
    %2019 = vrot.lane.b32.xlu0 %v2006, 64
    %v2020 = vpop.permute.xlu0 %2019
    %2021 = vrot.lane.b32.xlu0 %v2007, 64
    %v2022 = vpop.permute.xlu0 %2021
    %2023 = vrot.lane.b32.xlu0 %v2008, 64
    %v2024 = vpop.permute.xlu0 %2023
    %2025 = vrot.lane.b32.xlu0 %v2009, 64
    %v2026 = vpop.permute.xlu0 %2025
    %2027 = vrot.lane.b32.xlu0 %v2010, 64
    %v2028 = vpop.permute.xlu0 %2027
    %v2029 = vsel %vm82, %v2018, %v2020
    %v2030 = vsel %vm82, %v2020, %v2022
    %v2031 = vsel %vm82, %v2024, %v2026
    %v2032 = vsel %vm82, %v2026, %v2028
    %2041 = vst.msk [vmem:[#allocation2 + $0x80] sm:$0xff] %vm89, %v2018
    %2042 = vst [vmem:[#allocation2 + $0x88] sm:$0xff] %v2029
    %2043 = vst [vmem:[#allocation2 + $0x90] sm:$0xff] %v2030
    %2044 = vst.msk [vmem:[#allocation2 + $0x98] sm:$0xff] %vm82, %v2022
    %2045 = vst.msk [vmem:[#allocation2 + $0xa0] sm:$0xff] %vm89, %v2024
    %2046 = vst [vmem:[#allocation2 + $0xa8] sm:$0xff] %v2031
    %2047 = vst [vmem:[#allocation2 + $0xb0] sm:$0xff] %v2032
    %2048 = vst.msk [vmem:[#allocation2 + $0xb8] sm:$0xff] %vm82, %v2028
    %v2049 = vld [vmem:[#allocation2] sm:$0xff]
    %v2050 = vld [vmem:[#allocation2 + $0x8] sm:$0xff]
    %v2051 = vld [vmem:[#allocation2 + $0x10] sm:$0xff]
    %v2052 = vld [vmem:[#allocation2 + $0x18] sm:$0xff]
    %v2053 = vld [vmem:[#allocation2 + $0x20] sm:$0xff]
    %v2054 = vld [vmem:[#allocation2 + $0x28] sm:$0xff]
    %v2055 = vld [vmem:[#allocation2 + $0x30] sm:$0xff]
    %v2056 = vld [vmem:[#allocation2 + $0x38] sm:$0xff]
    %v2057 = vld [vmem:[#allocation2 + $0x40] sm:$0xff]
    %v2058 = vld [vmem:[#allocation2 + $0x48] sm:$0xff]
    %v2059 = vld [vmem:[#allocation2 + $0x50] sm:$0xff]
    %v2060 = vld [vmem:[#allocation2 + $0x58] sm:$0xff]
    %v2061 = vld [vmem:[#allocation2 + $0x60] sm:$0xff]
    %v2062 = vld [vmem:[#allocation2 + $0x68] sm:$0xff]
    %v2063 = vld [vmem:[#allocation2 + $0x70] sm:$0xff]
    %v2064 = vld [vmem:[#allocation2 + $0x78] sm:$0xff]
    %v2065 = vld [vmem:[#allocation2 + $0x80] sm:$0xff]
    %v2066 = vld [vmem:[#allocation2 + $0x88] sm:$0xff]
    %v2067 = vld [vmem:[#allocation2 + $0x90] sm:$0xff]
    %v2068 = vld [vmem:[#allocation2 + $0x98] sm:$0xff]
    %v2069 = vld [vmem:[#allocation2 + $0xa0] sm:$0xff]
    %v2070 = vld [vmem:[#allocation2 + $0xa8] sm:$0xff]
    %v2071 = vld [vmem:[#allocation2 + $0xb0] sm:$0xff]
    %v2072 = vld [vmem:[#allocation2 + $0xb8] sm:$0xff]
    %2097 = vrot.lane.b32.xlu0 %v2049, 81
    %v2098 = vpop.permute.xlu0 %2097
    %2099 = vrot.lane.b32.xlu0 %v2050, 81
    %v2100 = vpop.permute.xlu0 %2099
    %2101 = vrot.lane.b32.xlu0 %v2051, 81
    %v2102 = vpop.permute.xlu0 %2101
    %2103 = vrot.lane.b32.xlu0 %v2052, 81
    %v2104 = vpop.permute.xlu0 %2103
    %2105 = vrot.lane.b32.xlu0 %v2053, 81
    %v2106 = vpop.permute.xlu0 %2105
    %2107 = vrot.lane.b32.xlu0 %v2054, 81
    %v2108 = vpop.permute.xlu0 %2107
    %2109 = vrot.lane.b32.xlu0 %v2055, 81
    %v2110 = vpop.permute.xlu0 %2109
    %2111 = vrot.lane.b32.xlu0 %v2056, 81
    %v2112 = vpop.permute.xlu0 %2111
    %2113 = vrot.lane.b32.xlu0 %v2057, 81
    %v2114 = vpop.permute.xlu0 %2113
    %2115 = vrot.lane.b32.xlu0 %v2058, 81
    %v2116 = vpop.permute.xlu0 %2115
    %2117 = vrot.lane.b32.xlu0 %v2059, 81
    %v2118 = vpop.permute.xlu0 %2117
    %2119 = vrot.lane.b32.xlu0 %v2060, 81
    %v2120 = vpop.permute.xlu0 %2119
    %2121 = vrot.lane.b32.xlu0 %v2061, 81
    %v2122 = vpop.permute.xlu0 %2121
    %2123 = vrot.lane.b32.xlu0 %v2062, 81
    %v2124 = vpop.permute.xlu0 %2123
    %2125 = vrot.lane.b32.xlu0 %v2063, 81
    %v2126 = vpop.permute.xlu0 %2125
    %2127 = vrot.lane.b32.xlu0 %v2064, 81
    %v2128 = vpop.permute.xlu0 %2127
    %2129 = vrot.lane.b32.xlu0 %v2065, 81
    %v2130 = vpop.permute.xlu0 %2129
    %2131 = vrot.lane.b32.xlu0 %v2066, 81
    %v2132 = vpop.permute.xlu0 %2131
    %2133 = vrot.lane.b32.xlu0 %v2067, 81
    %v2134 = vpop.permute.xlu0 %2133
    %2135 = vrot.lane.b32.xlu0 %v2068, 81
    %v2136 = vpop.permute.xlu0 %2135
    %2137 = vrot.lane.b32.xlu0 %v2069, 81
    %v2138 = vpop.permute.xlu0 %2137
    %2139 = vrot.lane.b32.xlu0 %v2070, 81
    %v2140 = vpop.permute.xlu0 %2139
    %2141 = vrot.lane.b32.xlu0 %v2071, 81
    %v2142 = vpop.permute.xlu0 %2141
    %2143 = vrot.lane.b32.xlu0 %v2072, 81
    %v2144 = vpop.permute.xlu0 %2143
    %v2145 = vsel %vm569, %v2098, %v2100
    %v2146 = vsel %vm569, %v2100, %v2102
    %v2147 = vsel %vm569, %v2102, %v2104
    %v2148 = vsel %vm569, %v2106, %v2108
    %v2149 = vsel %vm569, %v2108, %v2110
    %v2150 = vsel %vm569, %v2110, %v2112
    %v2151 = vsel %vm569, %v2114, %v2116
    %v2152 = vsel %vm569, %v2116, %v2118
    %v2153 = vsel %vm569, %v2118, %v2120
    %v2154 = vsel %vm569, %v2122, %v2124
    %v2155 = vsel %vm569, %v2124, %v2126
    %v2156 = vsel %vm569, %v2126, %v2128
    %v2157 = vsel %vm569, %v2130, %v2132
    %v2158 = vsel %vm569, %v2132, %v2134
    %v2159 = vsel %vm569, %v2134, %v2136
    %v2160 = vsel %vm569, %v2138, %v2140
    %v2161 = vsel %vm569, %v2140, %v2142
    %v2162 = vsel %vm569, %v2142, %v2144
    %2181 = vst [vmem:[#allocation4] sm:$0xff] %v2145
    %2182 = vst [vmem:[#allocation4 + $0x8] sm:$0xff] %v2146
    %2183 = vst [vmem:[#allocation4 + $0x10] sm:$0xff] %v2147
    %2184 = vst [vmem:[#allocation4 + $0x18] sm:$0xff] %v2148
    %2185 = vst [vmem:[#allocation4 + $0x20] sm:$0xff] %v2149
    %2186 = vst [vmem:[#allocation4 + $0x28] sm:$0xff] %v2150
    %2187 = vst [vmem:[#allocation4 + $0x30] sm:$0xff] %v2151
    %2188 = vst [vmem:[#allocation4 + $0x38] sm:$0xff] %v2152
    %2189 = vst [vmem:[#allocation4 + $0x40] sm:$0xff] %v2153
    %2190 = vst [vmem:[#allocation4 + $0x48] sm:$0xff] %v2154
    %2191 = vst [vmem:[#allocation4 + $0x50] sm:$0xff] %v2155
    %2192 = vst [vmem:[#allocation4 + $0x58] sm:$0xff] %v2156
    %2193 = vst [vmem:[#allocation4 + $0x60] sm:$0xff] %v2157
    %2194 = vst [vmem:[#allocation4 + $0x68] sm:$0xff] %v2158
    %2195 = vst [vmem:[#allocation4 + $0x70] sm:$0xff] %v2159
    %2196 = vst [vmem:[#allocation4 + $0x78] sm:$0xff] %v2160
    %2197 = vst [vmem:[#allocation4 + $0x80] sm:$0xff] %v2161
    %2198 = vst [vmem:[#allocation4 + $0x88] sm:$0xff] %v2162
    %v2199 = vld [vmem:[#allocation2] sm:$0xff]
    %v2200 = vld [vmem:[#allocation2 + $0x8] sm:$0xff]
    %v2201 = vld [vmem:[#allocation2 + $0x10] sm:$0xff]
    %v2202 = vld [vmem:[#allocation2 + $0x18] sm:$0xff]
    %v2203 = vld [vmem:[#allocation2 + $0x20] sm:$0xff]
    %v2204 = vld [vmem:[#allocation2 + $0x28] sm:$0xff]
    %v2205 = vld [vmem:[#allocation2 + $0x30] sm:$0xff]
    %v2206 = vld [vmem:[#allocation2 + $0x38] sm:$0xff]
    %v2207 = vld [vmem:[#allocation2 + $0x40] sm:$0xff]
    %v2208 = vld [vmem:[#allocation2 + $0x48] sm:$0xff]
    %v2209 = vld [vmem:[#allocation2 + $0x50] sm:$0xff]
    %v2210 = vld [vmem:[#allocation2 + $0x58] sm:$0xff]
    %v2211 = vld [vmem:[#allocation2 + $0x60] sm:$0xff]
    %v2212 = vld [vmem:[#allocation2 + $0x68] sm:$0xff]
    %v2213 = vld [vmem:[#allocation2 + $0x70] sm:$0xff]
    %v2214 = vld [vmem:[#allocation2 + $0x78] sm:$0xff]
    %v2215 = vld [vmem:[#allocation2 + $0x80] sm:$0xff]
    %v2216 = vld [vmem:[#allocation2 + $0x88] sm:$0xff]
    %v2217 = vld [vmem:[#allocation2 + $0x90] sm:$0xff]
    %v2218 = vld [vmem:[#allocation2 + $0x98] sm:$0xff]
    %v2219 = vld [vmem:[#allocation2 + $0xa0] sm:$0xff]
    %v2220 = vld [vmem:[#allocation2 + $0xa8] sm:$0xff]
    %v2221 = vld [vmem:[#allocation2 + $0xb0] sm:$0xff]
    %v2222 = vld [vmem:[#allocation2 + $0xb8] sm:$0xff]
    %2247 = vrot.lane.b32.xlu0 %v2199, 80
    %v2248 = vpop.permute.xlu0 %2247
    %2249 = vrot.lane.b32.xlu0 %v2200, 80
    %v2250 = vpop.permute.xlu0 %2249
    %2251 = vrot.lane.b32.xlu0 %v2201, 80
    %v2252 = vpop.permute.xlu0 %2251
    %2253 = vrot.lane.b32.xlu0 %v2202, 80
    %v2254 = vpop.permute.xlu0 %2253
    %2255 = vrot.lane.b32.xlu0 %v2203, 80
    %v2256 = vpop.permute.xlu0 %2255
    %2257 = vrot.lane.b32.xlu0 %v2204, 80
    %v2258 = vpop.permute.xlu0 %2257
    %2259 = vrot.lane.b32.xlu0 %v2205, 80
    %v2260 = vpop.permute.xlu0 %2259
    %2261 = vrot.lane.b32.xlu0 %v2206, 80
    %v2262 = vpop.permute.xlu0 %2261
    %2263 = vrot.lane.b32.xlu0 %v2207, 80
    %v2264 = vpop.permute.xlu0 %2263
    %2265 = vrot.lane.b32.xlu0 %v2208, 80
    %v2266 = vpop.permute.xlu0 %2265
    %2267 = vrot.lane.b32.xlu0 %v2209, 80
    %v2268 = vpop.permute.xlu0 %2267
    %2269 = vrot.lane.b32.xlu0 %v2210, 80
    %v2270 = vpop.permute.xlu0 %2269
    %2271 = vrot.lane.b32.xlu0 %v2211, 80
    %v2272 = vpop.permute.xlu0 %2271
    %2273 = vrot.lane.b32.xlu0 %v2212, 80
    %v2274 = vpop.permute.xlu0 %2273
    %2275 = vrot.lane.b32.xlu0 %v2213, 80
    %v2276 = vpop.permute.xlu0 %2275
    %2277 = vrot.lane.b32.xlu0 %v2214, 80
    %v2278 = vpop.permute.xlu0 %2277
    %2279 = vrot.lane.b32.xlu0 %v2215, 80
    %v2280 = vpop.permute.xlu0 %2279
    %2281 = vrot.lane.b32.xlu0 %v2216, 80
    %v2282 = vpop.permute.xlu0 %2281
    %2283 = vrot.lane.b32.xlu0 %v2217, 80
    %v2284 = vpop.permute.xlu0 %2283
    %2285 = vrot.lane.b32.xlu0 %v2218, 80
    %v2286 = vpop.permute.xlu0 %2285
    %2287 = vrot.lane.b32.xlu0 %v2219, 80
    %v2288 = vpop.permute.xlu0 %2287
    %2289 = vrot.lane.b32.xlu0 %v2220, 80
    %v2290 = vpop.permute.xlu0 %2289
    %2291 = vrot.lane.b32.xlu0 %v2221, 80
    %v2292 = vpop.permute.xlu0 %2291
    %2293 = vrot.lane.b32.xlu0 %v2222, 80
    %v2294 = vpop.permute.xlu0 %2293
    %v2295 = vsel %vm620, %v2248, %v2250
    %v2296 = vsel %vm620, %v2250, %v2252
    %v2297 = vsel %vm620, %v2252, %v2254
    %v2298 = vsel %vm620, %v2256, %v2258
    %v2299 = vsel %vm620, %v2258, %v2260
    %v2300 = vsel %vm620, %v2260, %v2262
    %v2301 = vsel %vm620, %v2264, %v2266
    %v2302 = vsel %vm620, %v2266, %v2268
    %v2303 = vsel %vm620, %v2268, %v2270
    %v2304 = vsel %vm620, %v2272, %v2274
    %v2305 = vsel %vm620, %v2274, %v2276
    %v2306 = vsel %vm620, %v2276, %v2278
    %v2307 = vsel %vm620, %v2280, %v2282
    %v2308 = vsel %vm620, %v2282, %v2284
    %v2309 = vsel %vm620, %v2284, %v2286
    %v2310 = vsel %vm620, %v2288, %v2290
    %v2311 = vsel %vm620, %v2290, %v2292
    %v2312 = vsel %vm620, %v2292, %v2294
    %2331 = vst [vmem:[#allocation4 + $0x90] sm:$0xff] %v2295
    %2332 = vst [vmem:[#allocation4 + $0x98] sm:$0xff] %v2296
    %2333 = vst [vmem:[#allocation4 + $0xa0] sm:$0xff] %v2297
    %2334 = vst [vmem:[#allocation4 + $0xa8] sm:$0xff] %v2298
    %2335 = vst [vmem:[#allocation4 + $0xb0] sm:$0xff] %v2299
    %2336 = vst [vmem:[#allocation4 + $0xb8] sm:$0xff] %v2300
    %2337 = vst [vmem:[#allocation4 + $0xc0] sm:$0xff] %v2301
    %2338 = vst [vmem:[#allocation4 + $0xc8] sm:$0xff] %v2302
    %2339 = vst [vmem:[#allocation4 + $0xd0] sm:$0xff] %v2303
    %2340 = vst [vmem:[#allocation4 + $0xd8] sm:$0xff] %v2304
    %2341 = vst [vmem:[#allocation4 + $0xe0] sm:$0xff] %v2305
    %2342 = vst [vmem:[#allocation4 + $0xe8] sm:$0xff] %v2306
    %2343 = vst [vmem:[#allocation4 + $0xf0] sm:$0xff] %v2307
    %2344 = vst [vmem:[#allocation4 + $0xf8] sm:$0xff] %v2308
    %2345 = vst [vmem:[#allocation4 + $0x100] sm:$0xff] %v2309
    %2346 = vst [vmem:[#allocation4 + $0x108] sm:$0xff] %v2310
    %2347 = vst [vmem:[#allocation4 + $0x110] sm:$0xff] %v2311
    %2348 = vst [vmem:[#allocation4 + $0x118] sm:$0xff] %v2312
    %v2349 = vld [vmem:[#allocation2] sm:$0xff]
    %v2350 = vld [vmem:[#allocation2 + $0x8] sm:$0xff]
    %v2351 = vld [vmem:[#allocation2 + $0x10] sm:$0xff]
    %v2352 = vld [vmem:[#allocation2 + $0x18] sm:$0xff]
    %v2353 = vld [vmem:[#allocation2 + $0x20] sm:$0xff]
    %v2354 = vld [vmem:[#allocation2 + $0x28] sm:$0xff]
    %v2355 = vld [vmem:[#allocation2 + $0x30] sm:$0xff]
    %v2356 = vld [vmem:[#allocation2 + $0x38] sm:$0xff]
    %v2357 = vld [vmem:[#allocation2 + $0x40] sm:$0xff]
    %v2358 = vld [vmem:[#allocation2 + $0x48] sm:$0xff]
    %v2359 = vld [vmem:[#allocation2 + $0x50] sm:$0xff]
    %v2360 = vld [vmem:[#allocation2 + $0x58] sm:$0xff]
    %v2361 = vld [vmem:[#allocation2 + $0x60] sm:$0xff]
    %v2362 = vld [vmem:[#allocation2 + $0x68] sm:$0xff]
    %v2363 = vld [vmem:[#allocation2 + $0x70] sm:$0xff]
    %v2364 = vld [vmem:[#allocation2 + $0x78] sm:$0xff]
    %v2365 = vld [vmem:[#allocation2 + $0x80] sm:$0xff]
    %v2366 = vld [vmem:[#allocation2 + $0x88] sm:$0xff]
    %v2367 = vld [vmem:[#allocation2 + $0x90] sm:$0xff]
    %v2368 = vld [vmem:[#allocation2 + $0x98] sm:$0xff]
    %v2369 = vld [vmem:[#allocation2 + $0xa0] sm:$0xff]
    %v2370 = vld [vmem:[#allocation2 + $0xa8] sm:$0xff]
    %v2371 = vld [vmem:[#allocation2 + $0xb0] sm:$0xff]
    %v2372 = vld [vmem:[#allocation2 + $0xb8] sm:$0xff]
    %2397 = vrot.lane.b32.xlu0 %v2349, 79
    %v2398 = vpop.permute.xlu0 %2397
    %2399 = vrot.lane.b32.xlu0 %v2350, 79
    %v2400 = vpop.permute.xlu0 %2399
    %2401 = vrot.lane.b32.xlu0 %v2351, 79
    %v2402 = vpop.permute.xlu0 %2401
    %2403 = vrot.lane.b32.xlu0 %v2352, 79
    %v2404 = vpop.permute.xlu0 %2403
    %2405 = vrot.lane.b32.xlu0 %v2353, 79
    %v2406 = vpop.permute.xlu0 %2405
    %2407 = vrot.lane.b32.xlu0 %v2354, 79
    %v2408 = vpop.permute.xlu0 %2407
    %2409 = vrot.lane.b32.xlu0 %v2355, 79
    %v2410 = vpop.permute.xlu0 %2409
    %2411 = vrot.lane.b32.xlu0 %v2356, 79
    %v2412 = vpop.permute.xlu0 %2411
    %2413 = vrot.lane.b32.xlu0 %v2357, 79
    %v2414 = vpop.permute.xlu0 %2413
    %2415 = vrot.lane.b32.xlu0 %v2358, 79
    %v2416 = vpop.permute.xlu0 %2415
    %2417 = vrot.lane.b32.xlu0 %v2359, 79
    %v2418 = vpop.permute.xlu0 %2417
    %2419 = vrot.lane.b32.xlu0 %v2360, 79
    %v2420 = vpop.permute.xlu0 %2419
    %2421 = vrot.lane.b32.xlu0 %v2361, 79
    %v2422 = vpop.permute.xlu0 %2421
    %2423 = vrot.lane.b32.xlu0 %v2362, 79
    %v2424 = vpop.permute.xlu0 %2423
    %2425 = vrot.lane.b32.xlu0 %v2363, 79
    %v2426 = vpop.permute.xlu0 %2425
    %2427 = vrot.lane.b32.xlu0 %v2364, 79
    %v2428 = vpop.permute.xlu0 %2427
    %2429 = vrot.lane.b32.xlu0 %v2365, 79
    %v2430 = vpop.permute.xlu0 %2429
    %2431 = vrot.lane.b32.xlu0 %v2366, 79
    %v2432 = vpop.permute.xlu0 %2431
    %2433 = vrot.lane.b32.xlu0 %v2367, 79
    %v2434 = vpop.permute.xlu0 %2433
    %2435 = vrot.lane.b32.xlu0 %v2368, 79
    %v2436 = vpop.permute.xlu0 %2435
    %2437 = vrot.lane.b32.xlu0 %v2369, 79
    %v2438 = vpop.permute.xlu0 %2437
    %2439 = vrot.lane.b32.xlu0 %v2370, 79
    %v2440 = vpop.permute.xlu0 %2439
    %2441 = vrot.lane.b32.xlu0 %v2371, 79
    %v2442 = vpop.permute.xlu0 %2441
    %2443 = vrot.lane.b32.xlu0 %v2372, 79
    %v2444 = vpop.permute.xlu0 %2443
    %v2445 = vsel %vm671, %v2398, %v2400
    %v2446 = vsel %vm671, %v2400, %v2402
    %v2447 = vsel %vm671, %v2402, %v2404
    %v2448 = vsel %vm671, %v2406, %v2408
    %v2449 = vsel %vm671, %v2408, %v2410
    %v2450 = vsel %vm671, %v2410, %v2412
    %v2451 = vsel %vm671, %v2414, %v2416
    %v2452 = vsel %vm671, %v2416, %v2418
    %v2453 = vsel %vm671, %v2418, %v2420
    %v2454 = vsel %vm671, %v2422, %v2424
    %v2455 = vsel %vm671, %v2424, %v2426
    %v2456 = vsel %vm671, %v2426, %v2428
    %v2457 = vsel %vm671, %v2430, %v2432
    %v2458 = vsel %vm671, %v2432, %v2434
    %v2459 = vsel %vm671, %v2434, %v2436
    %v2460 = vsel %vm671, %v2438, %v2440
    %v2461 = vsel %vm671, %v2440, %v2442
    %v2462 = vsel %vm671, %v2442, %v2444
    %2481 = vst [vmem:[#allocation4 + $0x120] sm:$0xff] %v2445
    %2482 = vst [vmem:[#allocation4 + $0x128] sm:$0xff] %v2446
    %2483 = vst [vmem:[#allocation4 + $0x130] sm:$0xff] %v2447
    %2484 = vst [vmem:[#allocation4 + $0x138] sm:$0xff] %v2448
    %2485 = vst [vmem:[#allocation4 + $0x140] sm:$0xff] %v2449
    %2486 = vst [vmem:[#allocation4 + $0x148] sm:$0xff] %v2450
    %2487 = vst [vmem:[#allocation4 + $0x150] sm:$0xff] %v2451
    %2488 = vst [vmem:[#allocation4 + $0x158] sm:$0xff] %v2452
    %2489 = vst [vmem:[#allocation4 + $0x160] sm:$0xff] %v2453
    %2490 = vst [vmem:[#allocation4 + $0x168] sm:$0xff] %v2454
    %2491 = vst [vmem:[#allocation4 + $0x170] sm:$0xff] %v2455
    %2492 = vst [vmem:[#allocation4 + $0x178] sm:$0xff] %v2456
    %2493 = vst [vmem:[#allocation4 + $0x180] sm:$0xff] %v2457
    %2494 = vst [vmem:[#allocation4 + $0x188] sm:$0xff] %v2458
    %2495 = vst [vmem:[#allocation4 + $0x190] sm:$0xff] %v2459
    %2496 = vst [vmem:[#allocation4 + $0x198] sm:$0xff] %v2460
    %2497 = vst [vmem:[#allocation4 + $0x1a0] sm:$0xff] %v2461
    %2498 = vst [vmem:[#allocation4 + $0x1a8] sm:$0xff] %v2462
    %v2499 = vld [vmem:[#allocation2] sm:$0xff]
    %v2500 = vld [vmem:[#allocation2 + $0x8] sm:$0xff]
    %v2501 = vld [vmem:[#allocation2 + $0x10] sm:$0xff]
    %v2502 = vld [vmem:[#allocation2 + $0x18] sm:$0xff]
    %v2503 = vld [vmem:[#allocation2 + $0x20] sm:$0xff]
    %v2504 = vld [vmem:[#allocation2 + $0x28] sm:$0xff]
    %v2505 = vld [vmem:[#allocation2 + $0x30] sm:$0xff]
    %v2506 = vld [vmem:[#allocation2 + $0x38] sm:$0xff]
    %v2507 = vld [vmem:[#allocation2 + $0x40] sm:$0xff]
    %v2508 = vld [vmem:[#allocation2 + $0x48] sm:$0xff]
    %v2509 = vld [vmem:[#allocation2 + $0x50] sm:$0xff]
    %v2510 = vld [vmem:[#allocation2 + $0x58] sm:$0xff]
    %v2511 = vld [vmem:[#allocation2 + $0x60] sm:$0xff]
    %v2512 = vld [vmem:[#allocation2 + $0x68] sm:$0xff]
    %v2513 = vld [vmem:[#allocation2 + $0x70] sm:$0xff]
    %v2514 = vld [vmem:[#allocation2 + $0x78] sm:$0xff]
    %v2515 = vld [vmem:[#allocation2 + $0x80] sm:$0xff]
    %v2516 = vld [vmem:[#allocation2 + $0x88] sm:$0xff]
    %v2517 = vld [vmem:[#allocation2 + $0x90] sm:$0xff]
    %v2518 = vld [vmem:[#allocation2 + $0x98] sm:$0xff]
    %v2519 = vld [vmem:[#allocation2 + $0xa0] sm:$0xff]
    %v2520 = vld [vmem:[#allocation2 + $0xa8] sm:$0xff]
    %v2521 = vld [vmem:[#allocation2 + $0xb0] sm:$0xff]
    %v2522 = vld [vmem:[#allocation2 + $0xb8] sm:$0xff]
    %2547 = vrot.lane.b32.xlu0 %v2499, 65
    %v2548 = vpop.permute.xlu0 %2547
    %2549 = vrot.lane.b32.xlu0 %v2500, 65
    %v2550 = vpop.permute.xlu0 %2549
    %2551 = vrot.lane.b32.xlu0 %v2501, 65
    %v2552 = vpop.permute.xlu0 %2551
    %2553 = vrot.lane.b32.xlu0 %v2502, 65
    %v2554 = vpop.permute.xlu0 %2553
    %2555 = vrot.lane.b32.xlu0 %v2503, 65
    %v2556 = vpop.permute.xlu0 %2555
    %2557 = vrot.lane.b32.xlu0 %v2504, 65
    %v2558 = vpop.permute.xlu0 %2557
    %2559 = vrot.lane.b32.xlu0 %v2505, 65
    %v2560 = vpop.permute.xlu0 %2559
    %2561 = vrot.lane.b32.xlu0 %v2506, 65
    %v2562 = vpop.permute.xlu0 %2561
    %2563 = vrot.lane.b32.xlu0 %v2507, 65
    %v2564 = vpop.permute.xlu0 %2563
    %2565 = vrot.lane.b32.xlu0 %v2508, 65
    %v2566 = vpop.permute.xlu0 %2565
    %2567 = vrot.lane.b32.xlu0 %v2509, 65
    %v2568 = vpop.permute.xlu0 %2567
    %2569 = vrot.lane.b32.xlu0 %v2510, 65
    %v2570 = vpop.permute.xlu0 %2569
    %2571 = vrot.lane.b32.xlu0 %v2511, 65
    %v2572 = vpop.permute.xlu0 %2571
    %2573 = vrot.lane.b32.xlu0 %v2512, 65
    %v2574 = vpop.permute.xlu0 %2573
    %2575 = vrot.lane.b32.xlu0 %v2513, 65
    %v2576 = vpop.permute.xlu0 %2575
    %2577 = vrot.lane.b32.xlu0 %v2514, 65
    %v2578 = vpop.permute.xlu0 %2577
    %2579 = vrot.lane.b32.xlu0 %v2515, 65
    %v2580 = vpop.permute.xlu0 %2579
    %2581 = vrot.lane.b32.xlu0 %v2516, 65
    %v2582 = vpop.permute.xlu0 %2581
    %2583 = vrot.lane.b32.xlu0 %v2517, 65
    %v2584 = vpop.permute.xlu0 %2583
    %2585 = vrot.lane.b32.xlu0 %v2518, 65
    %v2586 = vpop.permute.xlu0 %2585
    %2587 = vrot.lane.b32.xlu0 %v2519, 65
    %v2588 = vpop.permute.xlu0 %2587
    %2589 = vrot.lane.b32.xlu0 %v2520, 65
    %v2590 = vpop.permute.xlu0 %2589
    %2591 = vrot.lane.b32.xlu0 %v2521, 65
    %v2592 = vpop.permute.xlu0 %2591
    %2593 = vrot.lane.b32.xlu0 %v2522, 65
    %v2594 = vpop.permute.xlu0 %2593
    %v2595 = vsel %vm722, %v2548, %v2550
    %v2596 = vsel %vm722, %v2550, %v2552
    %v2597 = vsel %vm722, %v2552, %v2554
    %v2598 = vsel %vm722, %v2556, %v2558
    %v2599 = vsel %vm722, %v2558, %v2560
    %v2600 = vsel %vm722, %v2560, %v2562
    %v2601 = vsel %vm722, %v2564, %v2566
    %v2602 = vsel %vm722, %v2566, %v2568
    %v2603 = vsel %vm722, %v2568, %v2570
    %v2604 = vsel %vm722, %v2572, %v2574
    %v2605 = vsel %vm722, %v2574, %v2576
    %v2606 = vsel %vm722, %v2576, %v2578
    %v2607 = vsel %vm722, %v2580, %v2582
    %v2608 = vsel %vm722, %v2582, %v2584
    %v2609 = vsel %vm722, %v2584, %v2586
    %v2610 = vsel %vm722, %v2588, %v2590
    %v2611 = vsel %vm722, %v2590, %v2592
    %v2612 = vsel %vm722, %v2592, %v2594
    %2631 = vst [vmem:[#allocation4 + $0x1b0] sm:$0xff] %v2595
    %2632 = vst [vmem:[#allocation4 + $0x1b8] sm:$0xff] %v2596
    %2633 = vst [vmem:[#allocation4 + $0x1c0] sm:$0xff] %v2597
    %2634 = vst [vmem:[#allocation4 + $0x1c8] sm:$0xff] %v2598
    %2635 = vst [vmem:[#allocation4 + $0x1d0] sm:$0xff] %v2599
    %2636 = vst [vmem:[#allocation4 + $0x1d8] sm:$0xff] %v2600
    %2637 = vst [vmem:[#allocation4 + $0x1e0] sm:$0xff] %v2601
    %2638 = vst [vmem:[#allocation4 + $0x1e8] sm:$0xff] %v2602
    %2639 = vst [vmem:[#allocation4 + $0x1f0] sm:$0xff] %v2603
    %2640 = vst [vmem:[#allocation4 + $0x1f8] sm:$0xff] %v2604
    %2641 = vst [vmem:[#allocation4 + $0x200] sm:$0xff] %v2605
    %2642 = vst [vmem:[#allocation4 + $0x208] sm:$0xff] %v2606
    %2643 = vst [vmem:[#allocation4 + $0x210] sm:$0xff] %v2607
    %2644 = vst [vmem:[#allocation4 + $0x218] sm:$0xff] %v2608
    %2645 = vst [vmem:[#allocation4 + $0x220] sm:$0xff] %v2609
    %2646 = vst [vmem:[#allocation4 + $0x228] sm:$0xff] %v2610
    %2647 = vst [vmem:[#allocation4 + $0x230] sm:$0xff] %v2611
    %2648 = vst [vmem:[#allocation4 + $0x238] sm:$0xff] %v2612
    %v2649 = vld [vmem:[#allocation2] sm:$0xff]
    %v2650 = vld [vmem:[#allocation2 + $0x8] sm:$0xff]
    %v2651 = vld [vmem:[#allocation2 + $0x10] sm:$0xff]
    %v2652 = vld [vmem:[#allocation2 + $0x18] sm:$0xff]
    %v2653 = vld [vmem:[#allocation2 + $0x20] sm:$0xff]
    %v2654 = vld [vmem:[#allocation2 + $0x28] sm:$0xff]
    %v2655 = vld [vmem:[#allocation2 + $0x30] sm:$0xff]
    %v2656 = vld [vmem:[#allocation2 + $0x38] sm:$0xff]
    %v2657 = vld [vmem:[#allocation2 + $0x40] sm:$0xff]
    %v2658 = vld [vmem:[#allocation2 + $0x48] sm:$0xff]
    %v2659 = vld [vmem:[#allocation2 + $0x50] sm:$0xff]
    %v2660 = vld [vmem:[#allocation2 + $0x58] sm:$0xff]
    %v2661 = vld [vmem:[#allocation2 + $0x60] sm:$0xff]
    %v2662 = vld [vmem:[#allocation2 + $0x68] sm:$0xff]
    %v2663 = vld [vmem:[#allocation2 + $0x70] sm:$0xff]
    %v2664 = vld [vmem:[#allocation2 + $0x78] sm:$0xff]
    %v2665 = vld [vmem:[#allocation2 + $0x80] sm:$0xff]
    %v2666 = vld [vmem:[#allocation2 + $0x88] sm:$0xff]
    %v2667 = vld [vmem:[#allocation2 + $0x90] sm:$0xff]
    %v2668 = vld [vmem:[#allocation2 + $0x98] sm:$0xff]
    %v2669 = vld [vmem:[#allocation2 + $0xa0] sm:$0xff]
    %v2670 = vld [vmem:[#allocation2 + $0xa8] sm:$0xff]
    %v2671 = vld [vmem:[#allocation2 + $0xb0] sm:$0xff]
    %v2672 = vld [vmem:[#allocation2 + $0xb8] sm:$0xff]
    %2697 = vrot.lane.b32.xlu0 %v2649, 64
    %v2698 = vpop.permute.xlu0 %2697
    %2699 = vrot.lane.b32.xlu0 %v2650, 64
    %v2700 = vpop.permute.xlu0 %2699
    %2701 = vrot.lane.b32.xlu0 %v2651, 64
    %v2702 = vpop.permute.xlu0 %2701
    %2703 = vrot.lane.b32.xlu0 %v2652, 64
    %v2704 = vpop.permute.xlu0 %2703
    %2705 = vrot.lane.b32.xlu0 %v2653, 64
    %v2706 = vpop.permute.xlu0 %2705
    %2707 = vrot.lane.b32.xlu0 %v2654, 64
    %v2708 = vpop.permute.xlu0 %2707
    %2709 = vrot.lane.b32.xlu0 %v2655, 64
    %v2710 = vpop.permute.xlu0 %2709
    %2711 = vrot.lane.b32.xlu0 %v2656, 64
    %v2712 = vpop.permute.xlu0 %2711
    %2713 = vrot.lane.b32.xlu0 %v2657, 64
    %v2714 = vpop.permute.xlu0 %2713
    %2715 = vrot.lane.b32.xlu0 %v2658, 64
    %v2716 = vpop.permute.xlu0 %2715
    %2717 = vrot.lane.b32.xlu0 %v2659, 64
    %v2718 = vpop.permute.xlu0 %2717
    %2719 = vrot.lane.b32.xlu0 %v2660, 64
    %v2720 = vpop.permute.xlu0 %2719
    %2721 = vrot.lane.b32.xlu0 %v2661, 64
    %v2722 = vpop.permute.xlu0 %2721
    %2723 = vrot.lane.b32.xlu0 %v2662, 64
    %v2724 = vpop.permute.xlu0 %2723
    %2725 = vrot.lane.b32.xlu0 %v2663, 64
    %v2726 = vpop.permute.xlu0 %2725
    %2727 = vrot.lane.b32.xlu0 %v2664, 64
    %v2728 = vpop.permute.xlu0 %2727
    %2729 = vrot.lane.b32.xlu0 %v2665, 64
    %v2730 = vpop.permute.xlu0 %2729
    %2731 = vrot.lane.b32.xlu0 %v2666, 64
    %v2732 = vpop.permute.xlu0 %2731
    %2733 = vrot.lane.b32.xlu0 %v2667, 64
    %v2734 = vpop.permute.xlu0 %2733
    %2735 = vrot.lane.b32.xlu0 %v2668, 64
    %v2736 = vpop.permute.xlu0 %2735
    %2737 = vrot.lane.b32.xlu0 %v2669, 64
    %v2738 = vpop.permute.xlu0 %2737
    %2739 = vrot.lane.b32.xlu0 %v2670, 64
    %v2740 = vpop.permute.xlu0 %2739
    %2741 = vrot.lane.b32.xlu0 %v2671, 64
    %v2742 = vpop.permute.xlu0 %2741
    %2743 = vrot.lane.b32.xlu0 %v2672, 64
    %v2744 = vpop.permute.xlu0 %2743
    %v2745 = vsel %vm82, %v2698, %v2700
    %v2746 = vsel %vm82, %v2700, %v2702
    %v2747 = vsel %vm82, %v2702, %v2704
    %v2748 = vsel %vm82, %v2706, %v2708
    %v2749 = vsel %vm82, %v2708, %v2710
    %v2750 = vsel %vm82, %v2710, %v2712
    %v2751 = vsel %vm82, %v2714, %v2716
    %v2752 = vsel %vm82, %v2716, %v2718
    %v2753 = vsel %vm82, %v2718, %v2720
    %v2754 = vsel %vm82, %v2722, %v2724
    %v2755 = vsel %vm82, %v2724, %v2726
    %v2756 = vsel %vm82, %v2726, %v2728
    %v2757 = vsel %vm82, %v2730, %v2732
    %v2758 = vsel %vm82, %v2732, %v2734
    %v2759 = vsel %vm82, %v2734, %v2736
    %v2760 = vsel %vm82, %v2738, %v2740
    %v2761 = vsel %vm82, %v2740, %v2742
    %v2762 = vsel %vm82, %v2742, %v2744
    %2781 = vst [vmem:[#allocation4 + $0x240] sm:$0xff] %v2745
    %2782 = vst [vmem:[#allocation4 + $0x248] sm:$0xff] %v2746
    %2783 = vst [vmem:[#allocation4 + $0x250] sm:$0xff] %v2747
    %2784 = vst [vmem:[#allocation4 + $0x258] sm:$0xff] %v2748
    %2785 = vst [vmem:[#allocation4 + $0x260] sm:$0xff] %v2749
    %2786 = vst [vmem:[#allocation4 + $0x268] sm:$0xff] %v2750
    %2787 = vst [vmem:[#allocation4 + $0x270] sm:$0xff] %v2751
    %2788 = vst [vmem:[#allocation4 + $0x278] sm:$0xff] %v2752
    %2789 = vst [vmem:[#allocation4 + $0x280] sm:$0xff] %v2753
    %2790 = vst [vmem:[#allocation4 + $0x288] sm:$0xff] %v2754
    %2791 = vst [vmem:[#allocation4 + $0x290] sm:$0xff] %v2755
    %2792 = vst [vmem:[#allocation4 + $0x298] sm:$0xff] %v2756
    %2793 = vst [vmem:[#allocation4 + $0x2a0] sm:$0xff] %v2757
    %2794 = vst [vmem:[#allocation4 + $0x2a8] sm:$0xff] %v2758
    %2795 = vst [vmem:[#allocation4 + $0x2b0] sm:$0xff] %v2759
    %2796 = vst [vmem:[#allocation4 + $0x2b8] sm:$0xff] %v2760
    %2797 = vst [vmem:[#allocation4 + $0x2c0] sm:$0xff] %v2761
    %2798 = vst [vmem:[#allocation4 + $0x2c8] sm:$0xff] %v2762
    %v2799 = vld [vmem:[#allocation2] sm:$0xff]
    %v2800 = vld [vmem:[#allocation2 + $0x8] sm:$0xff]
    %v2801 = vld [vmem:[#allocation2 + $0x10] sm:$0xff]
    %v2802 = vld [vmem:[#allocation2 + $0x18] sm:$0xff]
    %v2803 = vld [vmem:[#allocation2 + $0x20] sm:$0xff]
    %v2804 = vld [vmem:[#allocation2 + $0x28] sm:$0xff]
    %v2805 = vld [vmem:[#allocation2 + $0x30] sm:$0xff]
    %v2806 = vld [vmem:[#allocation2 + $0x38] sm:$0xff]
    %v2807 = vld [vmem:[#allocation2 + $0x40] sm:$0xff]
    %v2808 = vld [vmem:[#allocation2 + $0x48] sm:$0xff]
    %v2809 = vld [vmem:[#allocation2 + $0x50] sm:$0xff]
    %v2810 = vld [vmem:[#allocation2 + $0x58] sm:$0xff]
    %v2811 = vld [vmem:[#allocation2 + $0x60] sm:$0xff]
    %v2812 = vld [vmem:[#allocation2 + $0x68] sm:$0xff]
    %v2813 = vld [vmem:[#allocation2 + $0x70] sm:$0xff]
    %v2814 = vld [vmem:[#allocation2 + $0x78] sm:$0xff]
    %v2815 = vld [vmem:[#allocation2 + $0x80] sm:$0xff]
    %v2816 = vld [vmem:[#allocation2 + $0x88] sm:$0xff]
    %v2817 = vld [vmem:[#allocation2 + $0x90] sm:$0xff]
    %v2818 = vld [vmem:[#allocation2 + $0x98] sm:$0xff]
    %v2819 = vld [vmem:[#allocation2 + $0xa0] sm:$0xff]
    %v2820 = vld [vmem:[#allocation2 + $0xa8] sm:$0xff]
    %v2821 = vld [vmem:[#allocation2 + $0xb0] sm:$0xff]
    %v2822 = vld [vmem:[#allocation2 + $0xb8] sm:$0xff]
    %2847 = vrot.lane.b32.xlu0 %v2799, 63
    %v2848 = vpop.permute.xlu0 %2847
    %2849 = vrot.lane.b32.xlu0 %v2800, 63
    %v2850 = vpop.permute.xlu0 %2849
    %2851 = vrot.lane.b32.xlu0 %v2801, 63
    %v2852 = vpop.permute.xlu0 %2851
    %2853 = vrot.lane.b32.xlu0 %v2802, 63
    %v2854 = vpop.permute.xlu0 %2853
    %2855 = vrot.lane.b32.xlu0 %v2803, 63
    %v2856 = vpop.permute.xlu0 %2855
    %2857 = vrot.lane.b32.xlu0 %v2804, 63
    %v2858 = vpop.permute.xlu0 %2857
    %2859 = vrot.lane.b32.xlu0 %v2805, 63
    %v2860 = vpop.permute.xlu0 %2859
    %2861 = vrot.lane.b32.xlu0 %v2806, 63
    %v2862 = vpop.permute.xlu0 %2861
    %2863 = vrot.lane.b32.xlu0 %v2807, 63
    %v2864 = vpop.permute.xlu0 %2863
    %2865 = vrot.lane.b32.xlu0 %v2808, 63
    %v2866 = vpop.permute.xlu0 %2865
    %2867 = vrot.lane.b32.xlu0 %v2809, 63
    %v2868 = vpop.permute.xlu0 %2867
    %2869 = vrot.lane.b32.xlu0 %v2810, 63
    %v2870 = vpop.permute.xlu0 %2869
    %2871 = vrot.lane.b32.xlu0 %v2811, 63
    %v2872 = vpop.permute.xlu0 %2871
    %2873 = vrot.lane.b32.xlu0 %v2812, 63
    %v2874 = vpop.permute.xlu0 %2873
    %2875 = vrot.lane.b32.xlu0 %v2813, 63
    %v2876 = vpop.permute.xlu0 %2875
    %2877 = vrot.lane.b32.xlu0 %v2814, 63
    %v2878 = vpop.permute.xlu0 %2877
    %2879 = vrot.lane.b32.xlu0 %v2815, 63
    %v2880 = vpop.permute.xlu0 %2879
    %2881 = vrot.lane.b32.xlu0 %v2816, 63
    %v2882 = vpop.permute.xlu0 %2881
    %2883 = vrot.lane.b32.xlu0 %v2817, 63
    %v2884 = vpop.permute.xlu0 %2883
    %2885 = vrot.lane.b32.xlu0 %v2818, 63
    %v2886 = vpop.permute.xlu0 %2885
    %2887 = vrot.lane.b32.xlu0 %v2819, 63
    %v2888 = vpop.permute.xlu0 %2887
    %2889 = vrot.lane.b32.xlu0 %v2820, 63
    %v2890 = vpop.permute.xlu0 %2889
    %2891 = vrot.lane.b32.xlu0 %v2821, 63
    %v2892 = vpop.permute.xlu0 %2891
    %2893 = vrot.lane.b32.xlu0 %v2822, 63
    %v2894 = vpop.permute.xlu0 %2893
    %v2895 = vsel %vm823, %v2848, %v2850
    %v2896 = vsel %vm823, %v2850, %v2852
    %v2897 = vsel %vm823, %v2852, %v2854
    %v2898 = vsel %vm823, %v2856, %v2858
    %v2899 = vsel %vm823, %v2858, %v2860
    %v2900 = vsel %vm823, %v2860, %v2862
    %v2901 = vsel %vm823, %v2864, %v2866
    %v2902 = vsel %vm823, %v2866, %v2868
    %v2903 = vsel %vm823, %v2868, %v2870
    %v2904 = vsel %vm823, %v2872, %v2874
    %v2905 = vsel %vm823, %v2874, %v2876
    %v2906 = vsel %vm823, %v2876, %v2878
    %v2907 = vsel %vm823, %v2880, %v2882
    %v2908 = vsel %vm823, %v2882, %v2884
    %v2909 = vsel %vm823, %v2884, %v2886
    %v2910 = vsel %vm823, %v2888, %v2890
    %v2911 = vsel %vm823, %v2890, %v2892
    %v2912 = vsel %vm823, %v2892, %v2894
    %2931 = vst [vmem:[#allocation4 + $0x2d0] sm:$0xff] %v2895
    %2932 = vst [vmem:[#allocation4 + $0x2d8] sm:$0xff] %v2896
    %2933 = vst [vmem:[#allocation4 + $0x2e0] sm:$0xff] %v2897
    %2934 = vst [vmem:[#allocation4 + $0x2e8] sm:$0xff] %v2898
    %2935 = vst [vmem:[#allocation4 + $0x2f0] sm:$0xff] %v2899
    %2936 = vst [vmem:[#allocation4 + $0x2f8] sm:$0xff] %v2900
    %2937 = vst [vmem:[#allocation4 + $0x300] sm:$0xff] %v2901
    %2938 = vst [vmem:[#allocation4 + $0x308] sm:$0xff] %v2902
    %2939 = vst [vmem:[#allocation4 + $0x310] sm:$0xff] %v2903
    %2940 = vst [vmem:[#allocation4 + $0x318] sm:$0xff] %v2904
    %2941 = vst [vmem:[#allocation4 + $0x320] sm:$0xff] %v2905
    %2942 = vst [vmem:[#allocation4 + $0x328] sm:$0xff] %v2906
    %2943 = vst [vmem:[#allocation4 + $0x330] sm:$0xff] %v2907
    %2944 = vst [vmem:[#allocation4 + $0x338] sm:$0xff] %v2908
    %2945 = vst [vmem:[#allocation4 + $0x340] sm:$0xff] %v2909
    %2946 = vst [vmem:[#allocation4 + $0x348] sm:$0xff] %v2910
    %2947 = vst [vmem:[#allocation4 + $0x350] sm:$0xff] %v2911
    %2948 = vst [vmem:[#allocation4 + $0x358] sm:$0xff] %v2912
    %v2949 = vld [vmem:[#allocation2] sm:$0xff]
    %v2950 = vld [vmem:[#allocation2 + $0x8] sm:$0xff]
    %v2951 = vld [vmem:[#allocation2 + $0x10] sm:$0xff]
    %v2952 = vld [vmem:[#allocation2 + $0x18] sm:$0xff]
    %v2953 = vld [vmem:[#allocation2 + $0x20] sm:$0xff]
    %v2954 = vld [vmem:[#allocation2 + $0x28] sm:$0xff]
    %v2955 = vld [vmem:[#allocation2 + $0x30] sm:$0xff]
    %v2956 = vld [vmem:[#allocation2 + $0x38] sm:$0xff]
    %v2957 = vld [vmem:[#allocation2 + $0x40] sm:$0xff]
    %v2958 = vld [vmem:[#allocation2 + $0x48] sm:$0xff]
    %v2959 = vld [vmem:[#allocation2 + $0x50] sm:$0xff]
    %v2960 = vld [vmem:[#allocation2 + $0x58] sm:$0xff]
    %v2961 = vld [vmem:[#allocation2 + $0x60] sm:$0xff]
    %v2962 = vld [vmem:[#allocation2 + $0x68] sm:$0xff]
    %v2963 = vld [vmem:[#allocation2 + $0x70] sm:$0xff]
    %v2964 = vld [vmem:[#allocation2 + $0x78] sm:$0xff]
    %v2965 = vld [vmem:[#allocation2 + $0x80] sm:$0xff]
    %v2966 = vld [vmem:[#allocation2 + $0x88] sm:$0xff]
    %v2967 = vld [vmem:[#allocation2 + $0x90] sm:$0xff]
    %v2968 = vld [vmem:[#allocation2 + $0x98] sm:$0xff]
    %v2969 = vld [vmem:[#allocation2 + $0xa0] sm:$0xff]
    %v2970 = vld [vmem:[#allocation2 + $0xa8] sm:$0xff]
    %v2971 = vld [vmem:[#allocation2 + $0xb0] sm:$0xff]
    %v2972 = vld [vmem:[#allocation2 + $0xb8] sm:$0xff]
    %2997 = vrot.lane.b32.xlu0 %v2949, 49
    %v2998 = vpop.permute.xlu0 %2997
    %2999 = vrot.lane.b32.xlu0 %v2950, 49
    %v3000 = vpop.permute.xlu0 %2999
    %3001 = vrot.lane.b32.xlu0 %v2951, 49
    %v3002 = vpop.permute.xlu0 %3001
    %3003 = vrot.lane.b32.xlu0 %v2952, 49
    %v3004 = vpop.permute.xlu0 %3003
    %3005 = vrot.lane.b32.xlu0 %v2953, 49
    %v3006 = vpop.permute.xlu0 %3005
    %3007 = vrot.lane.b32.xlu0 %v2954, 49
    %v3008 = vpop.permute.xlu0 %3007
    %3009 = vrot.lane.b32.xlu0 %v2955, 49
    %v3010 = vpop.permute.xlu0 %3009
    %3011 = vrot.lane.b32.xlu0 %v2956, 49
    %v3012 = vpop.permute.xlu0 %3011
    %3013 = vrot.lane.b32.xlu0 %v2957, 49
    %v3014 = vpop.permute.xlu0 %3013
    %3015 = vrot.lane.b32.xlu0 %v2958, 49
    %v3016 = vpop.permute.xlu0 %3015
    %3017 = vrot.lane.b32.xlu0 %v2959, 49
    %v3018 = vpop.permute.xlu0 %3017
    %3019 = vrot.lane.b32.xlu0 %v2960, 49
    %v3020 = vpop.permute.xlu0 %3019
    %3021 = vrot.lane.b32.xlu0 %v2961, 49
    %v3022 = vpop.permute.xlu0 %3021
    %3023 = vrot.lane.b32.xlu0 %v2962, 49
    %v3024 = vpop.permute.xlu0 %3023
    %3025 = vrot.lane.b32.xlu0 %v2963, 49
    %v3026 = vpop.permute.xlu0 %3025
    %3027 = vrot.lane.b32.xlu0 %v2964, 49
    %v3028 = vpop.permute.xlu0 %3027
    %3029 = vrot.lane.b32.xlu0 %v2965, 49
    %v3030 = vpop.permute.xlu0 %3029
    %3031 = vrot.lane.b32.xlu0 %v2966, 49
    %v3032 = vpop.permute.xlu0 %3031
    %3033 = vrot.lane.b32.xlu0 %v2967, 49
    %v3034 = vpop.permute.xlu0 %3033
    %3035 = vrot.lane.b32.xlu0 %v2968, 49
    %v3036 = vpop.permute.xlu0 %3035
    %3037 = vrot.lane.b32.xlu0 %v2969, 49
    %v3038 = vpop.permute.xlu0 %3037
    %3039 = vrot.lane.b32.xlu0 %v2970, 49
    %v3040 = vpop.permute.xlu0 %3039
    %3041 = vrot.lane.b32.xlu0 %v2971, 49
    %v3042 = vpop.permute.xlu0 %3041
    %3043 = vrot.lane.b32.xlu0 %v2972, 49
    %v3044 = vpop.permute.xlu0 %3043
    %v3045 = vsel %vm874, %v2998, %v3000
    %v3046 = vsel %vm874, %v3000, %v3002
    %v3047 = vsel %vm874, %v3002, %v3004
    %v3048 = vsel %vm874, %v3006, %v3008
    %v3049 = vsel %vm874, %v3008, %v3010
    %v3050 = vsel %vm874, %v3010, %v3012
    %v3051 = vsel %vm874, %v3014, %v3016
    %v3052 = vsel %vm874, %v3016, %v3018
    %v3053 = vsel %vm874, %v3018, %v3020
    %v3054 = vsel %vm874, %v3022, %v3024
    %v3055 = vsel %vm874, %v3024, %v3026
    %v3056 = vsel %vm874, %v3026, %v3028
    %v3057 = vsel %vm874, %v3030, %v3032
    %v3058 = vsel %vm874, %v3032, %v3034
    %v3059 = vsel %vm874, %v3034, %v3036
    %v3060 = vsel %vm874, %v3038, %v3040
    %v3061 = vsel %vm874, %v3040, %v3042
    %v3062 = vsel %vm874, %v3042, %v3044
    %3081 = vst [vmem:[#allocation4 + $0x360] sm:$0xff] %v3045
    %3082 = vst [vmem:[#allocation4 + $0x368] sm:$0xff] %v3046
    %3083 = vst [vmem:[#allocation4 + $0x370] sm:$0xff] %v3047
    %3084 = vst [vmem:[#allocation4 + $0x378] sm:$0xff] %v3048
    %3085 = vst [vmem:[#allocation4 + $0x380] sm:$0xff] %v3049
    %3086 = vst [vmem:[#allocation4 + $0x388] sm:$0xff] %v3050
    %3087 = vst [vmem:[#allocation4 + $0x390] sm:$0xff] %v3051
    %3088 = vst [vmem:[#allocation4 + $0x398] sm:$0xff] %v3052
    %3089 = vst [vmem:[#allocation4 + $0x3a0] sm:$0xff] %v3053
    %3090 = vst [vmem:[#allocation4 + $0x3a8] sm:$0xff] %v3054
    %3091 = vst [vmem:[#allocation4 + $0x3b0] sm:$0xff] %v3055
    %3092 = vst [vmem:[#allocation4 + $0x3b8] sm:$0xff] %v3056
    %3093 = vst [vmem:[#allocation4 + $0x3c0] sm:$0xff] %v3057
    %3094 = vst [vmem:[#allocation4 + $0x3c8] sm:$0xff] %v3058
    %3095 = vst [vmem:[#allocation4 + $0x3d0] sm:$0xff] %v3059
    %3096 = vst [vmem:[#allocation4 + $0x3d8] sm:$0xff] %v3060
    %3097 = vst [vmem:[#allocation4 + $0x3e0] sm:$0xff] %v3061
    %3098 = vst [vmem:[#allocation4 + $0x3e8] sm:$0xff] %v3062
    %v3099 = vld [vmem:[#allocation2] sm:$0xff]
    %v3100 = vld [vmem:[#allocation2 + $0x8] sm:$0xff]
    %v3101 = vld [vmem:[#allocation2 + $0x10] sm:$0xff]
    %v3102 = vld [vmem:[#allocation2 + $0x18] sm:$0xff]
    %v3103 = vld [vmem:[#allocation2 + $0x20] sm:$0xff]
    %v3104 = vld [vmem:[#allocation2 + $0x28] sm:$0xff]
    %v3105 = vld [vmem:[#allocation2 + $0x30] sm:$0xff]
    %v3106 = vld [vmem:[#allocation2 + $0x38] sm:$0xff]
    %v3107 = vld [vmem:[#allocation2 + $0x40] sm:$0xff]
    %v3108 = vld [vmem:[#allocation2 + $0x48] sm:$0xff]
    %v3109 = vld [vmem:[#allocation2 + $0x50] sm:$0xff]
    %v3110 = vld [vmem:[#allocation2 + $0x58] sm:$0xff]
    %v3111 = vld [vmem:[#allocation2 + $0x60] sm:$0xff]
    %v3112 = vld [vmem:[#allocation2 + $0x68] sm:$0xff]
    %v3113 = vld [vmem:[#allocation2 + $0x70] sm:$0xff]
    %v3114 = vld [vmem:[#allocation2 + $0x78] sm:$0xff]
    %v3115 = vld [vmem:[#allocation2 + $0x80] sm:$0xff]
    %v3116 = vld [vmem:[#allocation2 + $0x88] sm:$0xff]
    %v3117 = vld [vmem:[#allocation2 + $0x90] sm:$0xff]
    %v3118 = vld [vmem:[#allocation2 + $0x98] sm:$0xff]
    %v3119 = vld [vmem:[#allocation2 + $0xa0] sm:$0xff]
    %v3120 = vld [vmem:[#allocation2 + $0xa8] sm:$0xff]
    %v3121 = vld [vmem:[#allocation2 + $0xb0] sm:$0xff]
    %v3122 = vld [vmem:[#allocation2 + $0xb8] sm:$0xff]
    %3147 = vrot.lane.b32.xlu0 %v3099, 48
    %v3148 = vpop.permute.xlu0 %3147
    %3149 = vrot.lane.b32.xlu0 %v3100, 48
    %v3150 = vpop.permute.xlu0 %3149
    %3151 = vrot.lane.b32.xlu0 %v3101, 48
    %v3152 = vpop.permute.xlu0 %3151
    %3153 = vrot.lane.b32.xlu0 %v3102, 48
    %v3154 = vpop.permute.xlu0 %3153
    %3155 = vrot.lane.b32.xlu0 %v3103, 48
    %v3156 = vpop.permute.xlu0 %3155
    %3157 = vrot.lane.b32.xlu0 %v3104, 48
    %v3158 = vpop.permute.xlu0 %3157
    %3159 = vrot.lane.b32.xlu0 %v3105, 48
    %v3160 = vpop.permute.xlu0 %3159
    %3161 = vrot.lane.b32.xlu0 %v3106, 48
    %v3162 = vpop.permute.xlu0 %3161
    %3163 = vrot.lane.b32.xlu0 %v3107, 48
    %v3164 = vpop.permute.xlu0 %3163
    %3165 = vrot.lane.b32.xlu0 %v3108, 48
    %v3166 = vpop.permute.xlu0 %3165
    %3167 = vrot.lane.b32.xlu0 %v3109, 48
    %v3168 = vpop.permute.xlu0 %3167
    %3169 = vrot.lane.b32.xlu0 %v3110, 48
    %v3170 = vpop.permute.xlu0 %3169
    %3171 = vrot.lane.b32.xlu0 %v3111, 48
    %v3172 = vpop.permute.xlu0 %3171
    %3173 = vrot.lane.b32.xlu0 %v3112, 48
    %v3174 = vpop.permute.xlu0 %3173
    %3175 = vrot.lane.b32.xlu0 %v3113, 48
    %v3176 = vpop.permute.xlu0 %3175
    %3177 = vrot.lane.b32.xlu0 %v3114, 48
    %v3178 = vpop.permute.xlu0 %3177
    %3179 = vrot.lane.b32.xlu0 %v3115, 48
    %v3180 = vpop.permute.xlu0 %3179
    %3181 = vrot.lane.b32.xlu0 %v3116, 48
    %v3182 = vpop.permute.xlu0 %3181
    %3183 = vrot.lane.b32.xlu0 %v3117, 48
    %v3184 = vpop.permute.xlu0 %3183
    %3185 = vrot.lane.b32.xlu0 %v3118, 48
    %v3186 = vpop.permute.xlu0 %3185
    %3187 = vrot.lane.b32.xlu0 %v3119, 48
    %v3188 = vpop.permute.xlu0 %3187
    %3189 = vrot.lane.b32.xlu0 %v3120, 48
    %v3190 = vpop.permute.xlu0 %3189
    %3191 = vrot.lane.b32.xlu0 %v3121, 48
    %v3192 = vpop.permute.xlu0 %3191
    %3193 = vrot.lane.b32.xlu0 %v3122, 48
    %v3194 = vpop.permute.xlu0 %3193
    %v3195 = vsel %vm925, %v3148, %v3150
    %v3196 = vsel %vm925, %v3150, %v3152
    %v3197 = vsel %vm925, %v3152, %v3154
    %v3198 = vsel %vm925, %v3156, %v3158
    %v3199 = vsel %vm925, %v3158, %v3160
    %v3200 = vsel %vm925, %v3160, %v3162
    %v3201 = vsel %vm925, %v3164, %v3166
    %v3202 = vsel %vm925, %v3166, %v3168
    %v3203 = vsel %vm925, %v3168, %v3170
    %v3204 = vsel %vm925, %v3172, %v3174
    %v3205 = vsel %vm925, %v3174, %v3176
    %v3206 = vsel %vm925, %v3176, %v3178
    %v3207 = vsel %vm925, %v3180, %v3182
    %v3208 = vsel %vm925, %v3182, %v3184
    %v3209 = vsel %vm925, %v3184, %v3186
    %v3210 = vsel %vm925, %v3188, %v3190
    %v3211 = vsel %vm925, %v3190, %v3192
    %v3212 = vsel %vm925, %v3192, %v3194
    %3231 = vst [vmem:[#allocation4 + $0x3f0] sm:$0xff] %v3195
    %3232 = vst [vmem:[#allocation4 + $0x3f8] sm:$0xff] %v3196
    %3233 = vst [vmem:[#allocation4 + $0x400] sm:$0xff] %v3197
    %3234 = vst [vmem:[#allocation4 + $0x408] sm:$0xff] %v3198
    %3235 = vst [vmem:[#allocation4 + $0x410] sm:$0xff] %v3199
    %3236 = vst [vmem:[#allocation4 + $0x418] sm:$0xff] %v3200
    %3237 = vst [vmem:[#allocation4 + $0x420] sm:$0xff] %v3201
    %3238 = vst [vmem:[#allocation4 + $0x428] sm:$0xff] %v3202
    %3239 = vst [vmem:[#allocation4 + $0x430] sm:$0xff] %v3203
    %3240 = vst [vmem:[#allocation4 + $0x438] sm:$0xff] %v3204
    %3241 = vst [vmem:[#allocation4 + $0x440] sm:$0xff] %v3205
    %3242 = vst [vmem:[#allocation4 + $0x448] sm:$0xff] %v3206
    %3243 = vst [vmem:[#allocation4 + $0x450] sm:$0xff] %v3207
    %3244 = vst [vmem:[#allocation4 + $0x458] sm:$0xff] %v3208
    %3245 = vst [vmem:[#allocation4 + $0x460] sm:$0xff] %v3209
    %3246 = vst [vmem:[#allocation4 + $0x468] sm:$0xff] %v3210
    %3247 = vst [vmem:[#allocation4 + $0x470] sm:$0xff] %v3211
    %3248 = vst [vmem:[#allocation4 + $0x478] sm:$0xff] %v3212
    %v3249 = vld [vmem:[#allocation2] sm:$0xff]
    %v3250 = vld [vmem:[#allocation2 + $0x8] sm:$0xff]
    %v3251 = vld [vmem:[#allocation2 + $0x10] sm:$0xff]
    %v3252 = vld [vmem:[#allocation2 + $0x18] sm:$0xff]
    %v3253 = vld [vmem:[#allocation2 + $0x20] sm:$0xff]
    %v3254 = vld [vmem:[#allocation2 + $0x28] sm:$0xff]
    %v3255 = vld [vmem:[#allocation2 + $0x30] sm:$0xff]
    %v3256 = vld [vmem:[#allocation2 + $0x38] sm:$0xff]
    %v3257 = vld [vmem:[#allocation2 + $0x40] sm:$0xff]
    %v3258 = vld [vmem:[#allocation2 + $0x48] sm:$0xff]
    %v3259 = vld [vmem:[#allocation2 + $0x50] sm:$0xff]
    %v3260 = vld [vmem:[#allocation2 + $0x58] sm:$0xff]
    %v3261 = vld [vmem:[#allocation2 + $0x60] sm:$0xff]
    %v3262 = vld [vmem:[#allocation2 + $0x68] sm:$0xff]
    %v3263 = vld [vmem:[#allocation2 + $0x70] sm:$0xff]
    %v3264 = vld [vmem:[#allocation2 + $0x78] sm:$0xff]
    %v3265 = vld [vmem:[#allocation2 + $0x80] sm:$0xff]
    %v3266 = vld [vmem:[#allocation2 + $0x88] sm:$0xff]
    %v3267 = vld [vmem:[#allocation2 + $0x90] sm:$0xff]
    %v3268 = vld [vmem:[#allocation2 + $0x98] sm:$0xff]
    %v3269 = vld [vmem:[#allocation2 + $0xa0] sm:$0xff]
    %v3270 = vld [vmem:[#allocation2 + $0xa8] sm:$0xff]
    %v3271 = vld [vmem:[#allocation2 + $0xb0] sm:$0xff]
    %v3272 = vld [vmem:[#allocation2 + $0xb8] sm:$0xff]
    %3297 = vrot.lane.b32.xlu0 %v3249, 47
    %v3298 = vpop.permute.xlu0 %3297
    %3299 = vrot.lane.b32.xlu0 %v3250, 47
    %v3300 = vpop.permute.xlu0 %3299
    %3301 = vrot.lane.b32.xlu0 %v3251, 47
    %v3302 = vpop.permute.xlu0 %3301
    %3303 = vrot.lane.b32.xlu0 %v3252, 47
    %v3304 = vpop.permute.xlu0 %3303
    %3305 = vrot.lane.b32.xlu0 %v3253, 47
    %v3306 = vpop.permute.xlu0 %3305
    %3307 = vrot.lane.b32.xlu0 %v3254, 47
    %v3308 = vpop.permute.xlu0 %3307
    %3309 = vrot.lane.b32.xlu0 %v3255, 47
    %v3310 = vpop.permute.xlu0 %3309
    %3311 = vrot.lane.b32.xlu0 %v3256, 47
    %v3312 = vpop.permute.xlu0 %3311
    %3313 = vrot.lane.b32.xlu0 %v3257, 47
    %v3314 = vpop.permute.xlu0 %3313
    %3315 = vrot.lane.b32.xlu0 %v3258, 47
    %v3316 = vpop.permute.xlu0 %3315
    %3317 = vrot.lane.b32.xlu0 %v3259, 47
    %v3318 = vpop.permute.xlu0 %3317
    %3319 = vrot.lane.b32.xlu0 %v3260, 47
    %v3320 = vpop.permute.xlu0 %3319
    %3321 = vrot.lane.b32.xlu0 %v3261, 47
    %v3322 = vpop.permute.xlu0 %3321
    %3323 = vrot.lane.b32.xlu0 %v3262, 47
    %v3324 = vpop.permute.xlu0 %3323
    %3325 = vrot.lane.b32.xlu0 %v3263, 47
    %v3326 = vpop.permute.xlu0 %3325
    %3327 = vrot.lane.b32.xlu0 %v3264, 47
    %v3328 = vpop.permute.xlu0 %3327
    %3329 = vrot.lane.b32.xlu0 %v3265, 47
    %v3330 = vpop.permute.xlu0 %3329
    %3331 = vrot.lane.b32.xlu0 %v3266, 47
    %v3332 = vpop.permute.xlu0 %3331
    %3333 = vrot.lane.b32.xlu0 %v3267, 47
    %v3334 = vpop.permute.xlu0 %3333
    %3335 = vrot.lane.b32.xlu0 %v3268, 47
    %v3336 = vpop.permute.xlu0 %3335
    %3337 = vrot.lane.b32.xlu0 %v3269, 47
    %v3338 = vpop.permute.xlu0 %3337
    %3339 = vrot.lane.b32.xlu0 %v3270, 47
    %v3340 = vpop.permute.xlu0 %3339
    %3341 = vrot.lane.b32.xlu0 %v3271, 47
    %v3342 = vpop.permute.xlu0 %3341
    %3343 = vrot.lane.b32.xlu0 %v3272, 47
    %v3344 = vpop.permute.xlu0 %3343
    %v3345 = vsel %vm976, %v3298, %v3300
    %v3346 = vsel %vm976, %v3300, %v3302
    %v3347 = vsel %vm976, %v3302, %v3304
    %v3348 = vsel %vm976, %v3306, %v3308
    %v3349 = vsel %vm976, %v3308, %v3310
    %v3350 = vsel %vm976, %v3310, %v3312
    %v3351 = vsel %vm976, %v3314, %v3316
    %v3352 = vsel %vm976, %v3316, %v3318
    %v3353 = vsel %vm976, %v3318, %v3320
    %v3354 = vsel %vm976, %v3322, %v3324
    %v3355 = vsel %vm976, %v3324, %v3326
    %v3356 = vsel %vm976, %v3326, %v3328
    %v3357 = vsel %vm976, %v3330, %v3332
    %v3358 = vsel %vm976, %v3332, %v3334
    %v3359 = vsel %vm976, %v3334, %v3336
    %v3360 = vsel %vm976, %v3338, %v3340
    %v3361 = vsel %vm976, %v3340, %v3342
    %v3362 = vsel %vm976, %v3342, %v3344
    %3381 = vst [vmem:[#allocation4 + $0x480] sm:$0xff] %v3345
    %3382 = vst [vmem:[#allocation4 + $0x488] sm:$0xff] %v3346
    %3383 = vst [vmem:[#allocation4 + $0x490] sm:$0xff] %v3347
    %3384 = vst [vmem:[#allocation4 + $0x498] sm:$0xff] %v3348
    %3385 = vst [vmem:[#allocation4 + $0x4a0] sm:$0xff] %v3349
    %3386 = vst [vmem:[#allocation4 + $0x4a8] sm:$0xff] %v3350
    %3387 = vst [vmem:[#allocation4 + $0x4b0] sm:$0xff] %v3351
    %3388 = vst [vmem:[#allocation4 + $0x4b8] sm:$0xff] %v3352
    %3389 = vst [vmem:[#allocation4 + $0x4c0] sm:$0xff] %v3353
    %3390 = vst [vmem:[#allocation4 + $0x4c8] sm:$0xff] %v3354
    %3391 = vst [vmem:[#allocation4 + $0x4d0] sm:$0xff] %v3355
    %3392 = vst [vmem:[#allocation4 + $0x4d8] sm:$0xff] %v3356
    %3393 = vst [vmem:[#allocation4 + $0x4e0] sm:$0xff] %v3357
    %3394 = vst [vmem:[#allocation4 + $0x4e8] sm:$0xff] %v3358
    %3395 = vst [vmem:[#allocation4 + $0x4f0] sm:$0xff] %v3359
    %3396 = vst [vmem:[#allocation4 + $0x4f8] sm:$0xff] %v3360
    %3397 = vst [vmem:[#allocation4 + $0x500] sm:$0xff] %v3361
    %3398 = vst [vmem:[#allocation4 + $0x508] sm:$0xff] %v3362
    %v3399 = vld [vmem:[%s6] sm:$0xff]
    %v3400 = vld [vmem:[%s6 + $0x8] sm:$0xff]
    %v3401 = vld [vmem:[%s6 + $0x10] sm:$0xff]
    %v3402 = vld [vmem:[%s6 + $0x18] sm:$0xff]
    %v3403 = vld [vmem:[%s6 + $0x20] sm:$0xff]
    %v3404 = vld [vmem:[%s6 + $0x28] sm:$0xff]
    %v3405 = vld [vmem:[%s6 + $0x30] sm:$0xff]
    %v3406 = vld [vmem:[%s6 + $0x38] sm:$0xff]
    %v3407 = vld [vmem:[#allocation4] sm:$0xff]
    %v3408 = vld [vmem:[#allocation4 + $0x8] sm:$0xff]
    %v3409 = vld [vmem:[#allocation4 + $0x10] sm:$0xff]
    %v3410 = vld [vmem:[#allocation4 + $0x18] sm:$0xff]
    %v3411 = vld [vmem:[#allocation4 + $0x20] sm:$0xff]
    %v3412 = vld [vmem:[#allocation4 + $0x28] sm:$0xff]
    %v3413 = vld [vmem:[#allocation4 + $0x30] sm:$0xff]
    %v3414 = vld [vmem:[#allocation4 + $0x38] sm:$0xff]
    %v3415 = vld [vmem:[#allocation4 + $0x40] sm:$0xff]
    %v3416 = vld [vmem:[#allocation4 + $0x48] sm:$0xff]
    %v3417 = vld [vmem:[#allocation4 + $0x50] sm:$0xff]
    %v3418 = vld [vmem:[#allocation4 + $0x58] sm:$0xff]
    %v3419 = vld [vmem:[#allocation4 + $0x60] sm:$0xff]
    %v3420 = vld [vmem:[#allocation4 + $0x68] sm:$0xff]
    %v3421 = vld [vmem:[#allocation4 + $0x70] sm:$0xff]
    %v3422 = vld [vmem:[#allocation4 + $0x78] sm:$0xff]
    %v3423 = vld [vmem:[#allocation4 + $0x80] sm:$0xff]
    %v3424 = vld [vmem:[#allocation4 + $0x88] sm:$0xff]
    %v3425 = vld [vmem:[#allocation4 + $0x90] sm:$0xff]
    %v3426 = vld [vmem:[#allocation4 + $0x98] sm:$0xff]
    %v3427 = vld [vmem:[#allocation4 + $0xa0] sm:$0xff]
    %v3428 = vld [vmem:[#allocation4 + $0xa8] sm:$0xff]
    %v3429 = vld [vmem:[#allocation4 + $0xb0] sm:$0xff]
    %v3430 = vld [vmem:[#allocation4 + $0xb8] sm:$0xff]
    %v3431 = vld [vmem:[#allocation4 + $0xc0] sm:$0xff]
    %v3432 = vld [vmem:[#allocation4 + $0xc8] sm:$0xff]
    %v3433 = vld [vmem:[#allocation4 + $0xd0] sm:$0xff]
    %v3434 = vld [vmem:[#allocation4 + $0xd8] sm:$0xff]
    %v3435 = vld [vmem:[#allocation4 + $0xe0] sm:$0xff]
    %v3436 = vld [vmem:[#allocation4 + $0xe8] sm:$0xff]
    %v3437 = vld [vmem:[#allocation4 + $0xf0] sm:$0xff]
    %v3438 = vld [vmem:[#allocation4 + $0xf8] sm:$0xff]
    %v3439 = vld [vmem:[#allocation4 + $0x100] sm:$0xff]
    %v3440 = vld [vmem:[#allocation4 + $0x108] sm:$0xff]
    %v3441 = vld [vmem:[#allocation4 + $0x110] sm:$0xff]
    %v3442 = vld [vmem:[#allocation4 + $0x118] sm:$0xff]
    %v3443 = vld [vmem:[#allocation4 + $0x120] sm:$0xff]
    %v3444 = vld [vmem:[#allocation4 + $0x128] sm:$0xff]
    %v3445 = vld [vmem:[#allocation4 + $0x130] sm:$0xff]
    %v3446 = vld [vmem:[#allocation4 + $0x138] sm:$0xff]
    %v3447 = vld [vmem:[#allocation4 + $0x140] sm:$0xff]
    %v3448 = vld [vmem:[#allocation4 + $0x148] sm:$0xff]
    %v3449 = vld [vmem:[#allocation4 + $0x150] sm:$0xff]
    %v3450 = vld [vmem:[#allocation4 + $0x158] sm:$0xff]
    %v3451 = vld [vmem:[#allocation4 + $0x160] sm:$0xff]
    %v3452 = vld [vmem:[#allocation4 + $0x168] sm:$0xff]
    %v3453 = vld [vmem:[#allocation4 + $0x170] sm:$0xff]
    %v3454 = vld [vmem:[#allocation4 + $0x178] sm:$0xff]
    %v3455 = vld [vmem:[#allocation4 + $0x180] sm:$0xff]
    %v3456 = vld [vmem:[#allocation4 + $0x188] sm:$0xff]
    %v3457 = vld [vmem:[#allocation4 + $0x190] sm:$0xff]
    %v3458 = vld [vmem:[#allocation4 + $0x198] sm:$0xff]
    %v3459 = vld [vmem:[#allocation4 + $0x1a0] sm:$0xff]
    %v3460 = vld [vmem:[#allocation4 + $0x1a8] sm:$0xff]
    %v3461 = vld [vmem:[#allocation4 + $0x1b0] sm:$0xff]
    %v3462 = vld [vmem:[#allocation4 + $0x1b8] sm:$0xff]
    %v3463 = vld [vmem:[#allocation4 + $0x1c0] sm:$0xff]
    %v3464 = vld [vmem:[#allocation4 + $0x1c8] sm:$0xff]
    %v3465 = vld [vmem:[#allocation4 + $0x1d0] sm:$0xff]
    %v3466 = vld [vmem:[#allocation4 + $0x1d8] sm:$0xff]
    %v3467 = vld [vmem:[#allocation4 + $0x1e0] sm:$0xff]
    %v3468 = vld [vmem:[#allocation4 + $0x1e8] sm:$0xff]
    %v3469 = vld [vmem:[#allocation4 + $0x1f0] sm:$0xff]
    %v3470 = vld [vmem:[#allocation4 + $0x1f8] sm:$0xff]
    %v3471 = vld [vmem:[#allocation4 + $0x200] sm:$0xff]
    %v3472 = vld [vmem:[#allocation4 + $0x208] sm:$0xff]
    %v3473 = vld [vmem:[#allocation4 + $0x210] sm:$0xff]
    %v3474 = vld [vmem:[#allocation4 + $0x218] sm:$0xff]
    %v3475 = vld [vmem:[#allocation4 + $0x220] sm:$0xff]
    %v3476 = vld [vmem:[#allocation4 + $0x228] sm:$0xff]
    %v3477 = vld [vmem:[#allocation4 + $0x230] sm:$0xff]
    %v3478 = vld [vmem:[#allocation4 + $0x238] sm:$0xff]
    %v3479 = vld [vmem:[#allocation4 + $0x240] sm:$0xff]
    %v3480 = vld [vmem:[#allocation4 + $0x248] sm:$0xff]
    %v3481 = vld [vmem:[#allocation4 + $0x250] sm:$0xff]
    %v3482 = vld [vmem:[#allocation4 + $0x258] sm:$0xff]
    %v3483 = vld [vmem:[#allocation4 + $0x260] sm:$0xff]
    %v3484 = vld [vmem:[#allocation4 + $0x268] sm:$0xff]
    %v3485 = vld [vmem:[#allocation4 + $0x270] sm:$0xff]
    %v3486 = vld [vmem:[#allocation4 + $0x278] sm:$0xff]
    %v3487 = vld [vmem:[#allocation4 + $0x280] sm:$0xff]
    %v3488 = vld [vmem:[#allocation4 + $0x288] sm:$0xff]
    %v3489 = vld [vmem:[#allocation4 + $0x290] sm:$0xff]
    %v3490 = vld [vmem:[#allocation4 + $0x298] sm:$0xff]
    %v3491 = vld [vmem:[#allocation4 + $0x2a0] sm:$0xff]
    %v3492 = vld [vmem:[#allocation4 + $0x2a8] sm:$0xff]
    %v3493 = vld [vmem:[#allocation4 + $0x2b0] sm:$0xff]
    %v3494 = vld [vmem:[#allocation4 + $0x2b8] sm:$0xff]
    %v3495 = vld [vmem:[#allocation4 + $0x2c0] sm:$0xff]
    %v3496 = vld [vmem:[#allocation4 + $0x2c8] sm:$0xff]
    %v3497 = vld [vmem:[#allocation4 + $0x2d0] sm:$0xff]
    %v3498 = vld [vmem:[#allocation4 + $0x2d8] sm:$0xff]
    %v3499 = vld [vmem:[#allocation4 + $0x2e0] sm:$0xff]
    %v3500 = vld [vmem:[#allocation4 + $0x2e8] sm:$0xff]
    %v3501 = vld [vmem:[#allocation4 + $0x2f0] sm:$0xff]
    %v3502 = vld [vmem:[#allocation4 + $0x2f8] sm:$0xff]
    %v3503 = vld [vmem:[#allocation4 + $0x300] sm:$0xff]
    %v3504 = vld [vmem:[#allocation4 + $0x308] sm:$0xff]
    %v3505 = vld [vmem:[#allocation4 + $0x310] sm:$0xff]
    %v3506 = vld [vmem:[#allocation4 + $0x318] sm:$0xff]
    %v3507 = vld [vmem:[#allocation4 + $0x320] sm:$0xff]
    %v3508 = vld [vmem:[#allocation4 + $0x328] sm:$0xff]
    %v3509 = vld [vmem:[#allocation4 + $0x330] sm:$0xff]
    %v3510 = vld [vmem:[#allocation4 + $0x338] sm:$0xff]
    %v3511 = vld [vmem:[#allocation4 + $0x340] sm:$0xff]
    %v3512 = vld [vmem:[#allocation4 + $0x348] sm:$0xff]
    %v3513 = vld [vmem:[#allocation4 + $0x350] sm:$0xff]
    %v3514 = vld [vmem:[#allocation4 + $0x358] sm:$0xff]
    %v3515 = vld [vmem:[#allocation4 + $0x360] sm:$0xff]
    %v3516 = vld [vmem:[#allocation4 + $0x368] sm:$0xff]
    %v3517 = vld [vmem:[#allocation4 + $0x370] sm:$0xff]
    %v3518 = vld [vmem:[#allocation4 + $0x378] sm:$0xff]
    %v3519 = vld [vmem:[#allocation4 + $0x380] sm:$0xff]
    %v3520 = vld [vmem:[#allocation4 + $0x388] sm:$0xff]
    %v3521 = vld [vmem:[#allocation4 + $0x390] sm:$0xff]
    %v3522 = vld [vmem:[#allocation4 + $0x398] sm:$0xff]
    %v3523 = vld [vmem:[#allocation4 + $0x3a0] sm:$0xff]
    %v3524 = vld [vmem:[#allocation4 + $0x3a8] sm:$0xff]
    %v3525 = vld [vmem:[#allocation4 + $0x3b0] sm:$0xff]
    %v3526 = vld [vmem:[#allocation4 + $0x3b8] sm:$0xff]
    %v3527 = vld [vmem:[#allocation4 + $0x3c0] sm:$0xff]
    %v3528 = vld [vmem:[#allocation4 + $0x3c8] sm:$0xff]
    %v3529 = vld [vmem:[#allocation4 + $0x3d0] sm:$0xff]
    %v3530 = vld [vmem:[#allocation4 + $0x3d8] sm:$0xff]
    %v3531 = vld [vmem:[#allocation4 + $0x3e0] sm:$0xff]
    %v3532 = vld [vmem:[#allocation4 + $0x3e8] sm:$0xff]
    %v3533 = vld [vmem:[#allocation4 + $0x3f0] sm:$0xff]
    %v3534 = vld [vmem:[#allocation4 + $0x3f8] sm:$0xff]
    %v3535 = vld [vmem:[#allocation4 + $0x400] sm:$0xff]
    %v3536 = vld [vmem:[#allocation4 + $0x408] sm:$0xff]
    %v3537 = vld [vmem:[#allocation4 + $0x410] sm:$0xff]
    %v3538 = vld [vmem:[#allocation4 + $0x418] sm:$0xff]
    %v3539 = vld [vmem:[#allocation4 + $0x420] sm:$0xff]
    %v3540 = vld [vmem:[#allocation4 + $0x428] sm:$0xff]
    %v3541 = vld [vmem:[#allocation4 + $0x430] sm:$0xff]
    %v3542 = vld [vmem:[#allocation4 + $0x438] sm:$0xff]
    %v3543 = vld [vmem:[#allocation4 + $0x440] sm:$0xff]
    %v3544 = vld [vmem:[#allocation4 + $0x448] sm:$0xff]
    %v3545 = vld [vmem:[#allocation4 + $0x450] sm:$0xff]
    %v3546 = vld [vmem:[#allocation4 + $0x458] sm:$0xff]
    %v3547 = vld [vmem:[#allocation4 + $0x460] sm:$0xff]
    %v3548 = vld [vmem:[#allocation4 + $0x468] sm:$0xff]
    %v3549 = vld [vmem:[#allocation4 + $0x470] sm:$0xff]
    %v3550 = vld [vmem:[#allocation4 + $0x478] sm:$0xff]
    %v3551 = vld [vmem:[#allocation4 + $0x480] sm:$0xff]
    %v3552 = vld [vmem:[#allocation4 + $0x488] sm:$0xff]
    %v3553 = vld [vmem:[#allocation4 + $0x490] sm:$0xff]
    %v3554 = vld [vmem:[#allocation4 + $0x498] sm:$0xff]
    %v3555 = vld [vmem:[#allocation4 + $0x4a0] sm:$0xff]
    %v3556 = vld [vmem:[#allocation4 + $0x4a8] sm:$0xff]
    %v3557 = vld [vmem:[#allocation4 + $0x4b0] sm:$0xff]
    %v3558 = vld [vmem:[#allocation4 + $0x4b8] sm:$0xff]
    %v3559 = vld [vmem:[#allocation4 + $0x4c0] sm:$0xff]
    %v3560 = vld [vmem:[#allocation4 + $0x4c8] sm:$0xff]
    %v3561 = vld [vmem:[#allocation4 + $0x4d0] sm:$0xff]
    %v3562 = vld [vmem:[#allocation4 + $0x4d8] sm:$0xff]
    %v3563 = vld [vmem:[#allocation4 + $0x4e0] sm:$0xff]
    %v3564 = vld [vmem:[#allocation4 + $0x4e8] sm:$0xff]
    %v3565 = vld [vmem:[#allocation4 + $0x4f0] sm:$0xff]
    %v3566 = vld [vmem:[#allocation4 + $0x4f8] sm:$0xff]
    %v3567 = vld [vmem:[#allocation4 + $0x500] sm:$0xff]
    %v3568 = vld [vmem:[#allocation4 + $0x508] sm:$0xff]
    %v3570 = vsel %vm925, %v3402, 0
    %v3573 = vsel %vm925, %v3406, 0
    %3575 = vmatprep.subr.mxu0 %v3408
    %3576 = vmatpush1.msra.mxu0 %v3407
    %3577 = vmatprep.subr.mxu0 %v3411
    %3578 = vmatpush1.msra.mxu0 %v3410
    %3579 = vmatprep.subr.mxu0 %v3414
    %3580 = vmatpush1.msra.mxu0 %v3413
    %3581 = vmatprep.subr.mxu0 %v3417
    %3582 = vmatpush1.msra.mxu0 %v3416
    %3583 = vmatprep.subr.mxu0 %v3420
    %3584 = vmatpush1.msra.mxu0 %v3419
    %3585 = vmatprep.subr.mxu0 %v3423
    %3586 = vmatpush1.msra.mxu0 %v3422
    %3587 = vmatprep.subr.mxu0 %v3426
    %3588 = vmatpush1.msra.mxu0 %v3425
    %3589 = vmatprep.subr.mxu0 %v3429
    %3590 = vmatpush1.msra.mxu0 %v3428
    %3591 = vmatprep.subr.mxu0 %v3432
    %3592 = vmatpush1.msra.mxu0 %v3431
    %3593 = vmatprep.subr.mxu0 %v3435
    %3594 = vmatpush1.msra.mxu0 %v3434
    %3595 = vmatprep.subr.mxu0 %v3438
    %3596 = vmatpush1.msra.mxu0 %v3437
    %3597 = vmatprep.subr.mxu0 %v3441
    %3598 = vmatpush1.msra.mxu0 %v3440
    %3599 = vmatprep.subr.mxu0 %v3444
    %3600 = vmatpush1.msra.mxu0 %v3443
    %3601 = vmatprep.subr.mxu0 %v3447
    %3602 = vmatpush1.msra.mxu0 %v3446
    %3603 = vmatprep.subr.mxu0 %v3450
    %3604 = vmatpush1.msra.mxu0 %v3449
    %3605 = vmatprep.subr.mxu0 %v3453
    %3606 = vmatpush1.msra.mxu0 %v3452
    %3607 = vmatprep.subr.mxu0 %v3456
    %3608 = vmatpush1.msra.mxu0 %v3455
    %3609 = vmatprep.subr.mxu0 %v3459
    %3610 = vmatpush1.msra.mxu0 %v3458
    %3611 = vmatprep.subr.mxu0 %v3462
    %3612 = vmatpush1.msra.mxu0 %v3461
    %3613 = vmatprep.subr.mxu0 %v3465
    %3614 = vmatpush1.msra.mxu0 %v3464
    %3615 = vmatprep.subr.mxu0 %v3468
    %3616 = vmatpush1.msra.mxu0 %v3467
    %3617 = vmatprep.subr.mxu0 %v3471
    %3618 = vmatpush1.msra.mxu0 %v3470
    %3619 = vmatprep.subr.mxu0 %v3474
    %3620 = vmatpush1.msra.mxu0 %v3473
    %3621 = vmatprep.subr.mxu0 %v3477
    %3622 = vmatpush1.msra.mxu0 %v3476
    %3623 = vmatprep.subr.mxu0 %v3480
    %3624 = vmatpush1.msra.mxu0 %v3479
    %3625 = vmatprep.subr.mxu0 %v3483
    %3626 = vmatpush1.msra.mxu0 %v3482
    %3627 = vmatprep.subr.mxu0 %v3486
    %3628 = vmatpush1.msra.mxu0 %v3485
    %3629 = vmatprep.subr.mxu0 %v3489
    %3630 = vmatpush1.msra.mxu0 %v3488
    %3631 = vmatprep.subr.mxu0 %v3492
    %3632 = vmatpush1.msra.mxu0 %v3491
    %3633 = vmatprep.subr.mxu0 %v3495
    %3634 = vmatpush1.msra.mxu0 %v3494
    %3635 = vmatprep.subr.mxu0 %v3498
    %3636 = vmatpush1.msra.mxu0 %v3497
    %3637 = vmatprep.subr.mxu0 %v3501
    %3638 = vmatpush1.msra.mxu0 %v3500
    %3639 = vmatprep.mubr.f32.mxu0 %v3400
    %3640 = vmatmul.mubr.f32.gmra.mrb[0].mxu0 %v3399
    %v3641 = vpop.f32.mrb[0].mxu0
    %v3642 = vadd.f32 0.0, %v3641
    %v3643 = vpop.f32.mrb[0].mxu0
    %v3644 = vadd.f32 0.0, %v3643
    %3645 = vmatprep.mubr.f32.mxu0 %v3404
    %3646 = vmatmul.mubr.f32.gmra.mrb[0].mxu0 %v3403
    %v3647 = vpop.f32.mrb[0].mxu0
    %v3648 = vadd.f32 0.0, %v3647
    %v3649 = vpop.f32.mrb[0].mxu0
    %v3650 = vadd.f32 0.0, %v3649
    %3651 = vdwg.mxu0
    %3652 = vmatprep.subr.mxu0 %v3504
    %3653 = vmatpush1.msra.mxu0 %v3503
    %3654 = vmatprep.subr.mxu0 %v3507
    %3655 = vmatpush1.msra.mxu0 %v3506
    %3656 = vmatprep.subr.mxu0 %v3510
    %3657 = vmatpush1.msra.mxu0 %v3509
    %3658 = vmatprep.subr.mxu0 %v3513
    %3659 = vmatpush1.msra.mxu0 %v3512
    %3660 = vmatprep.subr.mxu0 %v3516
    %3661 = vmatpush1.msra.mxu0 %v3515
    %3662 = vmatprep.subr.mxu0 %v3519
    %3663 = vmatpush1.msra.mxu0 %v3518
    %3664 = vmatprep.subr.mxu0 %v3522
    %3665 = vmatpush1.msra.mxu0 %v3521
    %3666 = vmatprep.subr.mxu0 %v3525
    %3667 = vmatpush1.msra.mxu0 %v3524
    %3668 = vmatprep.subr.mxu0 %v3528
    %3669 = vmatpush1.msra.mxu0 %v3527
    %3670 = vmatprep.subr.mxu0 %v3531
    %3671 = vmatpush1.msra.mxu0 %v3530
    %3672 = vmatprep.subr.mxu0 %v3534
    %3673 = vmatpush1.msra.mxu0 %v3533
    %3674 = vmatprep.subr.mxu0 %v3537
    %3675 = vmatpush1.msra.mxu0 %v3536
    %3676 = vmatprep.subr.mxu0 %v3540
    %3677 = vmatpush1.msra.mxu0 %v3539
    %3678 = vmatprep.subr.mxu0 %v3543
    %3679 = vmatpush1.msra.mxu0 %v3542
    %3680 = vmatprep.subr.mxu0 %v3546
    %3681 = vmatpush1.msra.mxu0 %v3545
    %3682 = vmatprep.subr.mxu0 %v3549
    %3683 = vmatpush1.msra.mxu0 %v3548
    %3684 = vmatprep.subr.mxu0 %v3552
    %3685 = vmatpush1.msra.mxu0 %v3551
    %3686 = vmatprep.subr.mxu0 %v3555
    %3687 = vmatpush1.msra.mxu0 %v3554
    %3688 = vmatprep.subr.mxu0 %v3558
    %3689 = vmatpush1.msra.mxu0 %v3557
    %3690 = vmatprep.subr.mxu0 %v3561
    %3691 = vmatpush1.msra.mxu0 %v3560
    %3692 = vmatprep.subr.mxu0 %v3564
    %3693 = vmatpush1.msra.mxu0 %v3563
    %3694 = vmatprep.subr.mxu0 %v3567
    %3695 = vmatpush1.msra.mxu0 %v3566
    %3696 = vmatprep.subr.mxu0 0.0
    %3697 = vmatpush1.msra.mxu0 0.0
    %3698 = vmatprep.subr.mxu0 0.0
    %3699 = vmatpush1.msra.mxu0 0.0
    %3700 = vmatprep.subr.mxu0 0.0
    %3701 = vmatpush1.msra.mxu0 0.0
    %3702 = vmatprep.subr.mxu0 0.0
    %3703 = vmatpush1.msra.mxu0 0.0
    %3704 = vmatprep.subr.mxu0 0.0
    %3705 = vmatpush1.msra.mxu0 0.0
    %3706 = vmatprep.subr.mxu0 0.0
    %3707 = vmatpush1.msra.mxu0 0.0
    %3708 = vmatprep.subr.mxu0 0.0
    %3709 = vmatpush1.msra.mxu0 0.0
    %3710 = vmatprep.subr.mxu0 0.0
    %3711 = vmatpush1.msra.mxu0 0.0
    %3712 = vmatprep.subr.mxu0 0.0
    %3713 = vmatpush1.msra.mxu0 0.0
    %3714 = vmatprep.subr.mxu0 0.0
    %3715 = vmatpush1.msra.mxu0 0.0
    %3716 = vmatprep.mubr.f32.mxu0 %v3570
    %3717 = vmatmul.mubr.f32.gmra.mrb[0].mxu0 %v3401
    %v3718 = vpop.f32.mrb[0].mxu0
    %v3719 = vadd.f32 %v3642, %v3718
    %v3720 = vpop.f32.mrb[0].mxu0
    %v3721 = vadd.f32 %v3644, %v3720
    %3722 = vmatprep.mubr.f32.mxu0 %v3573
    %3723 = vmatmul.mubr.f32.gmra.mrb[0].mxu0 %v3405
    %v3724 = vpop.f32.mrb[0].mxu0
    %v3725 = vadd.f32 %v3648, %v3724
    %v3726 = vpop.f32.mrb[0].mxu0
    %v3727 = vadd.f32 %v3650, %v3726
    %3728 = vdwg.mxu0
    %3729 = vmatprep.subr.mxu0 0.0
    %3730 = vmatpush1.msra.mxu0 %v3409
    %3731 = vmatprep.subr.mxu0 0.0
    %3732 = vmatpush1.msra.mxu0 %v3412
    %3733 = vmatprep.subr.mxu0 0.0
    %3734 = vmatpush1.msra.mxu0 %v3415
    %3735 = vmatprep.subr.mxu0 0.0
    %3736 = vmatpush1.msra.mxu0 %v3418
    %3737 = vmatprep.subr.mxu0 0.0
    %3738 = vmatpush1.msra.mxu0 %v3421
    %3739 = vmatprep.subr.mxu0 0.0
    %3740 = vmatpush1.msra.mxu0 %v3424
    %3741 = vmatprep.subr.mxu0 0.0
    %3742 = vmatpush1.msra.mxu0 %v3427
    %3743 = vmatprep.subr.mxu0 0.0
    %3744 = vmatpush1.msra.mxu0 %v3430
    %3745 = vmatprep.subr.mxu0 0.0
    %3746 = vmatpush1.msra.mxu0 %v3433
    %3747 = vmatprep.subr.mxu0 0.0
    %3748 = vmatpush1.msra.mxu0 %v3436
    %3749 = vmatprep.subr.mxu0 0.0
    %3750 = vmatpush1.msra.mxu0 %v3439
    %3751 = vmatprep.subr.mxu0 0.0
    %3752 = vmatpush1.msra.mxu0 %v3442
    %3753 = vmatprep.subr.mxu0 0.0
    %3754 = vmatpush1.msra.mxu0 %v3445
    %3755 = vmatprep.subr.mxu0 0.0
    %3756 = vmatpush1.msra.mxu0 %v3448
    %3757 = vmatprep.subr.mxu0 0.0
    %3758 = vmatpush1.msra.mxu0 %v3451
    %3759 = vmatprep.subr.mxu0 0.0
    %3760 = vmatpush1.msra.mxu0 %v3454
    %3761 = vmatprep.subr.mxu0 0.0
    %3762 = vmatpush1.msra.mxu0 %v3457
    %3763 = vmatprep.subr.mxu0 0.0
    %3764 = vmatpush1.msra.mxu0 %v3460
    %3765 = vmatprep.subr.mxu0 0.0
    %3766 = vmatpush1.msra.mxu0 %v3463
    %3767 = vmatprep.subr.mxu0 0.0
    %3768 = vmatpush1.msra.mxu0 %v3466
    %3769 = vmatprep.subr.mxu0 0.0
    %3770 = vmatpush1.msra.mxu0 %v3469
    %3771 = vmatprep.subr.mxu0 0.0
    %3772 = vmatpush1.msra.mxu0 %v3472
    %3773 = vmatprep.subr.mxu0 0.0
    %3774 = vmatpush1.msra.mxu0 %v3475
    %3775 = vmatprep.subr.mxu0 0.0
    %3776 = vmatpush1.msra.mxu0 %v3478
    %3777 = vmatprep.subr.mxu0 0.0
    %3778 = vmatpush1.msra.mxu0 %v3481
    %3779 = vmatprep.subr.mxu0 0.0
    %3780 = vmatpush1.msra.mxu0 %v3484
    %3781 = vmatprep.subr.mxu0 0.0
    %3782 = vmatpush1.msra.mxu0 %v3487
    %3783 = vmatprep.subr.mxu0 0.0
    %3784 = vmatpush1.msra.mxu0 %v3490
    %3785 = vmatprep.subr.mxu0 0.0
    %3786 = vmatpush1.msra.mxu0 %v3493
    %3787 = vmatprep.subr.mxu0 0.0
    %3788 = vmatpush1.msra.mxu0 %v3496
    %3789 = vmatprep.subr.mxu0 0.0
    %3790 = vmatpush1.msra.mxu0 %v3499
    %3791 = vmatprep.subr.mxu0 0.0
    %3792 = vmatpush1.msra.mxu0 %v3502
    %3793 = vmatprep.mubr.f32.mxu0 %v3400
    %3794 = vmatmul.mubr.f32.gmra.mrb[0].mxu0 %v3399
    %v3795 = vpop.f32.mrb[0].mxu0
    %v3796 = vadd.f32 0.0, %v3795
    %v3797 = vpop.f32.mrb[0].mxu0
    %3798 = vmatprep.mubr.f32.mxu0 %v3404
    %3799 = vmatmul.mubr.f32.gmra.mrb[0].mxu0 %v3403
    %v3800 = vpop.f32.mrb[0].mxu0
    %v3801 = vadd.f32 0.0, %v3800
    %v3802 = vpop.f32.mrb[0].mxu0
    %3803 = vdwg.mxu0
    %3804 = vmatprep.subr.mxu0 0.0
    %3805 = vmatpush1.msra.mxu0 %v3505
    %3806 = vmatprep.subr.mxu0 0.0
    %3807 = vmatpush1.msra.mxu0 %v3508
    %3808 = vmatprep.subr.mxu0 0.0
    %3809 = vmatpush1.msra.mxu0 %v3511
    %3810 = vmatprep.subr.mxu0 0.0
    %3811 = vmatpush1.msra.mxu0 %v3514
    %3812 = vmatprep.subr.mxu0 0.0
    %3813 = vmatpush1.msra.mxu0 %v3517
    %3814 = vmatprep.subr.mxu0 0.0
    %3815 = vmatpush1.msra.mxu0 %v3520
    %3816 = vmatprep.subr.mxu0 0.0
    %3817 = vmatpush1.msra.mxu0 %v3523
    %3818 = vmatprep.subr.mxu0 0.0
    %3819 = vmatpush1.msra.mxu0 %v3526
    %3820 = vmatprep.subr.mxu0 0.0
    %3821 = vmatpush1.msra.mxu0 %v3529
    %3822 = vmatprep.subr.mxu0 0.0
    %3823 = vmatpush1.msra.mxu0 %v3532
    %3824 = vmatprep.subr.mxu0 0.0
    %3825 = vmatpush1.msra.mxu0 %v3535
    %3826 = vmatprep.subr.mxu0 0.0
    %3827 = vmatpush1.msra.mxu0 %v3538
    %3828 = vmatprep.subr.mxu0 0.0
    %3829 = vmatpush1.msra.mxu0 %v3541
    %3830 = vmatprep.subr.mxu0 0.0
    %3831 = vmatpush1.msra.mxu0 %v3544
    %3832 = vmatprep.subr.mxu0 0.0
    %3833 = vmatpush1.msra.mxu0 %v3547
    %3834 = vmatprep.subr.mxu0 0.0
    %3835 = vmatpush1.msra.mxu0 %v3550
    %3836 = vmatprep.subr.mxu0 0.0
    %3837 = vmatpush1.msra.mxu0 %v3553
    %3838 = vmatprep.subr.mxu0 0.0
    %3839 = vmatpush1.msra.mxu0 %v3556
    %3840 = vmatprep.subr.mxu0 0.0
    %3841 = vmatpush1.msra.mxu0 %v3559
    %3842 = vmatprep.subr.mxu0 0.0
    %3843 = vmatpush1.msra.mxu0 %v3562
    %3844 = vmatprep.subr.mxu0 0.0
    %3845 = vmatpush1.msra.mxu0 %v3565
    %3846 = vmatprep.subr.mxu0 0.0
    %3847 = vmatpush1.msra.mxu0 %v3568
    %3848 = vmatprep.subr.mxu0 0.0
    %3849 = vmatpush1.msra.mxu0 0.0
    %3850 = vmatprep.subr.mxu0 0.0
    %3851 = vmatpush1.msra.mxu0 0.0
    %3852 = vmatprep.subr.mxu0 0.0
    %3853 = vmatpush1.msra.mxu0 0.0
    %3854 = vmatprep.subr.mxu0 0.0
    %3855 = vmatpush1.msra.mxu0 0.0
    %3856 = vmatprep.subr.mxu0 0.0
    %3857 = vmatpush1.msra.mxu0 0.0
    %3858 = vmatprep.subr.mxu0 0.0
    %3859 = vmatpush1.msra.mxu0 0.0
    %3860 = vmatprep.subr.mxu0 0.0
    %3861 = vmatpush1.msra.mxu0 0.0
    %3862 = vmatprep.subr.mxu0 0.0
    %3863 = vmatpush1.msra.mxu0 0.0
    %3864 = vmatprep.subr.mxu0 0.0
    %3865 = vmatpush1.msra.mxu0 0.0
    %3866 = vmatprep.subr.mxu0 0.0
    %3867 = vmatpush1.msra.mxu0 0.0
    %3868 = vmatprep.mubr.f32.mxu0 %v3570
    %3869 = vmatmul.mubr.f32.gmra.mrb[0].mxu0 %v3401
    %v3870 = vpop.f32.mrb[0].mxu0
    %v3871 = vadd.f32 %v3796, %v3870
    %v3872 = vpop.f32.mrb[0].mxu0
    %3873 = vmatprep.mubr.f32.mxu0 %v3573
    %3874 = vmatmul.mubr.f32.gmra.mrb[0].mxu0 %v3405
    %v3875 = vpop.f32.mrb[0].mxu0
    %v3876 = vadd.f32 %v3801, %v3875
    %v3877 = vpop.f32.mrb[0].mxu0
    %3878 = vdwg.mxu0
    %v3879 = vld [vmem:[#allocation10] sm:$0xff]
    %v3880 = vld [vmem:[#allocation10 + $0x8] sm:$0xff]
    %3882 = vset.pattern.permute.xlu0 7
    %3883 = vperm.xlu0 %3882, %v3879
    %v3884 = vpop.permute.xlu0 %3883
    %3887 = vset.pattern.permute.xlu0 7
    %3888 = vperm.xlu0 %3887, %v3880
    %v3889 = vpop.permute.xlu0 %3888
    %v3891 = vmul.f32 %v3719, %v3884
    %v3892 = vmul.f32 %v3721, %v3884
    %v3893 = vmul.f32 %v3871, %v3884
    %v3894 = vmul.f32 %v3725, %v3889
    %v3895 = vmul.f32 %v3727, %v3889
    %v3896 = vmul.f32 %v3876, %v3889
    %3897 = vset.pattern.permute.xlu0 8
    %3898 = vperm.xlu0 %3897, %v3879
    %v3899 = vpop.permute.xlu0 %3898
    %3901 = vset.pattern.permute.xlu0 8
    %3902 = vperm.xlu0 %3901, %v3880
    %v3903 = vpop.permute.xlu0 %3902
    %v3905 = vadd.f32 %v3891, %v3899
    %v3906 = vadd.f32 %v3892, %v3899
    %v3907 = vadd.f32 %v3893, %v3899
    %v3908 = vadd.f32 %v3894, %v3903
    %v3909 = vadd.f32 %v3895, %v3903
    %v3910 = vadd.f32 %v3896, %v3903
    %v3911 = vmax.f32 %v3905, 0.0
    %v3912 = vmax.f32 %v3906, 0.0
    %v3913 = vmax.f32 %v3907, 0.0
    %v3914 = vmax.f32 %v3908, 0.0
    %v3915 = vmax.f32 %v3909, 0.0
    %v3916 = vmax.f32 %v3910, 0.0
    %3917 = vxpose.xlu0.b32.start [1/16] %v498, 128
    %3918 = vxpose.xlu0.b32.cont [2/16] 0.0, 128
    %3919 = vxpose.xlu0.b32.cont [3/16] 0.0, 128
    %3920 = vxpose.xlu0.b32.cont [4/16] 0.0, 128
    %3921 = vxpose.xlu0.b32.cont [5/16] 0.0, 128
    %3922 = vxpose.xlu0.b32.cont [6/16] 0.0, 128
    %3923 = vxpose.xlu0.b32.cont [7/16] 0.0, 128
    %3924 = vxpose.xlu0.b32.cont [8/16] 0.0, 128
    %3925 = vxpose.xlu0.b32.cont [9/16] 0.0, 128
    %3926 = vxpose.xlu0.b32.cont [10/16] 0.0, 128
    %3927 = vxpose.xlu0.b32.cont [11/16] 0.0, 128
    %3928 = vxpose.xlu0.b32.cont [12/16] 0.0, 128
    %3929 = vxpose.xlu0.b32.cont [13/16] 0.0, 128
    %3930 = vxpose.xlu0.b32.cont [14/16] 0.0, 128
    %3931 = vxpose.xlu0.b32.cont [15/16] 0.0, 128
    %3932 = vxpose.xlu0.b32.end [16/16] 0.0, 128
    %v3933 = vpop.trf.xlu0
    %v3934 = vpop.trf.xlu0
    %v3935 = vpop.trf.xlu0
    %v3936 = vpop.trf.xlu0
    %v3937 = vpop.trf.xlu0
    %v3938 = vpop.trf.xlu0
    %v3939 = vpop.trf.xlu0
    %v3940 = vpop.trf.xlu0
    %v3941 = vpop.trf.xlu0
    %v3942 = vpop.trf.xlu0
    %v3943 = vpop.trf.xlu0
    %v3944 = vpop.trf.xlu0
    %v3945 = vpop.trf.xlu0
    %v3946 = vpop.trf.xlu0
    %v3947 = vpop.trf.xlu0
    %v3948 = vpop.trf.xlu0
    %vm3949 = vcmask 31744
    %v3951 = vsel %vm3949, %v3933, 0
    %v3954 = vsel %vm3949, %v3934, 0
    %v3957 = vsel %vm3949, %v3935, 0
    %v3960 = vsel %vm3949, %v3936, 0
    %v3963 = vsel %vm3949, %v3937, 0
    %v3966 = vsel %vm3949, %v3938, 0
    %v3969 = vsel %vm3949, %v3939, 0
    %v3972 = vsel %vm3949, %v3940, 0
    %vm3974 = vcmask 1043456
    %v3976 = vsel %vm3974, %v481, 0
    %v3979 = vsel %vm3974, %v482, 0
    %3981 = vmatprep.subr.mxu0 %v3979
    %3982 = vmatpush1.msra.mxu0 %v3976
    %3983 = vmatprep.subr.mxu0 0.0
    %3984 = vmatpush1.msra.mxu0 0.0
    %3985 = vmatprep.subr.mxu0 0.0
    %3986 = vmatpush1.msra.mxu0 0.0
    %3987 = vmatprep.subr.mxu0 0.0
    %3988 = vmatpush1.msra.mxu0 0.0
    %3989 = vmatprep.subr.mxu0 0.0
    %3990 = vmatpush1.msra.mxu0 0.0
    %3991 = vmatprep.subr.mxu0 0.0
    %3992 = vmatpush1.msra.mxu0 0.0
    %3993 = vmatprep.subr.mxu0 0.0
    %3994 = vmatpush1.msra.mxu0 0.0
    %3995 = vmatprep.subr.mxu0 0.0
    %3996 = vmatpush1.msra.mxu0 0.0
    %3997 = vmatprep.subr.mxu0 0.0
    %3998 = vmatpush1.msra.mxu0 0.0
    %3999 = vmatprep.subr.mxu0 0.0
    %4000 = vmatpush1.msra.mxu0 0.0
    %4001 = vmatprep.subr.mxu0 0.0
    %4002 = vmatpush1.msra.mxu0 0.0
    %4003 = vmatprep.subr.mxu0 0.0
    %4004 = vmatpush1.msra.mxu0 0.0
    %4005 = vmatprep.subr.mxu0 0.0
    %4006 = vmatpush1.msra.mxu0 0.0
    %4007 = vmatprep.subr.mxu0 0.0
    %4008 = vmatpush1.msra.mxu0 0.0
    %4009 = vmatprep.subr.mxu0 0.0
    %4010 = vmatpush1.msra.mxu0 0.0
    %4011 = vmatprep.subr.mxu0 0.0
    %4012 = vmatpush1.msra.mxu0 0.0
    %4013 = vmatprep.subr.mxu0 0.0
    %4014 = vmatpush1.msra.mxu0 0.0
    %4015 = vmatprep.subr.mxu0 0.0
    %4016 = vmatpush1.msra.mxu0 0.0
    %4017 = vmatprep.subr.mxu0 0.0
    %4018 = vmatpush1.msra.mxu0 0.0
    %4019 = vmatprep.subr.mxu0 0.0
    %4020 = vmatpush1.msra.mxu0 0.0
    %4021 = vmatprep.subr.mxu0 0.0
    %4022 = vmatpush1.msra.mxu0 0.0
    %4023 = vmatprep.subr.mxu0 0.0
    %4024 = vmatpush1.msra.mxu0 0.0
    %4025 = vmatprep.subr.mxu0 0.0
    %4026 = vmatpush1.msra.mxu0 0.0
    %4027 = vmatprep.subr.mxu0 0.0
    %4028 = vmatpush1.msra.mxu0 0.0
    %4029 = vmatprep.subr.mxu0 0.0
    %4030 = vmatpush1.msra.mxu0 0.0
    %4031 = vmatprep.subr.mxu0 0.0
    %4032 = vmatpush1.msra.mxu0 0.0
    %4033 = vmatprep.subr.mxu0 0.0
    %4034 = vmatpush1.msra.mxu0 0.0
    %4035 = vmatprep.subr.mxu0 0.0
    %4036 = vmatpush1.msra.mxu0 0.0
    %4037 = vmatprep.subr.mxu0 0.0
    %4038 = vmatpush1.msra.mxu0 0.0
    %4039 = vmatprep.subr.mxu0 0.0
    %4040 = vmatpush1.msra.mxu0 0.0
    %4041 = vmatprep.subr.mxu0 0.0
    %4042 = vmatpush1.msra.mxu0 0.0
    %4043 = vmatprep.subr.mxu0 0.0
    %4044 = vmatpush1.msra.mxu0 0.0
    %4045 = vmatprep.mubr.f32.mxu0 0.0
    %4046 = vmatmul.mubr.f32.gmra.mrb[0].mxu0 %v3951
    %v4047 = vpop.f32.mrb[0].mxu0
    %v4048 = vadd.f32 0.0, %v4047
    %v4049 = vpop.f32.mrb[0].mxu0
    %v4050 = vadd.f32 0.0, %v4049
    %4051 = vmatprep.mubr.f32.mxu0 0.0
    %4052 = vmatmul.mubr.f32.gmra.mrb[0].mxu0 %v3954
    %v4053 = vpop.f32.mrb[0].mxu0
    %v4054 = vadd.f32 0.0, %v4053
    %v4055 = vpop.f32.mrb[0].mxu0
    %v4056 = vadd.f32 0.0, %v4055
    %4057 = vmatprep.mubr.f32.mxu0 0.0
    %4058 = vmatmul.mubr.f32.gmra.mrb[0].mxu0 %v3957
    %v4059 = vpop.f32.mrb[0].mxu0
    %v4060 = vadd.f32 0.0, %v4059
    %v4061 = vpop.f32.mrb[0].mxu0
    %v4062 = vadd.f32 0.0, %v4061
    %4063 = vmatprep.mubr.f32.mxu0 0.0
    %4064 = vmatmul.mubr.f32.gmra.mrb[0].mxu0 %v3960
    %v4065 = vpop.f32.mrb[0].mxu0
    %v4066 = vadd.f32 0.0, %v4065
    %v4067 = vpop.f32.mrb[0].mxu0
    %v4068 = vadd.f32 0.0, %v4067
    %4069 = vmatprep.mubr.f32.mxu0 0.0
    %4070 = vmatmul.mubr.f32.gmra.mrb[0].mxu0 %v3963
    %v4071 = vpop.f32.mrb[0].mxu0
    %v4072 = vadd.f32 0.0, %v4071
    %v4073 = vpop.f32.mrb[0].mxu0
    %v4074 = vadd.f32 0.0, %v4073
    %4075 = vmatprep.mubr.f32.mxu0 0.0
    %4076 = vmatmul.mubr.f32.gmra.mrb[0].mxu0 %v3966
    %v4077 = vpop.f32.mrb[0].mxu0
    %v4078 = vadd.f32 0.0, %v4077
    %v4079 = vpop.f32.mrb[0].mxu0
    %v4080 = vadd.f32 0.0, %v4079
    %4081 = vmatprep.mubr.f32.mxu0 0.0
    %4082 = vmatmul.mubr.f32.gmra.mrb[0].mxu0 %v3969
    %v4083 = vpop.f32.mrb[0].mxu0
    %v4084 = vadd.f32 0.0, %v4083
    %v4085 = vpop.f32.mrb[0].mxu0
    %v4086 = vadd.f32 0.0, %v4085
    %4087 = vmatprep.mubr.f32.mxu0 0.0
    %4088 = vmatmul.mubr.f32.gmra.mrb[0].mxu0 %v3972
    %v4089 = vpop.f32.mrb[0].mxu0
    %v4090 = vadd.f32 0.0, %v4089
    %v4091 = vpop.f32.mrb[0].mxu0
    %v4092 = vadd.f32 0.0, %v4091
    %4093 = vdwg.mxu0
    %v4094 = vmax.f32 %v4048, %v4060
    %v4095 = vmax.f32 %v4054, %v4066
    %v4096 = vmax.f32 %v4094, %v4072
    %v4097 = vmax.f32 %v4095, %v4078
    %v4098 = vmax.f32 %v4096, %v4084
    %v4099 = vmax.f32 %v4097, %v4090
    %v4100 = vmax.f32 %v4098, %v4099
    %v4101 = vrot.slane %v4100, 4
    %v4102 = vmax.f32 %v4100, %v4101
    %v4103 = vrot.slane %v4102, 2
    %v4104 = vmax.f32 %v4102, %v4103
    %v4105 = vrot.slane %v4104, 1
    %v4106 = vmax.f32 %v4104, %v4105
    %v4107 = vsel %vm82, %v4050, -inf
    %v4108 = vsel %vm82, %v4056, -inf
    %v4109 = vsel %vm82, %v4062, -inf
    %v4110 = vmax.f32 %v4107, %v4109
    %v4111 = vsel %vm82, %v4068, -inf
    %v4112 = vmax.f32 %v4108, %v4111
    %v4113 = vsel %vm82, %v4074, -inf
    %v4114 = vmax.f32 %v4110, %v4113
    %v4115 = vsel %vm82, %v4080, -inf
    %v4116 = vmax.f32 %v4112, %v4115
    %v4117 = vsel %vm82, %v4086, -inf
    %v4118 = vmax.f32 %v4114, %v4117
    %v4119 = vsel %vm82, %v4092, -inf
    %v4120 = vmax.f32 %v4116, %v4119
    %v4121 = vmax.f32 %v4118, %v4120
    %v4122 = vrot.slane %v4121, 4
    %v4123 = vmax.f32 %v4121, %v4122
    %v4124 = vrot.slane %v4123, 2
    %v4125 = vmax.f32 %v4123, %v4124
    %v4126 = vrot.slane %v4125, 1
    %v4127 = vmax.f32 %v4125, %v4126
    %v4128 = vsub.f32 %v4048, %v4106
    %v4129 = vsub.f32 %v4050, %v4127
    %v4130 = vsub.f32 %v4054, %v4106
    %v4131 = vsub.f32 %v4056, %v4127
    %v4132 = vsub.f32 %v4060, %v4106
    %v4133 = vsub.f32 %v4062, %v4127
    %v4134 = vsub.f32 %v4066, %v4106
    %v4135 = vsub.f32 %v4068, %v4127
    %v4136 = vsub.f32 %v4072, %v4106
    %v4137 = vsub.f32 %v4074, %v4127
    %v4138 = vsub.f32 %v4078, %v4106
    %v4139 = vsub.f32 %v4080, %v4127
    %v4140 = vsub.f32 %v4084, %v4106
    %v4141 = vsub.f32 %v4086, %v4127
    %v4142 = vsub.f32 %v4090, %v4106
    %v4143 = vsub.f32 %v4092, %v4127
    %v4144 = vmul.f32 %v4128, 1.442695
    %v4145 = vpow.pop %v4144
    %v4146 = vmul.f32 %v4129, 1.442695
    %v4147 = vpow.pop %v4146
    %v4148 = vmul.f32 %v4130, 1.442695
    %v4149 = vpow.pop %v4148
    %v4150 = vmul.f32 %v4131, 1.442695
    %v4151 = vpow.pop %v4150
    %v4152 = vmul.f32 %v4132, 1.442695
    %v4153 = vpow.pop %v4152
    %v4154 = vmul.f32 %v4133, 1.442695
    %v4155 = vpow.pop %v4154
    %v4156 = vmul.f32 %v4134, 1.442695
    %v4157 = vpow.pop %v4156
    %v4158 = vmul.f32 %v4135, 1.442695
    %v4159 = vpow.pop %v4158
    %v4160 = vmul.f32 %v4136, 1.442695
    %v4161 = vpow.pop %v4160
    %v4162 = vmul.f32 %v4137, 1.442695
    %v4163 = vpow.pop %v4162
    %v4164 = vmul.f32 %v4138, 1.442695
    %v4165 = vpow.pop %v4164
    %v4166 = vmul.f32 %v4139, 1.442695
    %v4167 = vpow.pop %v4166
    %v4168 = vmul.f32 %v4140, 1.442695
    %v4169 = vpow.pop %v4168
    %v4170 = vmul.f32 %v4141, 1.442695
    %v4171 = vpow.pop %v4170
    %v4172 = vmul.f32 %v4142, 1.442695
    %v4173 = vpow.pop %v4172
    %v4174 = vmul.f32 %v4143, 1.442695
    %v4175 = vpow.pop %v4174
    %v4176 = vadd.f32 %v4145, %v4149
    %v4177 = vadd.f32 %v4176, %v4153
    %v4178 = vadd.f32 %v4177, %v4157
    %v4179 = vadd.f32 %v4178, %v4161
    %v4180 = vadd.f32 %v4179, %v4165
    %v4181 = vadd.f32 %v4180, %v4169
    %v4182 = vadd.f32 %v4181, %v4173
    %v4183 = vrot.slane %v4182, 4
    %v4184 = vadd.f32 %v4182, %v4183
    %v4185 = vrot.slane %v4184, 2
    %v4186 = vadd.f32 %v4184, %v4185
    %v4187 = vrot.slane %v4186, 1
    %v4188 = vadd.f32 %v4186, %v4187
    %v4189 = vsel %vm82, %v4147, 0.0
    %v4190 = vsel %vm82, %v4151, 0.0
    %v4191 = vadd.f32 %v4189, %v4190
    %v4192 = vsel %vm82, %v4155, 0.0
    %v4193 = vadd.f32 %v4191, %v4192
    %v4194 = vsel %vm82, %v4159, 0.0
    %v4195 = vadd.f32 %v4193, %v4194
    %v4196 = vsel %vm82, %v4163, 0.0
    %v4197 = vadd.f32 %v4195, %v4196
    %v4198 = vsel %vm82, %v4167, 0.0
    %v4199 = vadd.f32 %v4197, %v4198
    %v4200 = vsel %vm82, %v4171, 0.0
    %v4201 = vadd.f32 %v4199, %v4200
    %v4202 = vsel %vm82, %v4175, 0.0
    %v4203 = vadd.f32 %v4201, %v4202
    %v4204 = vrot.slane %v4203, 4
    %v4205 = vadd.f32 %v4203, %v4204
    %v4206 = vrot.slane %v4205, 2
    %v4207 = vadd.f32 %v4205, %v4206
    %v4208 = vrot.slane %v4207, 1
    %v4209 = vadd.f32 %v4207, %v4208
    %v4210 = vrcp.pop %v4188
    %v4211 = vrcp.pop %v4209
    %v4213 = vsel %vm82, %v492, 0
    %v4216 = vsel %vm82, %v493, 0
    %4218 = vmatprep.subr.mxu0 %v4147
    %4219 = vmatpush1.msra.mxu0 %v4145
    %4220 = vmatprep.subr.mxu0 %v4151
    %4221 = vmatpush1.msra.mxu0 %v4149
    %4222 = vmatprep.subr.mxu0 %v4155
    %4223 = vmatpush1.msra.mxu0 %v4153
    %4224 = vmatprep.subr.mxu0 %v4159
    %4225 = vmatpush1.msra.mxu0 %v4157
    %4226 = vmatprep.subr.mxu0 %v4163
    %4227 = vmatpush1.msra.mxu0 %v4161
    %4228 = vmatprep.subr.mxu0 %v4167
    %4229 = vmatpush1.msra.mxu0 %v4165
    %4230 = vmatprep.subr.mxu0 %v4171
    %4231 = vmatpush1.msra.mxu0 %v4169
    %4232 = vmatprep.subr.mxu0 %v4175
    %4233 = vmatpush1.msra.mxu0 %v4173
    %4234 = vmatprep.subr.mxu0 0.0
    %4235 = vmatpush1.msra.mxu0 0.0
    %4236 = vmatprep.subr.mxu0 0.0
    %4237 = vmatpush1.msra.mxu0 0.0
    %4238 = vmatprep.subr.mxu0 0.0
    %4239 = vmatpush1.msra.mxu0 0.0
    %4240 = vmatprep.subr.mxu0 0.0
    %4241 = vmatpush1.msra.mxu0 0.0
    %4242 = vmatprep.subr.mxu0 0.0
    %4243 = vmatpush1.msra.mxu0 0.0
    %4244 = vmatprep.subr.mxu0 0.0
    %4245 = vmatpush1.msra.mxu0 0.0
    %4246 = vmatprep.subr.mxu0 0.0
    %4247 = vmatpush1.msra.mxu0 0.0
    %4248 = vmatprep.subr.mxu0 0.0
    %4249 = vmatpush1.msra.mxu0 0.0
    %4250 = vmatprep.subr.mxu0 0.0
    %4251 = vmatpush1.msra.mxu0 0.0
    %4252 = vmatprep.subr.mxu0 0.0
    %4253 = vmatpush1.msra.mxu0 0.0
    %4254 = vmatprep.subr.mxu0 0.0
    %4255 = vmatpush1.msra.mxu0 0.0
    %4256 = vmatprep.subr.mxu0 0.0
    %4257 = vmatpush1.msra.mxu0 0.0
    %4258 = vmatprep.subr.mxu0 0.0
    %4259 = vmatpush1.msra.mxu0 0.0
    %4260 = vmatprep.subr.mxu0 0.0
    %4261 = vmatpush1.msra.mxu0 0.0
    %4262 = vmatprep.subr.mxu0 0.0
    %4263 = vmatpush1.msra.mxu0 0.0
    %4264 = vmatprep.subr.mxu0 0.0
    %4265 = vmatpush1.msra.mxu0 0.0
    %4266 = vmatprep.subr.mxu0 0.0
    %4267 = vmatpush1.msra.mxu0 0.0
    %4268 = vmatprep.subr.mxu0 0.0
    %4269 = vmatpush1.msra.mxu0 0.0
    %4270 = vmatprep.subr.mxu0 0.0
    %4271 = vmatpush1.msra.mxu0 0.0
    %4272 = vmatprep.subr.mxu0 0.0
    %4273 = vmatpush1.msra.mxu0 0.0
    %4274 = vmatprep.subr.mxu0 0.0
    %4275 = vmatpush1.msra.mxu0 0.0
    %4276 = vmatprep.subr.mxu0 0.0
    %4277 = vmatpush1.msra.mxu0 0.0
    %4278 = vmatprep.subr.mxu0 0.0
    %4279 = vmatpush1.msra.mxu0 0.0
    %4280 = vmatprep.subr.mxu0 0.0
    %4281 = vmatpush1.msra.mxu0 0.0
    %4282 = vmatprep.mubr.f32.mxu0 0.0
    %4283 = vmatmul.mubr.f32.gmra.mrb[0].mxu0 %v4213
    %v4284 = vpop.f32.mrb[0].mxu0
    %v4285 = vadd.f32 0.0, %v4284
    %v4286 = vpop.f32.mrb[0].mxu0
    %v4287 = vadd.f32 0.0, %v4286
    %4288 = vmatprep.mubr.f32.mxu0 0.0
    %4289 = vmatmul.mubr.f32.gmra.mrb[0].mxu0 %v4216
    %v4290 = vpop.f32.mrb[0].mxu0
    %v4291 = vadd.f32 0.0, %v4290
    %v4292 = vpop.f32.mrb[0].mxu0
    %v4293 = vadd.f32 0.0, %v4292
    %4294 = vdwg.mxu0
    %v4295 = vmul.f32 %v4285, %v4210
    %v4296 = vmul.f32 %v4287, %v4211
    %v4297 = vmul.f32 %v4291, %v4210
    %v4298 = vmul.f32 %v4293, %v4211
    %4303 = vrot.lane.b32.xlu0 %v4295, 64
    %v4304 = vpop.permute.xlu0 %4303
    %4305 = vrot.lane.b32.xlu0 %v4296, 64
    %v4306 = vpop.permute.xlu0 %4305
    %4307 = vrot.lane.b32.xlu0 %v4297, 64
    %v4308 = vpop.permute.xlu0 %4307
    %4309 = vrot.lane.b32.xlu0 %v4298, 64
    %v4310 = vpop.permute.xlu0 %4309
    %v4311 = vsel %vm82, %v4304, %v4306
    %v4312 = vsel %vm82, %v4308, %v4310
    %4317 = vst.msk [vmem:[#allocation3] sm:$0xff] %vm89, %v4304
    %4318 = vst [vmem:[#allocation3 + $0x8] sm:$0xff] %v4311
    %4319 = vst.msk [vmem:[#allocation3 + $0x20] sm:$0xff] %vm89, %v4308
    %4320 = vst [vmem:[#allocation3 + $0x28] sm:$0xff] %v4312
    %4322 = vrot.lane.b32.xlu0 %v498, 64
    %v4323 = vpop.permute.xlu0 %4322
    %4325 = vxpose.xlu0.b32.start [1/16] %v4323, 128
    %4326 = vxpose.xlu0.b32.cont [2/16] 0.0, 128
    %4327 = vxpose.xlu0.b32.cont [3/16] 0.0, 128
    %4328 = vxpose.xlu0.b32.cont [4/16] 0.0, 128
    %4329 = vxpose.xlu0.b32.cont [5/16] 0.0, 128
    %4330 = vxpose.xlu0.b32.cont [6/16] 0.0, 128
    %4331 = vxpose.xlu0.b32.cont [7/16] 0.0, 128
    %4332 = vxpose.xlu0.b32.cont [8/16] 0.0, 128
    %4333 = vxpose.xlu0.b32.cont [9/16] 0.0, 128
    %4334 = vxpose.xlu0.b32.cont [10/16] 0.0, 128
    %4335 = vxpose.xlu0.b32.cont [11/16] 0.0, 128
    %4336 = vxpose.xlu0.b32.cont [12/16] 0.0, 128
    %4337 = vxpose.xlu0.b32.cont [13/16] 0.0, 128
    %4338 = vxpose.xlu0.b32.cont [14/16] 0.0, 128
    %4339 = vxpose.xlu0.b32.cont [15/16] 0.0, 128
    %4340 = vxpose.xlu0.b32.end [16/16] 0.0, 128
    %v4341 = vpop.trf.xlu0
    %v4342 = vpop.trf.xlu0
    %v4343 = vpop.trf.xlu0
    %v4344 = vpop.trf.xlu0
    %v4345 = vpop.trf.xlu0
    %v4346 = vpop.trf.xlu0
    %v4347 = vpop.trf.xlu0
    %v4348 = vpop.trf.xlu0
    %v4349 = vpop.trf.xlu0
    %v4350 = vpop.trf.xlu0
    %v4351 = vpop.trf.xlu0
    %v4352 = vpop.trf.xlu0
    %v4353 = vpop.trf.xlu0
    %v4354 = vpop.trf.xlu0
    %v4355 = vpop.trf.xlu0
    %v4356 = vpop.trf.xlu0
    %4358 = vrot.lane.b32.xlu0 %v482, 64
    %v4359 = vpop.permute.xlu0 %4358
    %4360 = vrot.lane.b32.xlu0 %v483, 64
    %v4361 = vpop.permute.xlu0 %4360
    %v4362 = vsel %vm82, %v4359, %v4361
    %v4364 = vsel %vm3949, %v4341, 0
    %v4367 = vsel %vm3949, %v4342, 0
    %v4370 = vsel %vm3949, %v4343, 0
    %v4373 = vsel %vm3949, %v4344, 0
    %v4376 = vsel %vm3949, %v4345, 0
    %v4379 = vsel %vm3949, %v4346, 0
    %v4382 = vsel %vm3949, %v4347, 0
    %v4385 = vsel %vm3949, %v4348, 0
    %v4387 = vsel %vm3974, %v4362, 0
    %v4389 = vsel %vm3974, %v4361, 0
    %4391 = vmatprep.subr.mxu0 %v4389
    %4392 = vmatpush1.msra.mxu0 %v4387
    %4393 = vmatprep.subr.mxu0 0.0
    %4394 = vmatpush1.msra.mxu0 0.0
    %4395 = vmatprep.subr.mxu0 0.0
    %4396 = vmatpush1.msra.mxu0 0.0
    %4397 = vmatprep.subr.mxu0 0.0
    %4398 = vmatpush1.msra.mxu0 0.0
    %4399 = vmatprep.subr.mxu0 0.0
    %4400 = vmatpush1.msra.mxu0 0.0
    %4401 = vmatprep.subr.mxu0 0.0
    %4402 = vmatpush1.msra.mxu0 0.0
    %4403 = vmatprep.subr.mxu0 0.0
    %4404 = vmatpush1.msra.mxu0 0.0
    %4405 = vmatprep.subr.mxu0 0.0
    %4406 = vmatpush1.msra.mxu0 0.0
    %4407 = vmatprep.subr.mxu0 0.0
    %4408 = vmatpush1.msra.mxu0 0.0
    %4409 = vmatprep.subr.mxu0 0.0
    %4410 = vmatpush1.msra.mxu0 0.0
    %4411 = vmatprep.subr.mxu0 0.0
    %4412 = vmatpush1.msra.mxu0 0.0
    %4413 = vmatprep.subr.mxu0 0.0
    %4414 = vmatpush1.msra.mxu0 0.0
    %4415 = vmatprep.subr.mxu0 0.0
    %4416 = vmatpush1.msra.mxu0 0.0
    %4417 = vmatprep.subr.mxu0 0.0
    %4418 = vmatpush1.msra.mxu0 0.0
    %4419 = vmatprep.subr.mxu0 0.0
    %4420 = vmatpush1.msra.mxu0 0.0
    %4421 = vmatprep.subr.mxu0 0.0
    %4422 = vmatpush1.msra.mxu0 0.0
    %4423 = vmatprep.subr.mxu0 0.0
    %4424 = vmatpush1.msra.mxu0 0.0
    %4425 = vmatprep.subr.mxu0 0.0
    %4426 = vmatpush1.msra.mxu0 0.0
    %4427 = vmatprep.subr.mxu0 0.0
    %4428 = vmatpush1.msra.mxu0 0.0
    %4429 = vmatprep.subr.mxu0 0.0
    %4430 = vmatpush1.msra.mxu0 0.0
    %4431 = vmatprep.subr.mxu0 0.0
    %4432 = vmatpush1.msra.mxu0 0.0
    %4433 = vmatprep.subr.mxu0 0.0
    %4434 = vmatpush1.msra.mxu0 0.0
    %4435 = vmatprep.subr.mxu0 0.0
    %4436 = vmatpush1.msra.mxu0 0.0
    %4437 = vmatprep.subr.mxu0 0.0
    %4438 = vmatpush1.msra.mxu0 0.0
    %4439 = vmatprep.subr.mxu0 0.0
    %4440 = vmatpush1.msra.mxu0 0.0
    %4441 = vmatprep.subr.mxu0 0.0
    %4442 = vmatpush1.msra.mxu0 0.0
    %4443 = vmatprep.subr.mxu0 0.0
    %4444 = vmatpush1.msra.mxu0 0.0
    %4445 = vmatprep.subr.mxu0 0.0
    %4446 = vmatpush1.msra.mxu0 0.0
    %4447 = vmatprep.subr.mxu0 0.0
    %4448 = vmatpush1.msra.mxu0 0.0
    %4449 = vmatprep.subr.mxu0 0.0
    %4450 = vmatpush1.msra.mxu0 0.0
    %4451 = vmatprep.subr.mxu0 0.0
    %4452 = vmatpush1.msra.mxu0 0.0
    %4453 = vmatprep.subr.mxu0 0.0
    %4454 = vmatpush1.msra.mxu0 0.0
    %4455 = vmatprep.mubr.f32.mxu0 0.0
    %4456 = vmatmul.mubr.f32.gmra.mrb[0].mxu0 %v4364
    %v4457 = vpop.f32.mrb[0].mxu0
    %v4458 = vadd.f32 0.0, %v4457
    %v4459 = vpop.f32.mrb[0].mxu0
    %v4460 = vadd.f32 0.0, %v4459
    %4461 = vmatprep.mubr.f32.mxu0 0.0
    %4462 = vmatmul.mubr.f32.gmra.mrb[0].mxu0 %v4367
    %v4463 = vpop.f32.mrb[0].mxu0
    %v4464 = vadd.f32 0.0, %v4463
    %v4465 = vpop.f32.mrb[0].mxu0
    %v4466 = vadd.f32 0.0, %v4465
    %4467 = vmatprep.mubr.f32.mxu0 0.0
    %4468 = vmatmul.mubr.f32.gmra.mrb[0].mxu0 %v4370
    %v4469 = vpop.f32.mrb[0].mxu0
    %v4470 = vadd.f32 0.0, %v4469
    %v4471 = vpop.f32.mrb[0].mxu0
    %v4472 = vadd.f32 0.0, %v4471
    %4473 = vmatprep.mubr.f32.mxu0 0.0
    %4474 = vmatmul.mubr.f32.gmra.mrb[0].mxu0 %v4373
    %v4475 = vpop.f32.mrb[0].mxu0
    %v4476 = vadd.f32 0.0, %v4475
    %v4477 = vpop.f32.mrb[0].mxu0
    %v4478 = vadd.f32 0.0, %v4477
    %4479 = vmatprep.mubr.f32.mxu0 0.0
    %4480 = vmatmul.mubr.f32.gmra.mrb[0].mxu0 %v4376
    %v4481 = vpop.f32.mrb[0].mxu0
    %v4482 = vadd.f32 0.0, %v4481
    %v4483 = vpop.f32.mrb[0].mxu0
    %v4484 = vadd.f32 0.0, %v4483
    %4485 = vmatprep.mubr.f32.mxu0 0.0
    %4486 = vmatmul.mubr.f32.gmra.mrb[0].mxu0 %v4379
    %v4487 = vpop.f32.mrb[0].mxu0
    %v4488 = vadd.f32 0.0, %v4487
    %v4489 = vpop.f32.mrb[0].mxu0
    %v4490 = vadd.f32 0.0, %v4489
    %4491 = vmatprep.mubr.f32.mxu0 0.0
    %4492 = vmatmul.mubr.f32.gmra.mrb[0].mxu0 %v4382
    %v4493 = vpop.f32.mrb[0].mxu0
    %v4494 = vadd.f32 0.0, %v4493
    %v4495 = vpop.f32.mrb[0].mxu0
    %v4496 = vadd.f32 0.0, %v4495
    %4497 = vmatprep.mubr.f32.mxu0 0.0
    %4498 = vmatmul.mubr.f32.gmra.mrb[0].mxu0 %v4385
    %v4499 = vpop.f32.mrb[0].mxu0
    %v4500 = vadd.f32 0.0, %v4499
    %v4501 = vpop.f32.mrb[0].mxu0
    %v4502 = vadd.f32 0.0, %v4501
    %4503 = vdwg.mxu0
    %v4504 = vmax.f32 %v4458, %v4470
    %v4505 = vmax.f32 %v4464, %v4476
    %v4506 = vmax.f32 %v4504, %v4482
    %v4507 = vmax.f32 %v4505, %v4488
    %v4508 = vmax.f32 %v4506, %v4494
    %v4509 = vmax.f32 %v4507, %v4500
    %v4510 = vmax.f32 %v4508, %v4509
    %v4511 = vrot.slane %v4510, 4
    %v4512 = vmax.f32 %v4510, %v4511
    %v4513 = vrot.slane %v4512, 2
    %v4514 = vmax.f32 %v4512, %v4513
    %v4515 = vrot.slane %v4514, 1
    %v4516 = vmax.f32 %v4514, %v4515
    %v4517 = vsel %vm82, %v4460, -inf
    %v4518 = vsel %vm82, %v4466, -inf
    %v4519 = vsel %vm82, %v4472, -inf
    %v4520 = vmax.f32 %v4517, %v4519
    %v4521 = vsel %vm82, %v4478, -inf
    %v4522 = vmax.f32 %v4518, %v4521
    %v4523 = vsel %vm82, %v4484, -inf
    %v4524 = vmax.f32 %v4520, %v4523
    %v4525 = vsel %vm82, %v4490, -inf
    %v4526 = vmax.f32 %v4522, %v4525
    %v4527 = vsel %vm82, %v4496, -inf
    %v4528 = vmax.f32 %v4524, %v4527
    %v4529 = vsel %vm82, %v4502, -inf
    %v4530 = vmax.f32 %v4526, %v4529
    %v4531 = vmax.f32 %v4528, %v4530
    %v4532 = vrot.slane %v4531, 4
    %v4533 = vmax.f32 %v4531, %v4532
    %v4534 = vrot.slane %v4533, 2
    %v4535 = vmax.f32 %v4533, %v4534
    %v4536 = vrot.slane %v4535, 1
    %v4537 = vmax.f32 %v4535, %v4536
    %v4538 = vsub.f32 %v4458, %v4516
    %v4539 = vsub.f32 %v4460, %v4537
    %v4540 = vsub.f32 %v4464, %v4516
    %v4541 = vsub.f32 %v4466, %v4537
    %v4542 = vsub.f32 %v4470, %v4516
    %v4543 = vsub.f32 %v4472, %v4537
    %v4544 = vsub.f32 %v4476, %v4516
    %v4545 = vsub.f32 %v4478, %v4537
    %v4546 = vsub.f32 %v4482, %v4516
    %v4547 = vsub.f32 %v4484, %v4537
    %v4548 = vsub.f32 %v4488, %v4516
    %v4549 = vsub.f32 %v4490, %v4537
    %v4550 = vsub.f32 %v4494, %v4516
    %v4551 = vsub.f32 %v4496, %v4537
    %v4552 = vsub.f32 %v4500, %v4516
    %v4553 = vsub.f32 %v4502, %v4537
    %v4554 = vmul.f32 %v4538, 1.442695
    %v4555 = vpow.pop %v4554
    %v4556 = vmul.f32 %v4539, 1.442695
    %v4557 = vpow.pop %v4556
    %v4558 = vmul.f32 %v4540, 1.442695
    %v4559 = vpow.pop %v4558
    %v4560 = vmul.f32 %v4541, 1.442695
    %v4561 = vpow.pop %v4560
    %v4562 = vmul.f32 %v4542, 1.442695
    %v4563 = vpow.pop %v4562
    %v4564 = vmul.f32 %v4543, 1.442695
    %v4565 = vpow.pop %v4564
    %v4566 = vmul.f32 %v4544, 1.442695
    %v4567 = vpow.pop %v4566
    %v4568 = vmul.f32 %v4545, 1.442695
    %v4569 = vpow.pop %v4568
    %v4570 = vmul.f32 %v4546, 1.442695
    %v4571 = vpow.pop %v4570
    %v4572 = vmul.f32 %v4547, 1.442695
    %v4573 = vpow.pop %v4572
    %v4574 = vmul.f32 %v4548, 1.442695
    %v4575 = vpow.pop %v4574
    %v4576 = vmul.f32 %v4549, 1.442695
    %v4577 = vpow.pop %v4576
    %v4578 = vmul.f32 %v4550, 1.442695
    %v4579 = vpow.pop %v4578
    %v4580 = vmul.f32 %v4551, 1.442695
    %v4581 = vpow.pop %v4580
    %v4582 = vmul.f32 %v4552, 1.442695
    %v4583 = vpow.pop %v4582
    %v4584 = vmul.f32 %v4553, 1.442695
    %v4585 = vpow.pop %v4584
    %v4586 = vadd.f32 %v4555, %v4559
    %v4587 = vadd.f32 %v4586, %v4563
    %v4588 = vadd.f32 %v4587, %v4567
    %v4589 = vadd.f32 %v4588, %v4571
    %v4590 = vadd.f32 %v4589, %v4575
    %v4591 = vadd.f32 %v4590, %v4579
    %v4592 = vadd.f32 %v4591, %v4583
    %v4593 = vrot.slane %v4592, 4
    %v4594 = vadd.f32 %v4592, %v4593
    %v4595 = vrot.slane %v4594, 2
    %v4596 = vadd.f32 %v4594, %v4595
    %v4597 = vrot.slane %v4596, 1
    %v4598 = vadd.f32 %v4596, %v4597
    %v4599 = vsel %vm82, %v4557, 0.0
    %v4600 = vsel %vm82, %v4561, 0.0
    %v4601 = vadd.f32 %v4599, %v4600
    %v4602 = vsel %vm82, %v4565, 0.0
    %v4603 = vadd.f32 %v4601, %v4602
    %v4604 = vsel %vm82, %v4569, 0.0
    %v4605 = vadd.f32 %v4603, %v4604
    %v4606 = vsel %vm82, %v4573, 0.0
    %v4607 = vadd.f32 %v4605, %v4606
    %v4608 = vsel %vm82, %v4577, 0.0
    %v4609 = vadd.f32 %v4607, %v4608
    %v4610 = vsel %vm82, %v4581, 0.0
    %v4611 = vadd.f32 %v4609, %v4610
    %v4612 = vsel %vm82, %v4585, 0.0
    %v4613 = vadd.f32 %v4611, %v4612
    %v4614 = vrot.slane %v4613, 4
    %v4615 = vadd.f32 %v4613, %v4614
    %v4616 = vrot.slane %v4615, 2
    %v4617 = vadd.f32 %v4615, %v4616
    %v4618 = vrot.slane %v4617, 1
    %v4619 = vadd.f32 %v4617, %v4618
    %v4620 = vrcp.pop %v4598
    %v4621 = vrcp.pop %v4619
    %4622 = vrot.lane.b32.xlu0 %v492, 64
    %v4623 = vpop.permute.xlu0 %4622
    %4624 = vrot.lane.b32.xlu0 %v493, 64
    %v4625 = vpop.permute.xlu0 %4624
    %v4626 = vsel %vm82, %v4623, 0
    %v4628 = vsel %vm82, %v4625, 0
    %4630 = vmatprep.subr.mxu0 %v4557
    %4631 = vmatpush1.msra.mxu0 %v4555
    %4632 = vmatprep.subr.mxu0 %v4561
    %4633 = vmatpush1.msra.mxu0 %v4559
    %4634 = vmatprep.subr.mxu0 %v4565
    %4635 = vmatpush1.msra.mxu0 %v4563
    %4636 = vmatprep.subr.mxu0 %v4569
    %4637 = vmatpush1.msra.mxu0 %v4567
    %4638 = vmatprep.subr.mxu0 %v4573
    %4639 = vmatpush1.msra.mxu0 %v4571
    %4640 = vmatprep.subr.mxu0 %v4577
    %4641 = vmatpush1.msra.mxu0 %v4575
    %4642 = vmatprep.subr.mxu0 %v4581
    %4643 = vmatpush1.msra.mxu0 %v4579
    %4644 = vmatprep.subr.mxu0 %v4585
    %4645 = vmatpush1.msra.mxu0 %v4583
    %4646 = vmatprep.subr.mxu0 0.0
    %4647 = vmatpush1.msra.mxu0 0.0
    %4648 = vmatprep.subr.mxu0 0.0
    %4649 = vmatpush1.msra.mxu0 0.0
    %4650 = vmatprep.subr.mxu0 0.0
    %4651 = vmatpush1.msra.mxu0 0.0
    %4652 = vmatprep.subr.mxu0 0.0
    %4653 = vmatpush1.msra.mxu0 0.0
    %4654 = vmatprep.subr.mxu0 0.0
    %4655 = vmatpush1.msra.mxu0 0.0
    %4656 = vmatprep.subr.mxu0 0.0
    %4657 = vmatpush1.msra.mxu0 0.0
    %4658 = vmatprep.subr.mxu0 0.0
    %4659 = vmatpush1.msra.mxu0 0.0
    %4660 = vmatprep.subr.mxu0 0.0
    %4661 = vmatpush1.msra.mxu0 0.0
    %4662 = vmatprep.subr.mxu0 0.0
    %4663 = vmatpush1.msra.mxu0 0.0
    %4664 = vmatprep.subr.mxu0 0.0
    %4665 = vmatpush1.msra.mxu0 0.0
    %4666 = vmatprep.subr.mxu0 0.0
    %4667 = vmatpush1.msra.mxu0 0.0
    %4668 = vmatprep.subr.mxu0 0.0
    %4669 = vmatpush1.msra.mxu0 0.0
    %4670 = vmatprep.subr.mxu0 0.0
    %4671 = vmatpush1.msra.mxu0 0.0
    %4672 = vmatprep.subr.mxu0 0.0
    %4673 = vmatpush1.msra.mxu0 0.0
    %4674 = vmatprep.subr.mxu0 0.0
    %4675 = vmatpush1.msra.mxu0 0.0
    %4676 = vmatprep.subr.mxu0 0.0
    %4677 = vmatpush1.msra.mxu0 0.0
    %4678 = vmatprep.subr.mxu0 0.0
    %4679 = vmatpush1.msra.mxu0 0.0
    %4680 = vmatprep.subr.mxu0 0.0
    %4681 = vmatpush1.msra.mxu0 0.0
    %4682 = vmatprep.subr.mxu0 0.0
    %4683 = vmatpush1.msra.mxu0 0.0
    %4684 = vmatprep.subr.mxu0 0.0
    %4685 = vmatpush1.msra.mxu0 0.0
    %4686 = vmatprep.subr.mxu0 0.0
    %4687 = vmatpush1.msra.mxu0 0.0
    %4688 = vmatprep.subr.mxu0 0.0
    %4689 = vmatpush1.msra.mxu0 0.0
    %4690 = vmatprep.subr.mxu0 0.0
    %4691 = vmatpush1.msra.mxu0 0.0
    %4692 = vmatprep.subr.mxu0 0.0
    %4693 = vmatpush1.msra.mxu0 0.0
    %4694 = vmatprep.mubr.f32.mxu0 0.0
    %4695 = vmatmul.mubr.f32.gmra.mrb[0].mxu0 %v4626
    %v4696 = vpop.f32.mrb[0].mxu0
    %v4697 = vadd.f32 0.0, %v4696
    %v4698 = vpop.f32.mrb[0].mxu0
    %v4699 = vadd.f32 0.0, %v4698
    %4700 = vmatprep.mubr.f32.mxu0 0.0
    %4701 = vmatmul.mubr.f32.gmra.mrb[0].mxu0 %v4628
    %v4702 = vpop.f32.mrb[0].mxu0
    %v4703 = vadd.f32 0.0, %v4702
    %v4704 = vpop.f32.mrb[0].mxu0
    %v4705 = vadd.f32 0.0, %v4704
    %4706 = vdwg.mxu0
    %v4707 = vmul.f32 %v4697, %v4620
    %v4708 = vmul.f32 %v4699, %v4621
    %v4709 = vmul.f32 %v4703, %v4620
    %v4710 = vmul.f32 %v4705, %v4621
    %4711 = vst [vmem:[#allocation3 + $0x10] sm:$0xff] %v4707
    %4712 = vst.msk [vmem:[#allocation3 + $0x18] sm:$0xff] %vm82, %v4708
    %4713 = vst [vmem:[#allocation3 + $0x30] sm:$0xff] %v4709
    %4714 = vst.msk [vmem:[#allocation3 + $0x38] sm:$0xff] %vm82, %v4710
    %v4715 = vld [vmem:[#allocation3] sm:$0xff]
    %v4716 = vld [vmem:[#allocation3 + $0x8] sm:$0xff]
    %v4717 = vld [vmem:[#allocation3 + $0x10] sm:$0xff]
    %v4718 = vld [vmem:[#allocation3 + $0x18] sm:$0xff]
    %v4719 = vld [vmem:[#allocation3 + $0x20] sm:$0xff]
    %v4720 = vld [vmem:[#allocation3 + $0x28] sm:$0xff]
    %v4721 = vld [vmem:[#allocation3 + $0x30] sm:$0xff]
    %v4722 = vld [vmem:[#allocation3 + $0x38] sm:$0xff]
    %4729 = vrot.lane.b32.xlu0 %v3911, 64
    %v4730 = vpop.permute.xlu0 %4729
    %4731 = vrot.lane.b32.xlu0 %v3912, 64
    %v4732 = vpop.permute.xlu0 %4731
    %4733 = vrot.lane.b32.xlu0 %v3913, 64
    %v4734 = vpop.permute.xlu0 %4733
    %4735 = vrot.lane.b32.xlu0 %v3914, 64
    %v4736 = vpop.permute.xlu0 %4735
    %4737 = vrot.lane.b32.xlu0 %v3915, 64
    %v4738 = vpop.permute.xlu0 %4737
    %4739 = vrot.lane.b32.xlu0 %v3916, 64
    %v4740 = vpop.permute.xlu0 %4739
    %v4741 = vsel %vm82, %v4730, %v4732
    %v4742 = vsel %vm82, %v4732, %v4734
    %v4743 = vsel %vm82, %v4736, %v4738
    %v4744 = vsel %vm82, %v4738, %v4740
    %v4753 = vadd.f32 %v4715, %v4730
    %v4754 = vadd.f32 %v4716, %v4741
    %v4755 = vadd.f32 %v4717, %v4742
    %v4756 = vadd.f32 %v4718, %v4734
    %v4757 = vadd.f32 %v4719, %v4736
    %v4758 = vadd.f32 %v4720, %v4743
    %v4759 = vadd.f32 %v4721, %v4744
    %v4760 = vadd.f32 %v4722, %v4740
    %4761 = vrot.lane.b32.xlu0 %v457, 64
    %v4762 = vpop.permute.xlu0 %4761
    %4763 = vrot.lane.b32.xlu0 %v461, 64
    %v4764 = vpop.permute.xlu0 %4763
    %4765 = vrot.lane.b32.xlu0 %v465, 64
    %v4766 = vpop.permute.xlu0 %4765
    %v4767 = vsel %vm82, %v4762, %v4764
    %v4768 = vsel %vm82, %v4764, %v4766
    %v4773 = vmul.f32 %v4753, %v4762
    %v4774 = vmul.f32 %v4754, %v4767
    %v4775 = vmul.f32 %v4755, %v4768
    %v4776 = vmul.f32 %v4756, %v4766
    %v4777 = vmul.f32 %v4757, %v4762
    %v4778 = vmul.f32 %v4758, %v4767
    %v4779 = vmul.f32 %v4759, %v4768
    %v4780 = vmul.f32 %v4760, %v4766
    %4781 = vst.msk [vmem:[#allocation3] sm:$0xff] %vm89, %v4773
    %4782 = vst [vmem:[#allocation3 + $0x8] sm:$0xff] %v4774
    %4783 = vst [vmem:[#allocation3 + $0x10] sm:$0xff] %v4775
    %4784 = vst.msk [vmem:[#allocation3 + $0x18] sm:$0xff] %vm82, %v4776
    %4785 = vst.msk [vmem:[#allocation3 + $0x20] sm:$0xff] %vm89, %v4777
    %4786 = vst [vmem:[#allocation3 + $0x28] sm:$0xff] %v4778
    %4787 = vst [vmem:[#allocation3 + $0x30] sm:$0xff] %v4779
    %4788 = vst.msk [vmem:[#allocation3 + $0x38] sm:$0xff] %vm82, %v4780
    %v4789 = vld [vmem:[#allocation3] sm:$0xff]
    %v4790 = vld [vmem:[#allocation3 + $0x8] sm:$0xff]
    %v4791 = vld [vmem:[#allocation3 + $0x10] sm:$0xff]
    %v4792 = vld [vmem:[#allocation3 + $0x18] sm:$0xff]
    %v4793 = vld [vmem:[#allocation3 + $0x20] sm:$0xff]
    %v4794 = vld [vmem:[#allocation3 + $0x28] sm:$0xff]
    %v4795 = vld [vmem:[#allocation3 + $0x30] sm:$0xff]
    %v4796 = vld [vmem:[#allocation3 + $0x38] sm:$0xff]
    %4805 = vrot.lane.b32.xlu0 %v4789, 81
    %v4806 = vpop.permute.xlu0 %4805
    %4807 = vrot.lane.b32.xlu0 %v4790, 81
    %v4808 = vpop.permute.xlu0 %4807
    %4809 = vrot.lane.b32.xlu0 %v4791, 81
    %v4810 = vpop.permute.xlu0 %4809
    %4811 = vrot.lane.b32.xlu0 %v4792, 81
    %v4812 = vpop.permute.xlu0 %4811
    %4813 = vrot.lane.b32.xlu0 %v4793, 81
    %v4814 = vpop.permute.xlu0 %4813
    %4815 = vrot.lane.b32.xlu0 %v4794, 81
    %v4816 = vpop.permute.xlu0 %4815
    %4817 = vrot.lane.b32.xlu0 %v4795, 81
    %v4818 = vpop.permute.xlu0 %4817
    %4819 = vrot.lane.b32.xlu0 %v4796, 81
    %v4820 = vpop.permute.xlu0 %4819
    %v4821 = vsel %vm569, %v4806, %v4808
    %v4822 = vsel %vm569, %v4808, %v4810
    %v4823 = vsel %vm569, %v4810, %v4812
    %v4824 = vsel %vm569, %v4814, %v4816
    %v4825 = vsel %vm569, %v4816, %v4818
    %v4826 = vsel %vm569, %v4818, %v4820
    %4833 = vst [vmem:[#allocation4] sm:$0xff] %v4821
    %4834 = vst [vmem:[#allocation4 + $0x8] sm:$0xff] %v4822
    %4835 = vst [vmem:[#allocation4 + $0x10] sm:$0xff] %v4823
    %4836 = vst [vmem:[#allocation4 + $0x18] sm:$0xff] %v4824
    %4837 = vst [vmem:[#allocation4 + $0x20] sm:$0xff] %v4825
    %4838 = vst [vmem:[#allocation4 + $0x28] sm:$0xff] %v4826
    %v4839 = vld [vmem:[#allocation3] sm:$0xff]
    %v4840 = vld [vmem:[#allocation3 + $0x8] sm:$0xff]
    %v4841 = vld [vmem:[#allocation3 + $0x10] sm:$0xff]
    %v4842 = vld [vmem:[#allocation3 + $0x18] sm:$0xff]
    %v4843 = vld [vmem:[#allocation3 + $0x20] sm:$0xff]
    %v4844 = vld [vmem:[#allocation3 + $0x28] sm:$0xff]
    %v4845 = vld [vmem:[#allocation3 + $0x30] sm:$0xff]
    %v4846 = vld [vmem:[#allocation3 + $0x38] sm:$0xff]
    %4855 = vrot.lane.b32.xlu0 %v4839, 80
    %v4856 = vpop.permute.xlu0 %4855
    %4857 = vrot.lane.b32.xlu0 %v4840, 80
    %v4858 = vpop.permute.xlu0 %4857
    %4859 = vrot.lane.b32.xlu0 %v4841, 80
    %v4860 = vpop.permute.xlu0 %4859
    %4861 = vrot.lane.b32.xlu0 %v4842, 80
    %v4862 = vpop.permute.xlu0 %4861
    %4863 = vrot.lane.b32.xlu0 %v4843, 80
    %v4864 = vpop.permute.xlu0 %4863
    %4865 = vrot.lane.b32.xlu0 %v4844, 80
    %v4866 = vpop.permute.xlu0 %4865
    %4867 = vrot.lane.b32.xlu0 %v4845, 80
    %v4868 = vpop.permute.xlu0 %4867
    %4869 = vrot.lane.b32.xlu0 %v4846, 80
    %v4870 = vpop.permute.xlu0 %4869
    %v4871 = vsel %vm620, %v4856, %v4858
    %v4872 = vsel %vm620, %v4858, %v4860
    %v4873 = vsel %vm620, %v4860, %v4862
    %v4874 = vsel %vm620, %v4864, %v4866
    %v4875 = vsel %vm620, %v4866, %v4868
    %v4876 = vsel %vm620, %v4868, %v4870
    %4883 = vst [vmem:[#allocation4 + $0x30] sm:$0xff] %v4871
    %4884 = vst [vmem:[#allocation4 + $0x38] sm:$0xff] %v4872
    %4885 = vst [vmem:[#allocation4 + $0x40] sm:$0xff] %v4873
    %4886 = vst [vmem:[#allocation4 + $0x48] sm:$0xff] %v4874
    %4887 = vst [vmem:[#allocation4 + $0x50] sm:$0xff] %v4875
    %4888 = vst [vmem:[#allocation4 + $0x58] sm:$0xff] %v4876
    %v4889 = vld [vmem:[#allocation3] sm:$0xff]
    %v4890 = vld [vmem:[#allocation3 + $0x8] sm:$0xff]
    %v4891 = vld [vmem:[#allocation3 + $0x10] sm:$0xff]
    %v4892 = vld [vmem:[#allocation3 + $0x18] sm:$0xff]
    %v4893 = vld [vmem:[#allocation3 + $0x20] sm:$0xff]
    %v4894 = vld [vmem:[#allocation3 + $0x28] sm:$0xff]
    %v4895 = vld [vmem:[#allocation3 + $0x30] sm:$0xff]
    %v4896 = vld [vmem:[#allocation3 + $0x38] sm:$0xff]
    %4905 = vrot.lane.b32.xlu0 %v4889, 79
    %v4906 = vpop.permute.xlu0 %4905
    %4907 = vrot.lane.b32.xlu0 %v4890, 79
    %v4908 = vpop.permute.xlu0 %4907
    %4909 = vrot.lane.b32.xlu0 %v4891, 79
    %v4910 = vpop.permute.xlu0 %4909
    %4911 = vrot.lane.b32.xlu0 %v4892, 79
    %v4912 = vpop.permute.xlu0 %4911
    %4913 = vrot.lane.b32.xlu0 %v4893, 79
    %v4914 = vpop.permute.xlu0 %4913
    %4915 = vrot.lane.b32.xlu0 %v4894, 79
    %v4916 = vpop.permute.xlu0 %4915
    %4917 = vrot.lane.b32.xlu0 %v4895, 79
    %v4918 = vpop.permute.xlu0 %4917
    %4919 = vrot.lane.b32.xlu0 %v4896, 79
    %v4920 = vpop.permute.xlu0 %4919
    %v4921 = vsel %vm671, %v4906, %v4908
    %v4922 = vsel %vm671, %v4908, %v4910
    %v4923 = vsel %vm671, %v4910, %v4912
    %v4924 = vsel %vm671, %v4914, %v4916
    %v4925 = vsel %vm671, %v4916, %v4918
    %v4926 = vsel %vm671, %v4918, %v4920
    %4933 = vst [vmem:[#allocation4 + $0x60] sm:$0xff] %v4921
    %4934 = vst [vmem:[#allocation4 + $0x68] sm:$0xff] %v4922
    %4935 = vst [vmem:[#allocation4 + $0x70] sm:$0xff] %v4923
    %4936 = vst [vmem:[#allocation4 + $0x78] sm:$0xff] %v4924
    %4937 = vst [vmem:[#allocation4 + $0x80] sm:$0xff] %v4925
    %4938 = vst [vmem:[#allocation4 + $0x88] sm:$0xff] %v4926
    %v4939 = vld [vmem:[#allocation3] sm:$0xff]
    %v4940 = vld [vmem:[#allocation3 + $0x8] sm:$0xff]
    %v4941 = vld [vmem:[#allocation3 + $0x10] sm:$0xff]
    %v4942 = vld [vmem:[#allocation3 + $0x18] sm:$0xff]
    %v4943 = vld [vmem:[#allocation3 + $0x20] sm:$0xff]
    %v4944 = vld [vmem:[#allocation3 + $0x28] sm:$0xff]
    %v4945 = vld [vmem:[#allocation3 + $0x30] sm:$0xff]
    %v4946 = vld [vmem:[#allocation3 + $0x38] sm:$0xff]
    %4955 = vrot.lane.b32.xlu0 %v4939, 65
    %v4956 = vpop.permute.xlu0 %4955
    %4957 = vrot.lane.b32.xlu0 %v4940, 65
    %v4958 = vpop.permute.xlu0 %4957
    %4959 = vrot.lane.b32.xlu0 %v4941, 65
    %v4960 = vpop.permute.xlu0 %4959
    %4961 = vrot.lane.b32.xlu0 %v4942, 65
    %v4962 = vpop.permute.xlu0 %4961
    %4963 = vrot.lane.b32.xlu0 %v4943, 65
    %v4964 = vpop.permute.xlu0 %4963
    %4965 = vrot.lane.b32.xlu0 %v4944, 65
    %v4966 = vpop.permute.xlu0 %4965
    %4967 = vrot.lane.b32.xlu0 %v4945, 65
    %v4968 = vpop.permute.xlu0 %4967
    %4969 = vrot.lane.b32.xlu0 %v4946, 65
    %v4970 = vpop.permute.xlu0 %4969
    %v4971 = vsel %vm722, %v4956, %v4958
    %v4972 = vsel %vm722, %v4958, %v4960
    %v4973 = vsel %vm722, %v4960, %v4962
    %v4974 = vsel %vm722, %v4964, %v4966
    %v4975 = vsel %vm722, %v4966, %v4968
    %v4976 = vsel %vm722, %v4968, %v4970
    %4983 = vst [vmem:[#allocation4 + $0x90] sm:$0xff] %v4971
    %4984 = vst [vmem:[#allocation4 + $0x98] sm:$0xff] %v4972
    %4985 = vst [vmem:[#allocation4 + $0xa0] sm:$0xff] %v4973
    %4986 = vst [vmem:[#allocation4 + $0xa8] sm:$0xff] %v4974
    %4987 = vst [vmem:[#allocation4 + $0xb0] sm:$0xff] %v4975
    %4988 = vst [vmem:[#allocation4 + $0xb8] sm:$0xff] %v4976
    %v4989 = vld [vmem:[#allocation3] sm:$0xff]
    %v4990 = vld [vmem:[#allocation3 + $0x8] sm:$0xff]
    %v4991 = vld [vmem:[#allocation3 + $0x10] sm:$0xff]
    %v4992 = vld [vmem:[#allocation3 + $0x18] sm:$0xff]
    %v4993 = vld [vmem:[#allocation3 + $0x20] sm:$0xff]
    %v4994 = vld [vmem:[#allocation3 + $0x28] sm:$0xff]
    %v4995 = vld [vmem:[#allocation3 + $0x30] sm:$0xff]
    %v4996 = vld [vmem:[#allocation3 + $0x38] sm:$0xff]
    %5005 = vrot.lane.b32.xlu0 %v4989, 64
    %v5006 = vpop.permute.xlu0 %5005
    %5007 = vrot.lane.b32.xlu0 %v4990, 64
    %v5008 = vpop.permute.xlu0 %5007
    %5009 = vrot.lane.b32.xlu0 %v4991, 64
    %v5010 = vpop.permute.xlu0 %5009
    %5011 = vrot.lane.b32.xlu0 %v4992, 64
    %v5012 = vpop.permute.xlu0 %5011
    %5013 = vrot.lane.b32.xlu0 %v4993, 64
    %v5014 = vpop.permute.xlu0 %5013
    %5015 = vrot.lane.b32.xlu0 %v4994, 64
    %v5016 = vpop.permute.xlu0 %5015
    %5017 = vrot.lane.b32.xlu0 %v4995, 64
    %v5018 = vpop.permute.xlu0 %5017
    %5019 = vrot.lane.b32.xlu0 %v4996, 64
    %v5020 = vpop.permute.xlu0 %5019
    %v5021 = vsel %vm82, %v5006, %v5008
    %v5022 = vsel %vm82, %v5008, %v5010
    %v5023 = vsel %vm82, %v5010, %v5012
    %v5024 = vsel %vm82, %v5014, %v5016
    %v5025 = vsel %vm82, %v5016, %v5018
    %v5026 = vsel %vm82, %v5018, %v5020
    %5033 = vst [vmem:[#allocation4 + $0xc0] sm:$0xff] %v5021
    %5034 = vst [vmem:[#allocation4 + $0xc8] sm:$0xff] %v5022
    %5035 = vst [vmem:[#allocation4 + $0xd0] sm:$0xff] %v5023
    %5036 = vst [vmem:[#allocation4 + $0xd8] sm:$0xff] %v5024
    %5037 = vst [vmem:[#allocation4 + $0xe0] sm:$0xff] %v5025
    %5038 = vst [vmem:[#allocation4 + $0xe8] sm:$0xff] %v5026
    %v5039 = vld [vmem:[#allocation3] sm:$0xff]
    %v5040 = vld [vmem:[#allocation3 + $0x8] sm:$0xff]
    %v5041 = vld [vmem:[#allocation3 + $0x10] sm:$0xff]
    %v5042 = vld [vmem:[#allocation3 + $0x18] sm:$0xff]
    %v5043 = vld [vmem:[#allocation3 + $0x20] sm:$0xff]
    %v5044 = vld [vmem:[#allocation3 + $0x28] sm:$0xff]
    %v5045 = vld [vmem:[#allocation3 + $0x30] sm:$0xff]
    %v5046 = vld [vmem:[#allocation3 + $0x38] sm:$0xff]
    %5055 = vrot.lane.b32.xlu0 %v5039, 63
    %v5056 = vpop.permute.xlu0 %5055
    %5057 = vrot.lane.b32.xlu0 %v5040, 63
    %v5058 = vpop.permute.xlu0 %5057
    %5059 = vrot.lane.b32.xlu0 %v5041, 63
    %v5060 = vpop.permute.xlu0 %5059
    %5061 = vrot.lane.b32.xlu0 %v5042, 63
    %v5062 = vpop.permute.xlu0 %5061
    %5063 = vrot.lane.b32.xlu0 %v5043, 63
    %v5064 = vpop.permute.xlu0 %5063
    %5065 = vrot.lane.b32.xlu0 %v5044, 63
    %v5066 = vpop.permute.xlu0 %5065
    %5067 = vrot.lane.b32.xlu0 %v5045, 63
    %v5068 = vpop.permute.xlu0 %5067
    %5069 = vrot.lane.b32.xlu0 %v5046, 63
    %v5070 = vpop.permute.xlu0 %5069
    %v5071 = vsel %vm823, %v5056, %v5058
    %v5072 = vsel %vm823, %v5058, %v5060
    %v5073 = vsel %vm823, %v5060, %v5062
    %v5074 = vsel %vm823, %v5064, %v5066
    %v5075 = vsel %vm823, %v5066, %v5068
    %v5076 = vsel %vm823, %v5068, %v5070
    %5083 = vst [vmem:[#allocation4 + $0xf0] sm:$0xff] %v5071
    %5084 = vst [vmem:[#allocation4 + $0xf8] sm:$0xff] %v5072
    %5085 = vst [vmem:[#allocation4 + $0x100] sm:$0xff] %v5073
    %5086 = vst [vmem:[#allocation4 + $0x108] sm:$0xff] %v5074
    %5087 = vst [vmem:[#allocation4 + $0x110] sm:$0xff] %v5075
    %5088 = vst [vmem:[#allocation4 + $0x118] sm:$0xff] %v5076
    %v5089 = vld [vmem:[#allocation3] sm:$0xff]
    %v5090 = vld [vmem:[#allocation3 + $0x8] sm:$0xff]
    %v5091 = vld [vmem:[#allocation3 + $0x10] sm:$0xff]
    %v5092 = vld [vmem:[#allocation3 + $0x18] sm:$0xff]
    %v5093 = vld [vmem:[#allocation3 + $0x20] sm:$0xff]
    %v5094 = vld [vmem:[#allocation3 + $0x28] sm:$0xff]
    %v5095 = vld [vmem:[#allocation3 + $0x30] sm:$0xff]
    %v5096 = vld [vmem:[#allocation3 + $0x38] sm:$0xff]
    %5105 = vrot.lane.b32.xlu0 %v5089, 49
    %v5106 = vpop.permute.xlu0 %5105
    %5107 = vrot.lane.b32.xlu0 %v5090, 49
    %v5108 = vpop.permute.xlu0 %5107
    %5109 = vrot.lane.b32.xlu0 %v5091, 49
    %v5110 = vpop.permute.xlu0 %5109
    %5111 = vrot.lane.b32.xlu0 %v5092, 49
    %v5112 = vpop.permute.xlu0 %5111
    %5113 = vrot.lane.b32.xlu0 %v5093, 49
    %v5114 = vpop.permute.xlu0 %5113
    %5115 = vrot.lane.b32.xlu0 %v5094, 49
    %v5116 = vpop.permute.xlu0 %5115
    %5117 = vrot.lane.b32.xlu0 %v5095, 49
    %v5118 = vpop.permute.xlu0 %5117
    %5119 = vrot.lane.b32.xlu0 %v5096, 49
    %v5120 = vpop.permute.xlu0 %5119
    %v5121 = vsel %vm874, %v5106, %v5108
    %v5122 = vsel %vm874, %v5108, %v5110
    %v5123 = vsel %vm874, %v5110, %v5112
    %v5124 = vsel %vm874, %v5114, %v5116
    %v5125 = vsel %vm874, %v5116, %v5118
    %v5126 = vsel %vm874, %v5118, %v5120
    %5133 = vst [vmem:[#allocation4 + $0x120] sm:$0xff] %v5121
    %5134 = vst [vmem:[#allocation4 + $0x128] sm:$0xff] %v5122
    %5135 = vst [vmem:[#allocation4 + $0x130] sm:$0xff] %v5123
    %5136 = vst [vmem:[#allocation4 + $0x138] sm:$0xff] %v5124
    %5137 = vst [vmem:[#allocation4 + $0x140] sm:$0xff] %v5125
    %5138 = vst [vmem:[#allocation4 + $0x148] sm:$0xff] %v5126
    %v5139 = vld [vmem:[#allocation3] sm:$0xff]
    %v5140 = vld [vmem:[#allocation3 + $0x8] sm:$0xff]
    %v5141 = vld [vmem:[#allocation3 + $0x10] sm:$0xff]
    %v5142 = vld [vmem:[#allocation3 + $0x18] sm:$0xff]
    %v5143 = vld [vmem:[#allocation3 + $0x20] sm:$0xff]
    %v5144 = vld [vmem:[#allocation3 + $0x28] sm:$0xff]
    %v5145 = vld [vmem:[#allocation3 + $0x30] sm:$0xff]
    %v5146 = vld [vmem:[#allocation3 + $0x38] sm:$0xff]
    %5155 = vrot.lane.b32.xlu0 %v5139, 48
    %v5156 = vpop.permute.xlu0 %5155
    %5157 = vrot.lane.b32.xlu0 %v5140, 48
    %v5158 = vpop.permute.xlu0 %5157
    %5159 = vrot.lane.b32.xlu0 %v5141, 48
    %v5160 = vpop.permute.xlu0 %5159
    %5161 = vrot.lane.b32.xlu0 %v5142, 48
    %v5162 = vpop.permute.xlu0 %5161
    %5163 = vrot.lane.b32.xlu0 %v5143, 48
    %v5164 = vpop.permute.xlu0 %5163
    %5165 = vrot.lane.b32.xlu0 %v5144, 48
    %v5166 = vpop.permute.xlu0 %5165
    %5167 = vrot.lane.b32.xlu0 %v5145, 48
    %v5168 = vpop.permute.xlu0 %5167
    %5169 = vrot.lane.b32.xlu0 %v5146, 48
    %v5170 = vpop.permute.xlu0 %5169
    %v5171 = vsel %vm925, %v5156, %v5158
    %v5172 = vsel %vm925, %v5158, %v5160
    %v5173 = vsel %vm925, %v5160, %v5162
    %v5174 = vsel %vm925, %v5164, %v5166
    %v5175 = vsel %vm925, %v5166, %v5168
    %v5176 = vsel %vm925, %v5168, %v5170
    %5183 = vst [vmem:[#allocation4 + $0x150] sm:$0xff] %v5171
    %5184 = vst [vmem:[#allocation4 + $0x158] sm:$0xff] %v5172
    %5185 = vst [vmem:[#allocation4 + $0x160] sm:$0xff] %v5173
    %5186 = vst [vmem:[#allocation4 + $0x168] sm:$0xff] %v5174
    %5187 = vst [vmem:[#allocation4 + $0x170] sm:$0xff] %v5175
    %5188 = vst [vmem:[#allocation4 + $0x178] sm:$0xff] %v5176
    %v5189 = vld [vmem:[#allocation3] sm:$0xff]
    %v5190 = vld [vmem:[#allocation3 + $0x8] sm:$0xff]
    %v5191 = vld [vmem:[#allocation3 + $0x10] sm:$0xff]
    %v5192 = vld [vmem:[#allocation3 + $0x18] sm:$0xff]
    %v5193 = vld [vmem:[#allocation3 + $0x20] sm:$0xff]
    %v5194 = vld [vmem:[#allocation3 + $0x28] sm:$0xff]
    %v5195 = vld [vmem:[#allocation3 + $0x30] sm:$0xff]
    %v5196 = vld [vmem:[#allocation3 + $0x38] sm:$0xff]
    %5205 = vrot.lane.b32.xlu0 %v5189, 47
    %v5206 = vpop.permute.xlu0 %5205
    %5207 = vrot.lane.b32.xlu0 %v5190, 47
    %v5208 = vpop.permute.xlu0 %5207
    %5209 = vrot.lane.b32.xlu0 %v5191, 47
    %v5210 = vpop.permute.xlu0 %5209
    %5211 = vrot.lane.b32.xlu0 %v5192, 47
    %v5212 = vpop.permute.xlu0 %5211
    %5213 = vrot.lane.b32.xlu0 %v5193, 47
    %v5214 = vpop.permute.xlu0 %5213
    %5215 = vrot.lane.b32.xlu0 %v5194, 47
    %v5216 = vpop.permute.xlu0 %5215
    %5217 = vrot.lane.b32.xlu0 %v5195, 47
    %v5218 = vpop.permute.xlu0 %5217
    %5219 = vrot.lane.b32.xlu0 %v5196, 47
    %v5220 = vpop.permute.xlu0 %5219
    %v5221 = vsel %vm976, %v5206, %v5208
    %v5222 = vsel %vm976, %v5208, %v5210
    %v5223 = vsel %vm976, %v5210, %v5212
    %v5224 = vsel %vm976, %v5214, %v5216
    %v5225 = vsel %vm976, %v5216, %v5218
    %v5226 = vsel %vm976, %v5218, %v5220
    %5233 = vst [vmem:[#allocation4 + $0x180] sm:$0xff] %v5221
    %5234 = vst [vmem:[#allocation4 + $0x188] sm:$0xff] %v5222
    %5235 = vst [vmem:[#allocation4 + $0x190] sm:$0xff] %v5223
    %5236 = vst [vmem:[#allocation4 + $0x198] sm:$0xff] %v5224
    %5237 = vst [vmem:[#allocation4 + $0x1a0] sm:$0xff] %v5225
    %5238 = vst [vmem:[#allocation4 + $0x1a8] sm:$0xff] %v5226
    %v5239 = vld [vmem:[#allocation11 + $0x40] sm:$0xff]
    %v5240 = vld [vmem:[#allocation11 + $0x48] sm:$0xff]
    %v5241 = vld [vmem:[#allocation11 + $0x50] sm:$0xff]
    %v5242 = vld [vmem:[#allocation11 + $0x58] sm:$0xff]
    %v5243 = vld [vmem:[#allocation4] sm:$0xff]
    %v5244 = vld [vmem:[#allocation4 + $0x8] sm:$0xff]
    %v5245 = vld [vmem:[#allocation4 + $0x10] sm:$0xff]
    %v5246 = vld [vmem:[#allocation4 + $0x18] sm:$0xff]
    %v5247 = vld [vmem:[#allocation4 + $0x20] sm:$0xff]
    %v5248 = vld [vmem:[#allocation4 + $0x28] sm:$0xff]
    %v5249 = vld [vmem:[#allocation4 + $0x30] sm:$0xff]
    %v5250 = vld [vmem:[#allocation4 + $0x38] sm:$0xff]
    %v5251 = vld [vmem:[#allocation4 + $0x40] sm:$0xff]
    %v5252 = vld [vmem:[#allocation4 + $0x48] sm:$0xff]
    %v5253 = vld [vmem:[#allocation4 + $0x50] sm:$0xff]
    %v5254 = vld [vmem:[#allocation4 + $0x58] sm:$0xff]
    %v5255 = vld [vmem:[#allocation4 + $0x60] sm:$0xff]
    %v5256 = vld [vmem:[#allocation4 + $0x68] sm:$0xff]
    %v5257 = vld [vmem:[#allocation4 + $0x70] sm:$0xff]
    %v5258 = vld [vmem:[#allocation4 + $0x78] sm:$0xff]
    %v5259 = vld [vmem:[#allocation4 + $0x80] sm:$0xff]
    %v5260 = vld [vmem:[#allocation4 + $0x88] sm:$0xff]
    %v5261 = vld [vmem:[#allocation4 + $0x90] sm:$0xff]
    %v5262 = vld [vmem:[#allocation4 + $0x98] sm:$0xff]
    %v5263 = vld [vmem:[#allocation4 + $0xa0] sm:$0xff]
    %v5264 = vld [vmem:[#allocation4 + $0xa8] sm:$0xff]
    %v5265 = vld [vmem:[#allocation4 + $0xb0] sm:$0xff]
    %v5266 = vld [vmem:[#allocation4 + $0xb8] sm:$0xff]
    %v5267 = vld [vmem:[#allocation4 + $0xc0] sm:$0xff]
    %v5268 = vld [vmem:[#allocation4 + $0xc8] sm:$0xff]
    %v5269 = vld [vmem:[#allocation4 + $0xd0] sm:$0xff]
    %v5270 = vld [vmem:[#allocation4 + $0xd8] sm:$0xff]
    %v5271 = vld [vmem:[#allocation4 + $0xe0] sm:$0xff]
    %v5272 = vld [vmem:[#allocation4 + $0xe8] sm:$0xff]
    %v5273 = vld [vmem:[#allocation4 + $0xf0] sm:$0xff]
    %v5274 = vld [vmem:[#allocation4 + $0xf8] sm:$0xff]
    %v5275 = vld [vmem:[#allocation4 + $0x100] sm:$0xff]
    %v5276 = vld [vmem:[#allocation4 + $0x108] sm:$0xff]
    %v5277 = vld [vmem:[#allocation4 + $0x110] sm:$0xff]
    %v5278 = vld [vmem:[#allocation4 + $0x118] sm:$0xff]
    %v5279 = vld [vmem:[#allocation4 + $0x120] sm:$0xff]
    %v5280 = vld [vmem:[#allocation4 + $0x128] sm:$0xff]
    %v5281 = vld [vmem:[#allocation4 + $0x130] sm:$0xff]
    %v5282 = vld [vmem:[#allocation4 + $0x138] sm:$0xff]
    %v5283 = vld [vmem:[#allocation4 + $0x140] sm:$0xff]
    %v5284 = vld [vmem:[#allocation4 + $0x148] sm:$0xff]
    %v5285 = vld [vmem:[#allocation4 + $0x150] sm:$0xff]
    %v5286 = vld [vmem:[#allocation4 + $0x158] sm:$0xff]
    %v5287 = vld [vmem:[#allocation4 + $0x160] sm:$0xff]
    %v5288 = vld [vmem:[#allocation4 + $0x168] sm:$0xff]
    %v5289 = vld [vmem:[#allocation4 + $0x170] sm:$0xff]
    %v5290 = vld [vmem:[#allocation4 + $0x178] sm:$0xff]
    %v5291 = vld [vmem:[#allocation4 + $0x180] sm:$0xff]
    %v5292 = vld [vmem:[#allocation4 + $0x188] sm:$0xff]
    %v5293 = vld [vmem:[#allocation4 + $0x190] sm:$0xff]
    %v5294 = vld [vmem:[#allocation4 + $0x198] sm:$0xff]
    %v5295 = vld [vmem:[#allocation4 + $0x1a0] sm:$0xff]
    %v5296 = vld [vmem:[#allocation4 + $0x1a8] sm:$0xff]
    %v5298 = vsel %vm150, %v5240, 0
    %v5301 = vsel %vm150, %v5242, 0
    %5303 = vmatprep.subr.mxu0 %v5244
    %5304 = vmatpush1.msra.mxu0 %v5243
    %5305 = vmatprep.subr.mxu0 %v5247
    %5306 = vmatpush1.msra.mxu0 %v5246
    %5307 = vmatprep.subr.mxu0 %v5250
    %5308 = vmatpush1.msra.mxu0 %v5249
    %5309 = vmatprep.subr.mxu0 %v5253
    %5310 = vmatpush1.msra.mxu0 %v5252
    %5311 = vmatprep.subr.mxu0 %v5256
    %5312 = vmatpush1.msra.mxu0 %v5255
    %5313 = vmatprep.subr.mxu0 %v5259
    %5314 = vmatpush1.msra.mxu0 %v5258
    %5315 = vmatprep.subr.mxu0 %v5262
    %5316 = vmatpush1.msra.mxu0 %v5261
    %5317 = vmatprep.subr.mxu0 %v5265
    %5318 = vmatpush1.msra.mxu0 %v5264
    %5319 = vmatprep.subr.mxu0 %v5268
    %5320 = vmatpush1.msra.mxu0 %v5267
    %5321 = vmatprep.subr.mxu0 %v5271
    %5322 = vmatpush1.msra.mxu0 %v5270
    %5323 = vmatprep.subr.mxu0 %v5274
    %5324 = vmatpush1.msra.mxu0 %v5273
    %5325 = vmatprep.subr.mxu0 %v5277
    %5326 = vmatpush1.msra.mxu0 %v5276
    %5327 = vmatprep.subr.mxu0 %v5280
    %5328 = vmatpush1.msra.mxu0 %v5279
    %5329 = vmatprep.subr.mxu0 %v5283
    %5330 = vmatpush1.msra.mxu0 %v5282
    %5331 = vmatprep.subr.mxu0 %v5286
    %5332 = vmatpush1.msra.mxu0 %v5285
    %5333 = vmatprep.subr.mxu0 %v5289
    %5334 = vmatpush1.msra.mxu0 %v5288
    %5335 = vmatprep.subr.mxu0 %v5292
    %5336 = vmatpush1.msra.mxu0 %v5291
    %5337 = vmatprep.subr.mxu0 %v5295
    %5338 = vmatpush1.msra.mxu0 %v5294
    %5339 = vmatprep.subr.mxu0 0.0
    %5340 = vmatpush1.msra.mxu0 0.0
    %5341 = vmatprep.subr.mxu0 0.0
    %5342 = vmatpush1.msra.mxu0 0.0
    %5343 = vmatprep.subr.mxu0 0.0
    %5344 = vmatpush1.msra.mxu0 0.0
    %5345 = vmatprep.subr.mxu0 0.0
    %5346 = vmatpush1.msra.mxu0 0.0
    %5347 = vmatprep.subr.mxu0 0.0
    %5348 = vmatpush1.msra.mxu0 0.0
    %5349 = vmatprep.subr.mxu0 0.0
    %5350 = vmatpush1.msra.mxu0 0.0
    %5351 = vmatprep.subr.mxu0 0.0
    %5352 = vmatpush1.msra.mxu0 0.0
    %5353 = vmatprep.subr.mxu0 0.0
    %5354 = vmatpush1.msra.mxu0 0.0
    %5355 = vmatprep.subr.mxu0 0.0
    %5356 = vmatpush1.msra.mxu0 0.0
    %5357 = vmatprep.subr.mxu0 0.0
    %5358 = vmatpush1.msra.mxu0 0.0
    %5359 = vmatprep.subr.mxu0 0.0
    %5360 = vmatpush1.msra.mxu0 0.0
    %5361 = vmatprep.subr.mxu0 0.0
    %5362 = vmatpush1.msra.mxu0 0.0
    %5363 = vmatprep.subr.mxu0 0.0
    %5364 = vmatpush1.msra.mxu0 0.0
    %5365 = vmatprep.subr.mxu0 0.0
    %5366 = vmatpush1.msra.mxu0 0.0
    %5367 = vmatprep.mubr.f32.mxu0 %v5298
    %5368 = vmatmul.mubr.f32.gmra.mrb[0].mxu0 %v5239
    %v5369 = vpop.f32.mrb[0].mxu0
    %v5370 = vadd.f32 0.0, %v5369
    %v5371 = vpop.f32.mrb[0].mxu0
    %v5372 = vadd.f32 0.0, %v5371
    %5373 = vmatprep.mubr.f32.mxu0 %v5301
    %5374 = vmatmul.mubr.f32.gmra.mrb[0].mxu0 %v5241
    %v5375 = vpop.f32.mrb[0].mxu0
    %v5376 = vadd.f32 0.0, %v5375
    %v5377 = vpop.f32.mrb[0].mxu0
    %v5378 = vadd.f32 0.0, %v5377
    %5379 = vdwg.mxu0
    %5380 = vmatprep.subr.mxu0 0.0
    %5381 = vmatpush1.msra.mxu0 %v5245
    %5382 = vmatprep.subr.mxu0 0.0
    %5383 = vmatpush1.msra.mxu0 %v5248
    %5384 = vmatprep.subr.mxu0 0.0
    %5385 = vmatpush1.msra.mxu0 %v5251
    %5386 = vmatprep.subr.mxu0 0.0
    %5387 = vmatpush1.msra.mxu0 %v5254
    %5388 = vmatprep.subr.mxu0 0.0
    %5389 = vmatpush1.msra.mxu0 %v5257
    %5390 = vmatprep.subr.mxu0 0.0
    %5391 = vmatpush1.msra.mxu0 %v5260
    %5392 = vmatprep.subr.mxu0 0.0
    %5393 = vmatpush1.msra.mxu0 %v5263
    %5394 = vmatprep.subr.mxu0 0.0
    %5395 = vmatpush1.msra.mxu0 %v5266
    %5396 = vmatprep.subr.mxu0 0.0
    %5397 = vmatpush1.msra.mxu0 %v5269
    %5398 = vmatprep.subr.mxu0 0.0
    %5399 = vmatpush1.msra.mxu0 %v5272
    %5400 = vmatprep.subr.mxu0 0.0
    %5401 = vmatpush1.msra.mxu0 %v5275
    %5402 = vmatprep.subr.mxu0 0.0
    %5403 = vmatpush1.msra.mxu0 %v5278
    %5404 = vmatprep.subr.mxu0 0.0
    %5405 = vmatpush1.msra.mxu0 %v5281
    %5406 = vmatprep.subr.mxu0 0.0
    %5407 = vmatpush1.msra.mxu0 %v5284
    %5408 = vmatprep.subr.mxu0 0.0
    %5409 = vmatpush1.msra.mxu0 %v5287
    %5410 = vmatprep.subr.mxu0 0.0
    %5411 = vmatpush1.msra.mxu0 %v5290
    %5412 = vmatprep.subr.mxu0 0.0
    %5413 = vmatpush1.msra.mxu0 %v5293
    %5414 = vmatprep.subr.mxu0 0.0
    %5415 = vmatpush1.msra.mxu0 %v5296
    %5416 = vmatprep.subr.mxu0 0.0
    %5417 = vmatpush1.msra.mxu0 0.0
    %5418 = vmatprep.subr.mxu0 0.0
    %5419 = vmatpush1.msra.mxu0 0.0
    %5420 = vmatprep.subr.mxu0 0.0
    %5421 = vmatpush1.msra.mxu0 0.0
    %5422 = vmatprep.subr.mxu0 0.0
    %5423 = vmatpush1.msra.mxu0 0.0
    %5424 = vmatprep.subr.mxu0 0.0
    %5425 = vmatpush1.msra.mxu0 0.0
    %5426 = vmatprep.subr.mxu0 0.0
    %5427 = vmatpush1.msra.mxu0 0.0
    %5428 = vmatprep.subr.mxu0 0.0
    %5429 = vmatpush1.msra.mxu0 0.0
    %5430 = vmatprep.subr.mxu0 0.0
    %5431 = vmatpush1.msra.mxu0 0.0
    %5432 = vmatprep.subr.mxu0 0.0
    %5433 = vmatpush1.msra.mxu0 0.0
    %5434 = vmatprep.subr.mxu0 0.0
    %5435 = vmatpush1.msra.mxu0 0.0
    %5436 = vmatprep.subr.mxu0 0.0
    %5437 = vmatpush1.msra.mxu0 0.0
    %5438 = vmatprep.subr.mxu0 0.0
    %5439 = vmatpush1.msra.mxu0 0.0
    %5440 = vmatprep.subr.mxu0 0.0
    %5441 = vmatpush1.msra.mxu0 0.0
    %5442 = vmatprep.subr.mxu0 0.0
    %5443 = vmatpush1.msra.mxu0 0.0
    %5444 = vmatprep.mubr.f32.mxu0 %v5298
    %5445 = vmatmul.mubr.f32.gmra.mrb[0].mxu0 %v5239
    %v5446 = vpop.f32.mrb[0].mxu0
    %v5447 = vadd.f32 0.0, %v5446
    %v5448 = vpop.f32.mrb[0].mxu0
    %5449 = vmatprep.mubr.f32.mxu0 %v5301
    %5450 = vmatmul.mubr.f32.gmra.mrb[0].mxu0 %v5241
    %v5451 = vpop.f32.mrb[0].mxu0
    %v5452 = vadd.f32 0.0, %v5451
    %v5453 = vpop.f32.mrb[0].mxu0
    %5454 = vdwg.mxu0
    %v5455 = vld [vmem:[#allocation10] sm:$0xff]
    %v5456 = vld [vmem:[#allocation10 + $0x8] sm:$0xff]
    %5458 = vset.pattern.permute.xlu0 9
    %5459 = vperm.xlu0 %5458, %v5455
    %v5460 = vpop.permute.xlu0 %5459
    %5463 = vset.pattern.permute.xlu0 9
    %5464 = vperm.xlu0 %5463, %v5456
    %v5465 = vpop.permute.xlu0 %5464
    %v5467 = vmul.f32 %v5370, %v5460
    %v5468 = vmul.f32 %v5372, %v5460
    %v5469 = vmul.f32 %v5447, %v5460
    %v5470 = vmul.f32 %v5376, %v5465
    %v5471 = vmul.f32 %v5378, %v5465
    %v5472 = vmul.f32 %v5452, %v5465
    %5473 = vset.pattern.permute.xlu0 10
    %5474 = vperm.xlu0 %5473, %v5455
    %v5475 = vpop.permute.xlu0 %5474
    %5477 = vset.pattern.permute.xlu0 10
    %5478 = vperm.xlu0 %5477, %v5456
    %v5479 = vpop.permute.xlu0 %5478
    %v5481 = vadd.f32 %v5467, %v5475
    %v5482 = vadd.f32 %v5468, %v5475
    %v5483 = vadd.f32 %v5469, %v5475
    %v5484 = vadd.f32 %v5470, %v5479
    %v5485 = vadd.f32 %v5471, %v5479
    %v5486 = vadd.f32 %v5472, %v5479
    %5493 = vrot.lane.b32.xlu0 %v5481, 64
    %v5494 = vpop.permute.xlu0 %5493
    %5495 = vrot.lane.b32.xlu0 %v5482, 64
    %v5496 = vpop.permute.xlu0 %5495
    %5497 = vrot.lane.b32.xlu0 %v5483, 64
    %v5498 = vpop.permute.xlu0 %5497
    %5499 = vrot.lane.b32.xlu0 %v5484, 64
    %v5500 = vpop.permute.xlu0 %5499
    %5501 = vrot.lane.b32.xlu0 %v5485, 64
    %v5502 = vpop.permute.xlu0 %5501
    %5503 = vrot.lane.b32.xlu0 %v5486, 64
    %v5504 = vpop.permute.xlu0 %5503
    %v5505 = vsel %vm82, %v5494, %v5496
    %v5506 = vsel %vm82, %v5496, %v5498
    %v5507 = vsel %vm82, %v5500, %v5502
    %v5508 = vsel %vm82, %v5502, %v5504
    %v5517 = vadd.f32 %v101, %v5494
    %v5518 = vadd.f32 %v102, %v5505
    %v5519 = vadd.f32 %v103, %v5506
    %v5520 = vadd.f32 %v104, %v5498
    %v5521 = vadd.f32 %v105, %v5500
    %v5522 = vadd.f32 %v106, %v5507
    %v5523 = vadd.f32 %v107, %v5508
    %v5524 = vadd.f32 %v108, %v5504
    %v5525 = vmax.f32 %v5517, 0.0
    %v5526 = vmax.f32 %v5518, 0.0
    %v5527 = vmax.f32 %v5519, 0.0
    %v5528 = vmax.f32 %v5520, 0.0
    %v5529 = vmax.f32 %v5521, 0.0
    %v5530 = vmax.f32 %v5522, 0.0
    %v5531 = vmax.f32 %v5523, 0.0
    %v5532 = vmax.f32 %v5524, 0.0
    %5541 = vrot.lane.b32.xlu0 %v5525, 64
    %v5542 = vpop.permute.xlu0 %5541
    %5543 = vrot.lane.b32.xlu0 %v5526, 64
    %v5544 = vpop.permute.xlu0 %5543
    %5545 = vrot.lane.b32.xlu0 %v5527, 64
    %v5546 = vpop.permute.xlu0 %5545
    %5547 = vrot.lane.b32.xlu0 %v5528, 64
    %v5548 = vpop.permute.xlu0 %5547
    %5549 = vrot.lane.b32.xlu0 %v5529, 64
    %v5550 = vpop.permute.xlu0 %5549
    %5551 = vrot.lane.b32.xlu0 %v5530, 64
    %v5552 = vpop.permute.xlu0 %5551
    %5553 = vrot.lane.b32.xlu0 %v5531, 64
    %v5554 = vpop.permute.xlu0 %5553
    %5555 = vrot.lane.b32.xlu0 %v5532, 64
    %v5556 = vpop.permute.xlu0 %5555
    %v5557 = vsel %vm82, %v5542, %v5544
    %v5558 = vsel %vm82, %v5544, %v5546
    %v5559 = vsel %vm82, %v5546, %v5548
    %v5560 = vsel %vm82, %v5550, %v5552
    %v5561 = vsel %vm82, %v5552, %v5554
    %v5562 = vsel %vm82, %v5554, %v5556
    %5569 = vst [vmem:[#allocation13] sm:$0xff] %v5557
    %5570 = vst [vmem:[#allocation13 + $0x8] sm:$0xff] %v5558
    %5571 = vst [vmem:[#allocation13 + $0x10] sm:$0xff] %v5559
    %5572 = vst [vmem:[#allocation13 + $0x18] sm:$0xff] %v5560
    %5573 = vst [vmem:[#allocation13 + $0x20] sm:$0xff] %v5561
    %5574 = vst [vmem:[#allocation13 + $0x28] sm:$0xff] %v5562
    // Predicated region
    $region46: #{tpu_custom_call.1} parent=1 // pred_check
      _
    $region47: #{tpu_custom_call.1} parent=1 // pred_check_branch
      %5576 = sbr.rel (0) target = $region49
    $region48: #{tpu_custom_call.1} parent=1 // pred_region
      %s5578 = ssub.s32 768, 768
      %5579 = vsyncadd [#allocation7], %s5578
      %s5580 = sshll.u32 [#allocation13], 4
      %s5581 = int_to_ptr.vmem [resolvable:$true] %s5580
      %5586 = dma.vmem_to_hbm [thread:$0]  %s5581, 768, %s7, [#allocation7], 384, 384, 24
    $region49: #{tpu_custom_call.1} parent=1 // pred_fallthru
      _
    // Predicated region
    $region50: #{tpu_custom_call.1} parent=1 // pred_check
      _
    $region51: #{tpu_custom_call.1} parent=1 // pred_check_branch
      %5588 = sbr.rel (0) target = $region53
    $region52: #{tpu_custom_call.1} parent=1 // pred_region
      %5589 = dma.done [#allocation7], 768
    $region53: #{tpu_custom_call.1} parent=1 // pred_fallthru
      _
    %5590 = vsyncpa [#allocation6], 1
    %5591 = vsyncpa [#allocation9], 1
    %5592 = vsyncpa [#allocation12], 1
    %5593 = vsyncpa [#allocation7], 1

</llo_original>
